<compile_context>
chip_gen: v7x
topology: tpu7x:2x2x1
jax: 0.10.0
libtpu: 0.0.40
codegen_flags: <defaults>
</compile_context>

<pallas_src>
import functools

import jax
import jax.numpy as jnp
from jax import lax
from jax.experimental import pallas as pl
from jax.experimental.pallas import tpu as pltpu


def _ru(x, m):
    return (x + m - 1) // m * m


# -----------------------------------------------------------------------------
# Fused kernel: conv3x3+ReLU -> conv3x3+ReLU -> fused 4-phase sub-pixel
# ConvTranspose+ReLU.  One grid step == one image.
# -----------------------------------------------------------------------------
def _upsample3_kernel(x_ref, m_ref, w1_ref, b1_ref, w2_ref, b2_ref,
                      wu_ref, bu_ref, o_ref, s1, s2, *, Wc, START, Np):
    LB = s1.shape[1]
    mask = m_ref[...]                                   # (1, Np) f32 in {0, 1}

    # Halo upkeep: only the lead strip (canvas row 0 / (1,0)) and the tail strip
    # are zeroed each step -- every other halo element inside the store range
    # gets an exact zero from the mask below.
    for buf in (s1, s2):
        buf[:, :START] = jnp.zeros((buf.shape[0], START), buf.dtype)
        buf[:, START + Np:] = jnp.zeros((buf.shape[0], LB - START - Np),
                                        buf.dtype)

    def conv3x3(load, w_ref_, b_ref_):
        """9 accumulating (Cout, Cin) @ (Cin, Np) MXU matmuls over shifted flat
        views of a zero-haloed canvas (no im2col materialization)."""
        acc = None
        for dh in range(3):
            for dw in range(3):
                tap = 3 * dh + dw
                src = START + (dh - 1) * Wc + (dw - 1)   # static slice start
                patch = load(src).astype(jnp.bfloat16)   # (Cin, Np)
                part = jnp.dot(w_ref_[tap], patch,
                               preferred_element_type=jnp.float32)
                acc = part if acc is None else acc + part
        return acc + b_ref_[...]                         # (Cout, Np) f32

    # conv1 (2C -> C) + ReLU; mask keeps the canvas halo exactly zero.
    a1 = conv3x3(lambda s: x_ref[0, :, s:s + Np], w1_ref, b1_ref)
    s1[:, START:START + Np] = (jnp.maximum(a1, 0.0) * mask).astype(s1.dtype)

    # conv2 (C -> C) + ReLU.
    a2 = conv3x3(lambda s: s1[:, s:s + Np], w2_ref, b2_ref)
    s2[:, START:START + Np] = (jnp.maximum(a2, 0.0) * mask).astype(s2.dtype)

    # ConvTranspose2d(4x4, s=2, p=1, op=1) (C -> C//2) + ReLU, all four
    # sub-pixel phases fused into one 3x3-tap matmul with combined weights.
    au = conv3x3(lambda s: s2[:, s:s + Np], wu_ref, bu_ref)
    o_ref[0] = jnp.maximum(au, 0.0).astype(o_ref.dtype)


# -----------------------------------------------------------------------------
# Wrapper: one pallas_call, grid over batch; padding / phase interleave by XLA.
# -----------------------------------------------------------------------------
def upsample3_forward(x_nchw, packed):
    N, C2, H, W = x_nchw.shape
    C = C2 // 2
    Co = C // 2
    Hp, Wp = H + 1, W + 1

    # Flat "canvas" geometry shared by all three stages: real HxW data at
    # offset (1, 1) of an (H+3, W+3) zero canvas, flattened with a lead pad so
    # canvas(1, 1) sits at a 128-aligned lane offset.
    Hc, Wc = H + 3, W + 3
    Lc = Hc * Wc
    CB = (-(Wc + 1)) % 128            # lead pad
    START = CB + Wc + 1               # 128-aligned start of computed span
    span = H * Wc + W + 1             # canvas (1,1) .. (H+1, W+1) inclusive
    Np = _ru(span, 128)               # lane-rounded computed/store span
    LB = _ru(START + Np + Wc + 1, 128)  # buffer length (covers all tap reads)

    # Zero-padded canvas input, flattened, channels-first (lane-dense reads).
    xc = jnp.pad(x_nchw, ((0, 0), (0, 0), (1, 2), (1, 2)))      # (N,2C,Hc,Wc)
    xc = xc.reshape(N, 2 * C, Lc)
    xc = jnp.pad(xc, ((0, 0), (0, 0), (CB, LB - CB - Lc)))       # (N,2C,LB)

    # Interior mask over the computed span (built by XLA, constant over grid).
    ii = jnp.arange(Np) + (Wc + 1)
    rr, cc = ii // Wc, ii % Wc
    mask = (((rr >= 1) & (rr <= H) & (cc >= 1) & (cc <= W))
            .astype(jnp.float32).reshape(1, Np))

    flops = 2 * N * Np * 9 * (2 * C * C + C * C + C * 4 * Co)
    bytes_accessed = (xc.size * 4 + N * 4 * Co * Np * 4
                      + 9 * (2 * C * C + C * C + 4 * Co * C) * 2
                      + (2 * C + 4 * Co) * 4)

    kernel = functools.partial(_upsample3_kernel, Wc=Wc, START=START, Np=Np)
    phases = pl.pallas_call(
        kernel,
        out_shape=jax.ShapeDtypeStruct((N, 4 * Co, Np), jnp.float32),
        grid_spec=pltpu.PrefetchScalarGridSpec(
            num_scalar_prefetch=0,
            grid=(N,),
            in_specs=[
                pl.BlockSpec((1, 2 * C, LB), lambda n: (n, 0, 0)),
                pl.BlockSpec((1, Np), lambda n: (0, 0)),
                pl.BlockSpec((9, C, 2 * C), lambda n: (0, 0, 0)),
                pl.BlockSpec((C, 1), lambda n: (0, 0)),
                pl.BlockSpec((9, C, C), lambda n: (0, 0, 0)),
                pl.BlockSpec((C, 1), lambda n: (0, 0)),
                pl.BlockSpec((9, 4 * Co, C), lambda n: (0, 0, 0)),
                pl.BlockSpec((4 * Co, 1), lambda n: (0, 0)),
            ],
            out_specs=pl.BlockSpec((1, 4 * Co, Np), lambda n: (n, 0, 0)),
            scratch_shapes=[
                pltpu.VMEM((C, LB), jnp.bfloat16),   # conv1 output canvas
                pltpu.VMEM((C, LB), jnp.bfloat16),   # conv2 output canvas
            ],
        ),
        compiler_params=pltpu.CompilerParams(
            dimension_semantics=("parallel",)),
        cost_estimate=pl.CostEstimate(flops=flops, transcendentals=0,
                                      bytes_accessed=bytes_accessed),
    )(xc, mask, packed["w1"], packed["b1"], packed["w2"], packed["b2"],
      packed["wu"], packed["bu"])

    # Sub-pixel interleave of the 4 phases (pure layout plumbing, left to XLA).
    ph = phases[:, :, :span]                                     # (N,4Co,span)
    ph = jnp.pad(ph, ((0, 0), (0, 0), (Wc + 1, Lc - (Wc + 1) - span)))
    ph = ph.reshape(N, 2, 2, Co, Hc, Wc)[:, :, :, :, 1:H + 2, 1:W + 2]
    ph = jnp.transpose(ph, (0, 3, 4, 1, 5, 2))                   # (N,Co,Hp,2,Wp,2)
    full = ph.reshape(N, Co, 2 * Hp, 2 * Wp)
    return full[:, :, :2 * H + 1, :2 * W + 1]                    # NCHW


# -----------------------------------------------------------------------------
# Parameters: deterministic PyTorch-layout weights + kernel packing.
# -----------------------------------------------------------------------------
def init_params(key, channels):
    c = channels
    ks = jax.random.split(key, 6)

    def u(k, shape, fan_in):
        bound = 1.0 / jnp.sqrt(fan_in)
        return jax.random.uniform(k, shape, jnp.float32, -bound, bound)

    return dict(
        w1=u(ks[0], (c, 2 * c, 3, 3), 2 * c * 9),    # Conv2d OIHW
        b1=u(ks[1], (c,), 2 * c * 9),
        w2=u(ks[2], (c, c, 3, 3), c * 9),
        b2=u(ks[3], (c,), c * 9),
        wt=u(ks[4], (c, c // 2, 4, 4), c * 16),      # ConvTranspose2d (I,O,kH,kW)
        bt=u(ks[5], (c // 2,), c * 16),
    )


def pack_params(p):
    """Rearrange PyTorch-layout weights into per-tap transposed layouts (bf16)."""
    c = p["w1"].shape[0]
    co = p["wt"].shape[1]

    def conv_taps(w):  # (O, I, 3, 3) -> (9, O, I), tap index t = 3*dh + dw
        return jnp.transpose(w, (2, 3, 0, 1)).reshape(9, w.shape[0], w.shape[1])

    # Fused sub-pixel phase taps: combined (4*Co, C) weight per 3x3 canvas tap.
    # Phase (ph, pw) output pixel (2m+ph, 2n+pw) reads canvas tap (dh, dw) =
    # (ph+a, pw+b), a,b in {0,1}, with ConvTranspose kernel index
    # (3-ph-2a, 3-pw-2b); taps outside that set are zero for that phase.
    taps = []
    for dh in range(3):
        for dw in range(3):
            rows = []
            for ph in range(2):
                for pw in range(2):
                    a, b = dh - ph, dw - pw
                    if a in (0, 1) and b in (0, 1):
                        kh, kw = 3 - ph - 2 * a, 3 - pw - 2 * b
                        rows.append(p["wt"][:, :, kh, kw].T)      # (Co, C)
                    else:
                        rows.append(jnp.zeros((co, c), jnp.float32))
            taps.append(jnp.concatenate(rows, axis=0))            # (4*Co, C)
    wu = jnp.stack(taps, axis=0)                                  # (9, 4*Co, C)

    return dict(
        w1=conv_taps(p["w1"]).astype(jnp.bfloat16),
        b1=p["b1"].reshape(c, 1).astype(jnp.float32),
        w2=conv_taps(p["w2"]).astype(jnp.bfloat16),
        b2=p["b2"].reshape(c, 1).astype(jnp.float32),
        wu=wu.astype(jnp.bfloat16),
        bu=jnp.tile(p["bt"], 4).reshape(4 * co, 1).astype(jnp.float32),
    )


# -----------------------------------------------------------------------------
# Independent pure-JAX reference using the ORIGINAL PyTorch-layout weights.
# -----------------------------------------------------------------------------
def _conv_transpose2d_ref(x, w, b, *, stride, padding, output_padding):
    """Direct scatter-sum definition of nn.ConvTranspose2d (NCHW, w=(I,O,kH,kW))."""
    n, ci, h, wd = x.shape
    _, co, kh, kw = w.shape
    ho = (h - 1) * stride - 2 * padding + kh + output_padding
    wo = (wd - 1) * stride - 2 * padding + kw + output_padding
    full = jnp.zeros((n, co, (h - 1) * stride + kh, (wd - 1) * stride + kw),
                     jnp.float32)
    for a in range(kh):
        for bb in range(kw):
            contrib = jnp.einsum("nihw,io->nohw", x, w[:, :, a, bb])
            full = full.at[:, :, a:a + (h - 1) * stride + 1:stride,
                           bb:bb + (wd - 1) * stride + 1:stride].add(contrib)
    out = full[:, :, padding:padding + ho, padding:padding + wo]
    return out + b[None, :, None, None]


def upsample3_ref(x_nchw, p):
    dn = ("NCHW", "OIHW", "NCHW")
    y = lax.conv_general_dilated(x_nchw, p["w1"], (1, 1), [(1, 1), (1, 1)],
                                 dimension_numbers=dn)
    y = jnp.maximum(y + p["b1"][None, :, None, None], 0.0)
    y = lax.conv_general_dilated(y, p["w2"], (1, 1), [(1, 1), (1, 1)],
                                 dimension_numbers=dn)
    y = jnp.maximum(y + p["b2"][None, :, None, None], 0.0)
    y = _conv_transpose2d_ref(y, p["wt"], p["bt"], stride=2, padding=1,
                              output_padding=1)
    return jnp.maximum(y, 0.0)


if __name__ == "__main__":
    channels = 4
    key = jax.random.PRNGKey(0)
    kx, kx2, kp = jax.random.split(key, 3)

    torch_params = init_params(kp, channels)
    packed = pack_params(torch_params)
    fwd = jax.jit(upsample3_forward)

    # main case: batch=2, module input has 2*channels channels, 16x16 spatial
    N, H, W = 2, 16, 16
    x = jax.random.normal(kx, (N, 2 * channels, H, W), jnp.float32)
    out = jax.block_until_ready(fwd(x, packed))
    assert out.shape == (N, channels // 2, 2 * H + 1, 2 * W + 1), out.shape
    ref = upsample3_ref(x, torch_params)
    # bf16 MXU operands / bf16 scratch (f32 accumulation) -> bf16-level tolerance
    err = float(jnp.max(jnp.abs(out - ref)))
    assert err < 3e-2, err

    # non-square spatial check (H != W) against the independent reference,
    # guarding the canvas / mask / ConvTranspose phase handling.
    x2 = jax.random.normal(kx2, (1, 2 * channels, 12, 20), jnp.float32)
    out2 = jax.block_until_ready(fwd(x2, packed))
    assert out2.shape == (1, channels // 2, 25, 41), out2.shape
    ref2 = upsample3_ref(x2, torch_params)
    err2 = float(jnp.max(jnp.abs(out2 - ref2)))
    assert err2 < 3e-2, err2

    print("KERNEL_OK")
</pallas_src>

<mosaic_0001>
module attributes {stable_mosaic.version = 11 : i64} {
  func.func @_upsample3_kernel(%arg0: i32, %arg1: memref<1x8x640xf32, #tpu.memory_space<vmem>>, %arg2: memref<1x384xf32, #tpu.memory_space<vmem>>, %arg3: memref<9x4x8xbf16, #tpu.memory_space<vmem>>, %arg4: memref<4x1xf32, #tpu.memory_space<vmem>>, %arg5: memref<9x4x4xbf16, #tpu.memory_space<vmem>>, %arg6: memref<4x1xf32, #tpu.memory_space<vmem>>, %arg7: memref<9x8x4xbf16, #tpu.memory_space<vmem>>, %arg8: memref<8x1xf32, #tpu.memory_space<vmem>>, %arg9: memref<1x8x384xf32, #tpu.memory_space<vmem>>, %arg10: memref<4x640xbf16, #tpu.memory_space<vmem>>, %arg11: memref<4x640xbf16, #tpu.memory_space<vmem>>) attributes {dimension_semantics = [#tpu.dimension_semantics<parallel>], iteration_bounds = array<i64: 2>, scalar_prefetch = 0 : i64, scratch_operands = 2 : i64, tpu.core_type = #tpu.core_type<tc>, window_params = [{transform_indices = @transform_0, window_bounds = array<i64: 1, 8, 640>}, {pipeline_mode = #tpu.pipeline_mode<synchronous>, transform_indices = @transform_1, window_bounds = array<i64: 1, 384>}, {pipeline_mode = #tpu.pipeline_mode<synchronous>, transform_indices = @transform_2, window_bounds = array<i64: 9, 4, 8>}, {pipeline_mode = #tpu.pipeline_mode<synchronous>, transform_indices = @transform_3, window_bounds = array<i64: 4, 1>}, {pipeline_mode = #tpu.pipeline_mode<synchronous>, transform_indices = @transform_4, window_bounds = array<i64: 9, 4, 4>}, {pipeline_mode = #tpu.pipeline_mode<synchronous>, transform_indices = @transform_5, window_bounds = array<i64: 4, 1>}, {pipeline_mode = #tpu.pipeline_mode<synchronous>, transform_indices = @transform_6, window_bounds = array<i64: 9, 8, 4>}, {pipeline_mode = #tpu.pipeline_mode<synchronous>, transform_indices = @transform_7, window_bounds = array<i64: 8, 1>}, {transform_indices = @transform_8, window_bounds = array<i64: 1, 8, 384>}]} {
    %c0 = arith.constant 0 : index
    %c0_0 = arith.constant 0 : index
    %0 = vector.load %arg2[%c0, %c0_0] : memref<1x384xf32, #tpu.memory_space<vmem>>, vector<1x384xf32>
    %cst = arith.constant 0.000000e+00 : bf16
    %1 = vector.broadcast %cst : bf16 to vector<4x128xbf16>
    %c0_1 = arith.constant 0 : index
    %c0_2 = arith.constant 0 : index
    %2 = vector.load %arg10[%c0_1, %c0_2] : memref<4x640xbf16, #tpu.memory_space<vmem>>, vector<4x128xbf16>
    tpu.vector_store %arg10[%c0_1, %c0_2], %1 {strides = array<i32>} : memref<4x640xbf16, #tpu.memory_space<vmem>>, vector<4x128xbf16>,
    %cst_3 = arith.constant 0.000000e+00 : bf16
    %3 = vector.broadcast %cst_3 : bf16 to vector<4x128xbf16>
    %c0_4 = arith.constant 0 : index
    %c512 = arith.constant 512 : index
    %4 = vector.load %arg10[%c0_4, %c512] : memref<4x640xbf16, #tpu.memory_space<vmem>>, vector<4x128xbf16>
    tpu.vector_store %arg10[%c0_4, %c512], %3 {strides = array<i32>} : memref<4x640xbf16, #tpu.memory_space<vmem>>, vector<4x128xbf16>,
    %cst_5 = arith.constant 0.000000e+00 : bf16
    %5 = vector.broadcast %cst_5 : bf16 to vector<4x128xbf16>
    %c0_6 = arith.constant 0 : index
    %c0_7 = arith.constant 0 : index
    %6 = vector.load %arg11[%c0_6, %c0_7] : memref<4x640xbf16, #tpu.memory_space<vmem>>, vector<4x128xbf16>
    tpu.vector_store %arg11[%c0_6, %c0_7], %5 {strides = array<i32>} : memref<4x640xbf16, #tpu.memory_space<vmem>>, vector<4x128xbf16>,
    %cst_8 = arith.constant 0.000000e+00 : bf16
    %7 = vector.broadcast %cst_8 : bf16 to vector<4x128xbf16>
    %c0_9 = arith.constant 0 : index
    %c512_10 = arith.constant 512 : index
    %8 = vector.load %arg11[%c0_9, %c512_10] : memref<4x640xbf16, #tpu.memory_space<vmem>>, vector<4x128xbf16>
    tpu.vector_store %arg11[%c0_9, %c512_10], %7 {strides = array<i32>} : memref<4x640xbf16, #tpu.memory_space<vmem>>, vector<4x128xbf16>,
    %c0_11 = arith.constant 0 : index
    %c0_12 = arith.constant 0 : index
    %c108 = arith.constant 108 : index
    %9 = vector.load %arg1[%c0_11, %c0_12, %c108] : memref<1x8x640xf32, #tpu.memory_space<vmem>>, vector<1x8x384xf32>
    %10 = vector.shape_cast %9 : vector<1x8x384xf32> to vector<8x384xf32>
    %11 = arith.truncf %10 : vector<8x384xf32> to vector<8x384xbf16>
    %c0_13 = arith.constant 0 : index
    %c0_14 = arith.constant 0 : index
    %c0_15 = arith.constant 0 : index
    %12 = vector.load %arg3[%c0_13, %c0_14, %c0_15] : memref<9x4x8xbf16, #tpu.memory_space<vmem>>, vector<1x4x8xbf16>
    %13 = vector.shape_cast %12 : vector<1x4x8xbf16> to vector<4x8xbf16>
    %cst_16 = arith.constant dense<0.000000e+00> : vector<4x384xf32>
    %14 = tpu.matmul %13, %11, %cst_16 {dimension_numbers = #tpu.dot_dimension_numbers<[1], [0], [0], [1], [0, 0, 1, 1], [], []>} : vector<4x8xbf16>, vector<8x384xbf16>, vector<4x384xf32> -> vector<4x384xf32>
    %c0_17 = arith.constant 0 : index
    %c0_18 = arith.constant 0 : index
    %c109 = arith.constant 109 : index
    %15 = vector.load %arg1[%c0_17, %c0_18, %c109] : memref<1x8x640xf32, #tpu.memory_space<vmem>>, vector<1x8x384xf32>
    %16 = vector.shape_cast %15 : vector<1x8x384xf32> to vector<8x384xf32>
    %17 = arith.truncf %16 : vector<8x384xf32> to vector<8x384xbf16>
    %c1 = arith.constant 1 : index
    %c0_19 = arith.constant 0 : index
    %c0_20 = arith.constant 0 : index
    %18 = vector.load %arg3[%c1, %c0_19, %c0_20] : memref<9x4x8xbf16, #tpu.memory_space<vmem>>, vector<1x4x8xbf16>
    %19 = vector.shape_cast %18 : vector<1x4x8xbf16> to vector<4x8xbf16>
    %cst_21 = arith.constant dense<0.000000e+00> : vector<4x384xf32>
    %20 = tpu.matmul %19, %17, %cst_21 {dimension_numbers = #tpu.dot_dimension_numbers<[1], [0], [0], [1], [0, 0, 1, 1], [], []>} : vector<4x8xbf16>, vector<8x384xbf16>, vector<4x384xf32> -> vector<4x384xf32>
    %21 = arith.addf %14, %20 : vector<4x384xf32>
    %c0_22 = arith.constant 0 : index
    %c0_23 = arith.constant 0 : index
    %c110 = arith.constant 110 : index
    %22 = vector.load %arg1[%c0_22, %c0_23, %c110] : memref<1x8x640xf32, #tpu.memory_space<vmem>>, vector<1x8x384xf32>
    %23 = vector.shape_cast %22 : vector<1x8x384xf32> to vector<8x384xf32>
    %24 = arith.truncf %23 : vector<8x384xf32> to vector<8x384xbf16>
    %c2 = arith.constant 2 : index
    %c0_24 = arith.constant 0 : index
    %c0_25 = arith.constant 0 : index
    %25 = vector.load %arg3[%c2, %c0_24, %c0_25] : memref<9x4x8xbf16, #tpu.memory_space<vmem>>, vector<1x4x8xbf16>
    %26 = vector.shape_cast %25 : vector<1x4x8xbf16> to vector<4x8xbf16>
    %cst_26 = arith.constant dense<0.000000e+00> : vector<4x384xf32>
    %27 = tpu.matmul %26, %24, %cst_26 {dimension_numbers = #tpu.dot_dimension_numbers<[1], [0], [0], [1], [0, 0, 1, 1], [], []>} : vector<4x8xbf16>, vector<8x384xbf16>, vector<4x384xf32> -> vector<4x384xf32>
    %28 = arith.addf %21, %27 : vector<4x384xf32>
    %c0_27 = arith.constant 0 : index
    %c0_28 = arith.constant 0 : index
    %c127 = arith.constant 127 : index
    %29 = vector.load %arg1[%c0_27, %c0_28, %c127] : memref<1x8x640xf32, #tpu.memory_space<vmem>>, vector<1x8x384xf32>
    %30 = vector.shape_cast %29 : vector<1x8x384xf32> to vector<8x384xf32>
    %31 = arith.truncf %30 : vector<8x384xf32> to vector<8x384xbf16>
    %c3 = arith.constant 3 : index
    %c0_29 = arith.constant 0 : index
    %c0_30 = arith.constant 0 : index
    %32 = vector.load %arg3[%c3, %c0_29, %c0_30] : memref<9x4x8xbf16, #tpu.memory_space<vmem>>, vector<1x4x8xbf16>
    %33 = vector.shape_cast %32 : vector<1x4x8xbf16> to vector<4x8xbf16>
    %cst_31 = arith.constant dense<0.000000e+00> : vector<4x384xf32>
    %34 = tpu.matmul %33, %31, %cst_31 {dimension_numbers = #tpu.dot_dimension_numbers<[1], [0], [0], [1], [0, 0, 1, 1], [], []>} : vector<4x8xbf16>, vector<8x384xbf16>, vector<4x384xf32> -> vector<4x384xf32>
    %35 = arith.addf %28, %34 : vector<4x384xf32>
    %c0_32 = arith.constant 0 : index
    %c0_33 = arith.constant 0 : index
    %c128 = arith.constant 128 : index
    %36 = vector.load %arg1[%c0_32, %c0_33, %c128] : memref<1x8x640xf32, #tpu.memory_space<vmem>>, vector<1x8x384xf32>
    %37 = vector.shape_cast %36 : vector<1x8x384xf32> to vector<8x384xf32>
    %38 = arith.truncf %37 : vector<8x384xf32> to vector<8x384xbf16>
    %c4 = arith.constant 4 : index
    %c0_34 = arith.constant 0 : index
    %c0_35 = arith.constant 0 : index
    %39 = vector.load %arg3[%c4, %c0_34, %c0_35] : memref<9x4x8xbf16, #tpu.memory_space<vmem>>, vector<1x4x8xbf16>
    %40 = vector.shape_cast %39 : vector<1x4x8xbf16> to vector<4x8xbf16>
    %cst_36 = arith.constant dense<0.000000e+00> : vector<4x384xf32>
    %41 = tpu.matmul %40, %38, %cst_36 {dimension_numbers = #tpu.dot_dimension_numbers<[1], [0], [0], [1], [0, 0, 1, 1], [], []>} : vector<4x8xbf16>, vector<8x384xbf16>, vector<4x384xf32> -> vector<4x384xf32>
    %42 = arith.addf %35, %41 : vector<4x384xf32>
    %c0_37 = arith.constant 0 : index
    %c0_38 = arith.constant 0 : index
    %c129 = arith.constant 129 : index
    %43 = vector.load %arg1[%c0_37, %c0_38, %c129] : memref<1x8x640xf32, #tpu.memory_space<vmem>>, vector<1x8x384xf32>
    %44 = vector.shape_cast %43 : vector<1x8x384xf32> to vector<8x384xf32>
    %45 = arith.truncf %44 : vector<8x384xf32> to vector<8x384xbf16>
    %c5 = arith.constant 5 : index
    %c0_39 = arith.constant 0 : index
    %c0_40 = arith.constant 0 : index
    %46 = vector.load %arg3[%c5, %c0_39, %c0_40] : memref<9x4x8xbf16, #tpu.memory_space<vmem>>, vector<1x4x8xbf16>
    %47 = vector.shape_cast %46 : vector<1x4x8xbf16> to vector<4x8xbf16>
    %cst_41 = arith.constant dense<0.000000e+00> : vector<4x384xf32>
    %48 = tpu.matmul %47, %45, %cst_41 {dimension_numbers = #tpu.dot_dimension_numbers<[1], [0], [0], [1], [0, 0, 1, 1], [], []>} : vector<4x8xbf16>, vector<8x384xbf16>, vector<4x384xf32> -> vector<4x384xf32>
    %49 = arith.addf %42, %48 : vector<4x384xf32>
    %c0_42 = arith.constant 0 : index
    %c0_43 = arith.constant 0 : index
    %c146 = arith.constant 146 : index
    %50 = vector.load %arg1[%c0_42, %c0_43, %c146] : memref<1x8x640xf32, #tpu.memory_space<vmem>>, vector<1x8x384xf32>
    %51 = vector.shape_cast %50 : vector<1x8x384xf32> to vector<8x384xf32>
    %52 = arith.truncf %51 : vector<8x384xf32> to vector<8x384xbf16>
    %c6 = arith.constant 6 : index
    %c0_44 = arith.constant 0 : index
    %c0_45 = arith.constant 0 : index
    %53 = vector.load %arg3[%c6, %c0_44, %c0_45] : memref<9x4x8xbf16, #tpu.memory_space<vmem>>, vector<1x4x8xbf16>
    %54 = vector.shape_cast %53 : vector<1x4x8xbf16> to vector<4x8xbf16>
    %cst_46 = arith.constant dense<0.000000e+00> : vector<4x384xf32>
    %55 = tpu.matmul %54, %52, %cst_46 {dimension_numbers = #tpu.dot_dimension_numbers<[1], [0], [0], [1], [0, 0, 1, 1], [], []>} : vector<4x8xbf16>, vector<8x384xbf16>, vector<4x384xf32> -> vector<4x384xf32>
    %56 = arith.addf %49, %55 : vector<4x384xf32>
    %c0_47 = arith.constant 0 : index
    %c0_48 = arith.constant 0 : index
    %c147 = arith.constant 147 : index
    %57 = vector.load %arg1[%c0_47, %c0_48, %c147] : memref<1x8x640xf32, #tpu.memory_space<vmem>>, vector<1x8x384xf32>
    %58 = vector.shape_cast %57 : vector<1x8x384xf32> to vector<8x384xf32>
    %59 = arith.truncf %58 : vector<8x384xf32> to vector<8x384xbf16>
    %c7 = arith.constant 7 : index
    %c0_49 = arith.constant 0 : index
    %c0_50 = arith.constant 0 : index
    %60 = vector.load %arg3[%c7, %c0_49, %c0_50] : memref<9x4x8xbf16, #tpu.memory_space<vmem>>, vector<1x4x8xbf16>
    %61 = vector.shape_cast %60 : vector<1x4x8xbf16> to vector<4x8xbf16>
    %cst_51 = arith.constant dense<0.000000e+00> : vector<4x384xf32>
    %62 = tpu.matmul %61, %59, %cst_51 {dimension_numbers = #tpu.dot_dimension_numbers<[1], [0], [0], [1], [0, 0, 1, 1], [], []>} : vector<4x8xbf16>, vector<8x384xbf16>, vector<4x384xf32> -> vector<4x384xf32>
    %63 = arith.addf %56, %62 : vector<4x384xf32>
    %c0_52 = arith.constant 0 : index
    %c0_53 = arith.constant 0 : index
    %c148 = arith.constant 148 : index
    %64 = vector.load %arg1[%c0_52, %c0_53, %c148] : memref<1x8x640xf32, #tpu.memory_space<vmem>>, vector<1x8x384xf32>
    %65 = vector.shape_cast %64 : vector<1x8x384xf32> to vector<8x384xf32>
    %66 = arith.truncf %65 : vector<8x384xf32> to vector<8x384xbf16>
    %c8 = arith.constant 8 : index
    %c0_54 = arith.constant 0 : index
    %c0_55 = arith.constant 0 : index
    %67 = vector.load %arg3[%c8, %c0_54, %c0_55] : memref<9x4x8xbf16, #tpu.memory_space<vmem>>, vector<1x4x8xbf16>
    %68 = vector.shape_cast %67 : vector<1x4x8xbf16> to vector<4x8xbf16>
    %cst_56 = arith.constant dense<0.000000e+00> : vector<4x384xf32>
    %69 = tpu.matmul %68, %66, %cst_56 {dimension_numbers = #tpu.dot_dimension_numbers<[1], [0], [0], [1], [0, 0, 1, 1], [], []>} : vector<4x8xbf16>, vector<8x384xbf16>, vector<4x384xf32> -> vector<4x384xf32>
    %70 = arith.addf %63, %69 : vector<4x384xf32>
    %c0_57 = arith.constant 0 : index
    %c0_58 = arith.constant 0 : index
    %71 = vector.load %arg4[%c0_57, %c0_58] : memref<4x1xf32, #tpu.memory_space<vmem>>, vector<4x1xf32>
    %72 = vector.broadcast %71 : vector<4x1xf32> to vector<4x384xf32>
    %73 = arith.addf %70, %72 : vector<4x384xf32>
    %cst_59 = arith.constant 0.000000e+00 : f32
    %74 = vector.broadcast %cst_59 : f32 to vector<4x384xf32>
    %75 = arith.maximumf %73, %74 : vector<4x384xf32>
    %76 = vector.broadcast %0 : vector<1x384xf32> to vector<4x384xf32>
    %77 = arith.mulf %75, %76 : vector<4x384xf32>
    %78 = arith.truncf %77 : vector<4x384xf32> to vector<4x384xbf16>
    %c0_60 = arith.constant 0 : index
    %c128_61 = arith.constant 128 : index
    %79 = vector.load %arg10[%c0_60, %c128_61] : memref<4x640xbf16, #tpu.memory_space<vmem>>, vector<4x384xbf16>
    tpu.vector_store %arg10[%c0_60, %c128_61], %78 {strides = array<i32>} : memref<4x640xbf16, #tpu.memory_space<vmem>>, vector<4x384xbf16>,
    %c0_62 = arith.constant 0 : index
    %c108_63 = arith.constant 108 : index
    %80 = vector.load %arg10[%c0_62, %c108_63] : memref<4x640xbf16, #tpu.memory_space<vmem>>, vector<4x384xbf16>
    %c0_64 = arith.constant 0 : index
    %c0_65 = arith.constant 0 : index
    %c0_66 = arith.constant 0 : index
    %81 = vector.load %arg5[%c0_64, %c0_65, %c0_66] : memref<9x4x4xbf16, #tpu.memory_space<vmem>>, vector<1x4x4xbf16>
    %82 = vector.shape_cast %81 : vector<1x4x4xbf16> to vector<4x4xbf16>
    %cst_67 = arith.constant dense<0.000000e+00> : vector<4x384xf32>
    %83 = tpu.matmul %82, %80, %cst_67 {dimension_numbers = #tpu.dot_dimension_numbers<[1], [0], [0], [1], [0, 0, 1, 1], [], []>} : vector<4x4xbf16>, vector<4x384xbf16>, vector<4x384xf32> -> vector<4x384xf32>
    %c0_68 = arith.constant 0 : index
    %c109_69 = arith.constant 109 : index
    %84 = vector.load %arg10[%c0_68, %c109_69] : memref<4x640xbf16, #tpu.memory_space<vmem>>, vector<4x384xbf16>
    %c1_70 = arith.constant 1 : index
    %c0_71 = arith.constant 0 : index
    %c0_72 = arith.constant 0 : index
    %85 = vector.load %arg5[%c1_70, %c0_71, %c0_72] : memref<9x4x4xbf16, #tpu.memory_space<vmem>>, vector<1x4x4xbf16>
    %86 = vector.shape_cast %85 : vector<1x4x4xbf16> to vector<4x4xbf16>
    %cst_73 = arith.constant dense<0.000000e+00> : vector<4x384xf32>
    %87 = tpu.matmul %86, %84, %cst_73 {dimension_numbers = #tpu.dot_dimension_numbers<[1], [0], [0], [1], [0, 0, 1, 1], [], []>} : vector<4x4xbf16>, vector<4x384xbf16>, vector<4x384xf32> -> vector<4x384xf32>
    %88 = arith.addf %83, %87 : vector<4x384xf32>
    %c0_74 = arith.constant 0 : index
    %c110_75 = arith.constant 110 : index
    %89 = vector.load %arg10[%c0_74, %c110_75] : memref<4x640xbf16, #tpu.memory_space<vmem>>, vector<4x384xbf16>
    %c2_76 = arith.constant 2 : index
    %c0_77 = arith.constant 0 : index
    %c0_78 = arith.constant 0 : index
    %90 = vector.load %arg5[%c2_76, %c0_77, %c0_78] : memref<9x4x4xbf16, #tpu.memory_space<vmem>>, vector<1x4x4xbf16>
    %91 = vector.shape_cast %90 : vector<1x4x4xbf16> to vector<4x4xbf16>
    %cst_79 = arith.constant dense<0.000000e+00> : vector<4x384xf32>
    %92 = tpu.matmul %91, %89, %cst_79 {dimension_numbers = #tpu.dot_dimension_numbers<[1], [0], [0], [1], [0, 0, 1, 1], [], []>} : vector<4x4xbf16>, vector<4x384xbf16>, vector<4x384xf32> -> vector<4x384xf32>
    %93 = arith.addf %88, %92 : vector<4x384xf32>
    %c0_80 = arith.constant 0 : index
    %c127_81 = arith.constant 127 : index
    %94 = vector.load %arg10[%c0_80, %c127_81] : memref<4x640xbf16, #tpu.memory_space<vmem>>, vector<4x384xbf16>
    %c3_82 = arith.constant 3 : index
    %c0_83 = arith.constant 0 : index
    %c0_84 = arith.constant 0 : index
    %95 = vector.load %arg5[%c3_82, %c0_83, %c0_84] : memref<9x4x4xbf16, #tpu.memory_space<vmem>>, vector<1x4x4xbf16>
    %96 = vector.shape_cast %95 : vector<1x4x4xbf16> to vector<4x4xbf16>
    %cst_85 = arith.constant dense<0.000000e+00> : vector<4x384xf32>
    %97 = tpu.matmul %96, %94, %cst_85 {dimension_numbers = #tpu.dot_dimension_numbers<[1], [0], [0], [1], [0, 0, 1, 1], [], []>} : vector<4x4xbf16>, vector<4x384xbf16>, vector<4x384xf32> -> vector<4x384xf32>
    %98 = arith.addf %93, %97 : vector<4x384xf32>
    %c0_86 = arith.constant 0 : index
    %c128_87 = arith.constant 128 : index
    %99 = vector.load %arg10[%c0_86, %c128_87] : memref<4x640xbf16, #tpu.memory_space<vmem>>, vector<4x384xbf16>
    %c4_88 = arith.constant 4 : index
    %c0_89 = arith.constant 0 : index
    %c0_90 = arith.constant 0 : index
    %100 = vector.load %arg5[%c4_88, %c0_89, %c0_90] : memref<9x4x4xbf16, #tpu.memory_space<vmem>>, vector<1x4x4xbf16>
    %101 = vector.shape_cast %100 : vector<1x4x4xbf16> to vector<4x4xbf16>
    %cst_91 = arith.constant dense<0.000000e+00> : vector<4x384xf32>
    %102 = tpu.matmul %101, %99, %cst_91 {dimension_numbers = #tpu.dot_dimension_numbers<[1], [0], [0], [1], [0, 0, 1, 1], [], []>} : vector<4x4xbf16>, vector<4x384xbf16>, vector<4x384xf32> -> vector<4x384xf32>
    %103 = arith.addf %98, %102 : vector<4x384xf32>
    %c0_92 = arith.constant 0 : index
    %c129_93 = arith.constant 129 : index
    %104 = vector.load %arg10[%c0_92, %c129_93] : memref<4x640xbf16, #tpu.memory_space<vmem>>, vector<4x384xbf16>
    %c5_94 = arith.constant 5 : index
    %c0_95 = arith.constant 0 : index
    %c0_96 = arith.constant 0 : index
    %105 = vector.load %arg5[%c5_94, %c0_95, %c0_96] : memref<9x4x4xbf16, #tpu.memory_space<vmem>>, vector<1x4x4xbf16>
    %106 = vector.shape_cast %105 : vector<1x4x4xbf16> to vector<4x4xbf16>
    %cst_97 = arith.constant dense<0.000000e+00> : vector<4x384xf32>
    %107 = tpu.matmul %106, %104, %cst_97 {dimension_numbers = #tpu.dot_dimension_numbers<[1], [0], [0], [1], [0, 0, 1, 1], [], []>} : vector<4x4xbf16>, vector<4x384xbf16>, vector<4x384xf32> -> vector<4x384xf32>
    %108 = arith.addf %103, %107 : vector<4x384xf32>
    %c0_98 = arith.constant 0 : index
    %c146_99 = arith.constant 146 : index
    %109 = vector.load %arg10[%c0_98, %c146_99] : memref<4x640xbf16, #tpu.memory_space<vmem>>, vector<4x384xbf16>
    %c6_100 = arith.constant 6 : index
    %c0_101 = arith.constant 0 : index
    %c0_102 = arith.constant 0 : index
    %110 = vector.load %arg5[%c6_100, %c0_101, %c0_102] : memref<9x4x4xbf16, #tpu.memory_space<vmem>>, vector<1x4x4xbf16>
    %111 = vector.shape_cast %110 : vector<1x4x4xbf16> to vector<4x4xbf16>
    %cst_103 = arith.constant dense<0.000000e+00> : vector<4x384xf32>
    %112 = tpu.matmul %111, %109, %cst_103 {dimension_numbers = #tpu.dot_dimension_numbers<[1], [0], [0], [1], [0, 0, 1, 1], [], []>} : vector<4x4xbf16>, vector<4x384xbf16>, vector<4x384xf32> -> vector<4x384xf32>
    %113 = arith.addf %108, %112 : vector<4x384xf32>
    %c0_104 = arith.constant 0 : index
    %c147_105 = arith.constant 147 : index
    %114 = vector.load %arg10[%c0_104, %c147_105] : memref<4x640xbf16, #tpu.memory_space<vmem>>, vector<4x384xbf16>
    %c7_106 = arith.constant 7 : index
    %c0_107 = arith.constant 0 : index
    %c0_108 = arith.constant 0 : index
    %115 = vector.load %arg5[%c7_106, %c0_107, %c0_108] : memref<9x4x4xbf16, #tpu.memory_space<vmem>>, vector<1x4x4xbf16>
    %116 = vector.shape_cast %115 : vector<1x4x4xbf16> to vector<4x4xbf16>
    %cst_109 = arith.constant dense<0.000000e+00> : vector<4x384xf32>
    %117 = tpu.matmul %116, %114, %cst_109 {dimension_numbers = #tpu.dot_dimension_numbers<[1], [0], [0], [1], [0, 0, 1, 1], [], []>} : vector<4x4xbf16>, vector<4x384xbf16>, vector<4x384xf32> -> vector<4x384xf32>
    %118 = arith.addf %113, %117 : vector<4x384xf32>
    %c0_110 = arith.constant 0 : index
    %c148_111 = arith.constant 148 : index
    %119 = vector.load %arg10[%c0_110, %c148_111] : memref<4x640xbf16, #tpu.memory_space<vmem>>, vector<4x384xbf16>
    %c8_112 = arith.constant 8 : index
    %c0_113 = arith.constant 0 : index
    %c0_114 = arith.constant 0 : index
    %120 = vector.load %arg5[%c8_112, %c0_113, %c0_114] : memref<9x4x4xbf16, #tpu.memory_space<vmem>>, vector<1x4x4xbf16>
    %121 = vector.shape_cast %120 : vector<1x4x4xbf16> to vector<4x4xbf16>
    %cst_115 = arith.constant dense<0.000000e+00> : vector<4x384xf32>
    %122 = tpu.matmul %121, %119, %cst_115 {dimension_numbers = #tpu.dot_dimension_numbers<[1], [0], [0], [1], [0, 0, 1, 1], [], []>} : vector<4x4xbf16>, vector<4x384xbf16>, vector<4x384xf32> -> vector<4x384xf32>
    %123 = arith.addf %118, %122 : vector<4x384xf32>
    %c0_116 = arith.constant 0 : index
    %c0_117 = arith.constant 0 : index
    %124 = vector.load %arg6[%c0_116, %c0_117] : memref<4x1xf32, #tpu.memory_space<vmem>>, vector<4x1xf32>
    %125 = vector.broadcast %124 : vector<4x1xf32> to vector<4x384xf32>
    %126 = arith.addf %123, %125 : vector<4x384xf32>
    %cst_118 = arith.constant 0.000000e+00 : f32
    %127 = vector.broadcast %cst_118 : f32 to vector<4x384xf32>
    %128 = arith.maximumf %126, %127 : vector<4x384xf32>
    %129 = vector.broadcast %0 : vector<1x384xf32> to vector<4x384xf32>
    %130 = arith.mulf %128, %129 : vector<4x384xf32>
    %131 = arith.truncf %130 : vector<4x384xf32> to vector<4x384xbf16>
    %c0_119 = arith.constant 0 : index
    %c128_120 = arith.constant 128 : index
    %132 = vector.load %arg11[%c0_119, %c128_120] : memref<4x640xbf16, #tpu.memory_space<vmem>>, vector<4x384xbf16>
    tpu.vector_store %arg11[%c0_119, %c128_120], %131 {strides = array<i32>} : memref<4x640xbf16, #tpu.memory_space<vmem>>, vector<4x384xbf16>,
    %c0_121 = arith.constant 0 : index
    %c108_122 = arith.constant 108 : index
    %133 = vector.load %arg11[%c0_121, %c108_122] : memref<4x640xbf16, #tpu.memory_space<vmem>>, vector<4x384xbf16>
    %c0_123 = arith.constant 0 : index
    %c0_124 = arith.constant 0 : index
    %c0_125 = arith.constant 0 : index
    %134 = vector.load %arg7[%c0_123, %c0_124, %c0_125] : memref<9x8x4xbf16, #tpu.memory_space<vmem>>, vector<1x8x4xbf16>
    %135 = vector.shape_cast %134 : vector<1x8x4xbf16> to vector<8x4xbf16>
    %cst_126 = arith.constant dense<0.000000e+00> : vector<8x384xf32>
    %136 = tpu.matmul %135, %133, %cst_126 {dimension_numbers = #tpu.dot_dimension_numbers<[1], [0], [0], [1], [0, 0, 1, 1], [], []>} : vector<8x4xbf16>, vector<4x384xbf16>, vector<8x384xf32> -> vector<8x384xf32>
    %c0_127 = arith.constant 0 : index
    %c109_128 = arith.constant 109 : index
    %137 = vector.load %arg11[%c0_127, %c109_128] : memref<4x640xbf16, #tpu.memory_space<vmem>>, vector<4x384xbf16>
    %c1_129 = arith.constant 1 : index
    %c0_130 = arith.constant 0 : index
    %c0_131 = arith.constant 0 : index
    %138 = vector.load %arg7[%c1_129, %c0_130, %c0_131] : memref<9x8x4xbf16, #tpu.memory_space<vmem>>, vector<1x8x4xbf16>
    %139 = vector.shape_cast %138 : vector<1x8x4xbf16> to vector<8x4xbf16>
    %cst_132 = arith.constant dense<0.000000e+00> : vector<8x384xf32>
    %140 = tpu.matmul %139, %137, %cst_132 {dimension_numbers = #tpu.dot_dimension_numbers<[1], [0], [0], [1], [0, 0, 1, 1], [], []>} : vector<8x4xbf16>, vector<4x384xbf16>, vector<8x384xf32> -> vector<8x384xf32>
    %141 = arith.addf %136, %140 : vector<8x384xf32>
    %c0_133 = arith.constant 0 : index
    %c110_134 = arith.constant 110 : index
    %142 = vector.load %arg11[%c0_133, %c110_134] : memref<4x640xbf16, #tpu.memory_space<vmem>>, vector<4x384xbf16>
    %c2_135 = arith.constant 2 : index
    %c0_136 = arith.constant 0 : index
    %c0_137 = arith.constant 0 : index
    %143 = vector.load %arg7[%c2_135, %c0_136, %c0_137] : memref<9x8x4xbf16, #tpu.memory_space<vmem>>, vector<1x8x4xbf16>
    %144 = vector.shape_cast %143 : vector<1x8x4xbf16> to vector<8x4xbf16>
    %cst_138 = arith.constant dense<0.000000e+00> : vector<8x384xf32>
    %145 = tpu.matmul %144, %142, %cst_138 {dimension_numbers = #tpu.dot_dimension_numbers<[1], [0], [0], [1], [0, 0, 1, 1], [], []>} : vector<8x4xbf16>, vector<4x384xbf16>, vector<8x384xf32> -> vector<8x384xf32>
    %146 = arith.addf %141, %145 : vector<8x384xf32>
    %c0_139 = arith.constant 0 : index
    %c127_140 = arith.constant 127 : index
    %147 = vector.load %arg11[%c0_139, %c127_140] : memref<4x640xbf16, #tpu.memory_space<vmem>>, vector<4x384xbf16>
    %c3_141 = arith.constant 3 : index
    %c0_142 = arith.constant 0 : index
    %c0_143 = arith.constant 0 : index
    %148 = vector.load %arg7[%c3_141, %c0_142, %c0_143] : memref<9x8x4xbf16, #tpu.memory_space<vmem>>, vector<1x8x4xbf16>
    %149 = vector.shape_cast %148 : vector<1x8x4xbf16> to vector<8x4xbf16>
    %cst_144 = arith.constant dense<0.000000e+00> : vector<8x384xf32>
    %150 = tpu.matmul %149, %147, %cst_144 {dimension_numbers = #tpu.dot_dimension_numbers<[1], [0], [0], [1], [0, 0, 1, 1], [], []>} : vector<8x4xbf16>, vector<4x384xbf16>, vector<8x384xf32> -> vector<8x384xf32>
    %151 = arith.addf %146, %150 : vector<8x384xf32>
    %c0_145 = arith.constant 0 : index
    %c128_146 = arith.constant 128 : index
    %152 = vector.load %arg11[%c0_145, %c128_146] : memref<4x640xbf16, #tpu.memory_space<vmem>>, vector<4x384xbf16>
    %c4_147 = arith.constant 4 : index
    %c0_148 = arith.constant 0 : index
    %c0_149 = arith.constant 0 : index
    %153 = vector.load %arg7[%c4_147, %c0_148, %c0_149] : memref<9x8x4xbf16, #tpu.memory_space<vmem>>, vector<1x8x4xbf16>
    %154 = vector.shape_cast %153 : vector<1x8x4xbf16> to vector<8x4xbf16>
    %cst_150 = arith.constant dense<0.000000e+00> : vector<8x384xf32>
    %155 = tpu.matmul %154, %152, %cst_150 {dimension_numbers = #tpu.dot_dimension_numbers<[1], [0], [0], [1], [0, 0, 1, 1], [], []>} : vector<8x4xbf16>, vector<4x384xbf16>, vector<8x384xf32> -> vector<8x384xf32>
    %156 = arith.addf %151, %155 : vector<8x384xf32>
    %c0_151 = arith.constant 0 : index
    %c129_152 = arith.constant 129 : index
    %157 = vector.load %arg11[%c0_151, %c129_152] : memref<4x640xbf16, #tpu.memory_space<vmem>>, vector<4x384xbf16>
    %c5_153 = arith.constant 5 : index
    %c0_154 = arith.constant 0 : index
    %c0_155 = arith.constant 0 : index
    %158 = vector.load %arg7[%c5_153, %c0_154, %c0_155] : memref<9x8x4xbf16, #tpu.memory_space<vmem>>, vector<1x8x4xbf16>
    %159 = vector.shape_cast %158 : vector<1x8x4xbf16> to vector<8x4xbf16>
    %cst_156 = arith.constant dense<0.000000e+00> : vector<8x384xf32>
    %160 = tpu.matmul %159, %157, %cst_156 {dimension_numbers = #tpu.dot_dimension_numbers<[1], [0], [0], [1], [0, 0, 1, 1], [], []>} : vector<8x4xbf16>, vector<4x384xbf16>, vector<8x384xf32> -> vector<8x384xf32>
    %161 = arith.addf %156, %160 : vector<8x384xf32>
    %c0_157 = arith.constant 0 : index
    %c146_158 = arith.constant 146 : index
    %162 = vector.load %arg11[%c0_157, %c146_158] : memref<4x640xbf16, #tpu.memory_space<vmem>>, vector<4x384xbf16>
    %c6_159 = arith.constant 6 : index
    %c0_160 = arith.constant 0 : index
    %c0_161 = arith.constant 0 : index
    %163 = vector.load %arg7[%c6_159, %c0_160, %c0_161] : memref<9x8x4xbf16, #tpu.memory_space<vmem>>, vector<1x8x4xbf16>
    %164 = vector.shape_cast %163 : vector<1x8x4xbf16> to vector<8x4xbf16>
    %cst_162 = arith.constant dense<0.000000e+00> : vector<8x384xf32>
    %165 = tpu.matmul %164, %162, %cst_162 {dimension_numbers = #tpu.dot_dimension_numbers<[1], [0], [0], [1], [0, 0, 1, 1], [], []>} : vector<8x4xbf16>, vector<4x384xbf16>, vector<8x384xf32> -> vector<8x384xf32>
    %166 = arith.addf %161, %165 : vector<8x384xf32>
    %c0_163 = arith.constant 0 : index
    %c147_164 = arith.constant 147 : index
    %167 = vector.load %arg11[%c0_163, %c147_164] : memref<4x640xbf16, #tpu.memory_space<vmem>>, vector<4x384xbf16>
    %c7_165 = arith.constant 7 : index
    %c0_166 = arith.constant 0 : index
    %c0_167 = arith.constant 0 : index
    %168 = vector.load %arg7[%c7_165, %c0_166, %c0_167] : memref<9x8x4xbf16, #tpu.memory_space<vmem>>, vector<1x8x4xbf16>
    %169 = vector.shape_cast %168 : vector<1x8x4xbf16> to vector<8x4xbf16>
    %cst_168 = arith.constant dense<0.000000e+00> : vector<8x384xf32>
    %170 = tpu.matmul %169, %167, %cst_168 {dimension_numbers = #tpu.dot_dimension_numbers<[1], [0], [0], [1], [0, 0, 1, 1], [], []>} : vector<8x4xbf16>, vector<4x384xbf16>, vector<8x384xf32> -> vector<8x384xf32>
    %171 = arith.addf %166, %170 : vector<8x384xf32>
    %c0_169 = arith.constant 0 : index
    %c148_170 = arith.constant 148 : index
    %172 = vector.load %arg11[%c0_169, %c148_170] : memref<4x640xbf16, #tpu.memory_space<vmem>>, vector<4x384xbf16>
    %c8_171 = arith.constant 8 : index
    %c0_172 = arith.constant 0 : index
    %c0_173 = arith.constant 0 : index
    %173 = vector.load %arg7[%c8_171, %c0_172, %c0_173] : memref<9x8x4xbf16, #tpu.memory_space<vmem>>, vector<1x8x4xbf16>
    %174 = vector.shape_cast %173 : vector<1x8x4xbf16> to vector<8x4xbf16>
    %cst_174 = arith.constant dense<0.000000e+00> : vector<8x384xf32>
    %175 = tpu.matmul %174, %172, %cst_174 {dimension_numbers = #tpu.dot_dimension_numbers<[1], [0], [0], [1], [0, 0, 1, 1], [], []>} : vector<8x4xbf16>, vector<4x384xbf16>, vector<8x384xf32> -> vector<8x384xf32>
    %176 = arith.addf %171, %175 : vector<8x384xf32>
    %c0_175 = arith.constant 0 : index
    %c0_176 = arith.constant 0 : index
    %177 = vector.load %arg8[%c0_175, %c0_176] : memref<8x1xf32, #tpu.memory_space<vmem>>, vector<8x1xf32>
    %178 = vector.broadcast %177 : vector<8x1xf32> to vector<8x384xf32>
    %179 = arith.addf %176, %178 : vector<8x384xf32>
    %cst_177 = arith.constant 0.000000e+00 : f32
    %180 = vector.broadcast %cst_177 : f32 to vector<8x384xf32>
    %181 = arith.maximumf %179, %180 : vector<8x384xf32>
    %c0_178 = arith.constant 0 : index
    %c0_179 = arith.constant 0 : index
    %c0_180 = arith.constant 0 : index
    %182 = vector.load %arg9[%c0_178, %c0_179, %c0_180] : memref<1x8x384xf32, #tpu.memory_space<vmem>>, vector<1x8x384xf32>
    %183 = vector.shape_cast %182 : vector<1x8x384xf32> to vector<8x384xf32>
    %184 = vector.shape_cast %181 : vector<8x384xf32> to vector<1x8x384xf32>
    tpu.vector_store %arg9[%c0_178, %c0_179, %c0_180], %184 {strides = array<i32>} : memref<1x8x384xf32, #tpu.memory_space<vmem>>, vector<1x8x384xf32>,
    return
  }
  func.func @transform_0(%arg0: i32) -> (i32, i32, i32) {
    %c0_i32 = arith.constant 0 : i32
    %c0_i32_0 = arith.constant 0 : i32
    %c0_i32_1 = arith.constant 0 : i32
    return %arg0, %c0_i32, %c0_i32_0 : i32, i32, i32
  }
  func.func @transform_1(%arg0: i32) -> (i32, i32) {
    %c0_i32 = arith.constant 0 : i32
    %c0_i32_0 = arith.constant 0 : i32
    %c0_i32_1 = arith.constant 0 : i32
    return %c0_i32, %c0_i32_0 : i32, i32
  }
  func.func @transform_2(%arg0: i32) -> (i32, i32, i32) {
    %c0_i32 = arith.constant 0 : i32
    %c0_i32_0 = arith.constant 0 : i32
    %c0_i32_1 = arith.constant 0 : i32
    %c0_i32_2 = arith.constant 0 : i32
    return %c0_i32, %c0_i32_0, %c0_i32_1 : i32, i32, i32
  }
  func.func @transform_3(%arg0: i32) -> (i32, i32) {
    %c0_i32 = arith.constant 0 : i32
    %c0_i32_0 = arith.constant 0 : i32
    %c0_i32_1 = arith.constant 0 : i32
    return %c0_i32, %c0_i32_0 : i32, i32
  }
  func.func @transform_4(%arg0: i32) -> (i32, i32, i32) {
    %c0_i32 = arith.constant 0 : i32
    %c0_i32_0 = arith.constant 0 : i32
    %c0_i32_1 = arith.constant 0 : i32
    %c0_i32_2 = arith.constant 0 : i32
    return %c0_i32, %c0_i32_0, %c0_i32_1 : i32, i32, i32
  }
  func.func @transform_5(%arg0: i32) -> (i32, i32) {
    %c0_i32 = arith.constant 0 : i32
    %c0_i32_0 = arith.constant 0 : i32
    %c0_i32_1 = arith.constant 0 : i32
    return %c0_i32, %c0_i32_0 : i32, i32
  }
  func.func @transform_6(%arg0: i32) -> (i32, i32, i32) {
    %c0_i32 = arith.constant 0 : i32
    %c0_i32_0 = arith.constant 0 : i32
    %c0_i32_1 = arith.constant 0 : i32
    %c0_i32_2 = arith.constant 0 : i32
    return %c0_i32, %c0_i32_0, %c0_i32_1 : i32, i32, i32
  }
  func.func @transform_7(%arg0: i32) -> (i32, i32) {
    %c0_i32 = arith.constant 0 : i32
    %c0_i32_0 = arith.constant 0 : i32
    %c0_i32_1 = arith.constant 0 : i32
    return %c0_i32, %c0_i32_0 : i32, i32
  }
  func.func @transform_8(%arg0: i32) -> (i32, i32, i32) {
    %c0_i32 = arith.constant 0 : i32
    %c0_i32_0 = arith.constant 0 : i32
    %c0_i32_1 = arith.constant 0 : i32
    return %arg0, %c0_i32, %c0_i32_0 : i32, i32, i32
  }
}

</mosaic_0001>

<llo_original>
// kernel: upsample3_forward.1
$region0: #{upsample3_forward.1}
  #allocation0 [shape = 'u32[]', space=smem, size = 0x4, offset = 0x4, fixed_abs, tag = 'smem constant byte address 0x4 - core index']
  #allocation1 [shape = 'u32[144,128]{1,0:T(1,128)}', space=vmem, size = 0x12000, scoped, tag = 'internal scratch']
  #allocation2 [shape = 'bf16[4,640]{1,0:T(4,128)(2,1)}', space=vmem, size = 0x1400, scoped, tag = 'scratch operand']
  #allocation3 [shape = 'bf16[4,640]{1,0:T(4,128)(2,1)}', space=vmem, size = 0x1400, scoped, tag = 'scratch operand']
  %s0 = inlined_call_operand.vmem [shape: f32[2,8,640], index: 0, kind: input, shape index: {}]
  %s1 = inlined_call_operand.vmem [shape: f32[1,384], index: 1, kind: input, shape index: {}]
  %s2 = inlined_call_operand.vmem [shape: bf16[9,4,8], index: 2, kind: input, shape index: {}]
  %s3 = inlined_call_operand.vmem [shape: f32[4,1], index: 3, kind: input, shape index: {}]
  %s4 = inlined_call_operand.vmem [shape: bf16[9,4,4], index: 4, kind: input, shape index: {}]
  %s5 = inlined_call_operand.vmem [shape: f32[4,1], index: 5, kind: input, shape index: {}]
  %s6 = inlined_call_operand.vmem [shape: bf16[9,8,4], index: 6, kind: input, shape index: {}]
  %s7 = inlined_call_operand.vmem [shape: f32[8,1], index: 7, kind: input, shape index: {}]
  %s8 = inlined_call_operand.vmem [shape: f32[2,8,384], index: 8, kind: output, shape index: {}]
  %s9 = sld [smem:[#allocation0]]
  $region65: #{upsample3_forward.1} parent=0
    _
  %s11 = ssub.s32 1, %s9
  %s12 = scalar_select 0, %s11, %s9
  loop: start=0, step=1, limit=4
  $region2: #{upsample3_forward.1} parent=0 // loop_pre_header
    _
  $region3: #{upsample3_forward.1} parent=0 // loop_header
    %s14 = sphi 0, %s18
    %p15 = scmp.ge.s32.totalorder %s14, 4
    %s24 = sphi 0, %s26
    %s27 = sphi 0, %s24
    %s28 = sphi 0, %s27
    %s44 = sphi 0, %s28
    %s48 = sphi 0, %s48
    %s50 = sphi 0, %s48
    %s51 = sphi 0, %s50
    %s65 = sphi 0, %s51
    %s69 = sphi 0, %s69
    %s71 = sphi 0, %s69
    %s72 = sphi 0, %s71
    %s86 = sphi 0, %s72
    %s90 = sphi 0, %s90
    %s92 = sphi 0, %s90
    %s93 = sphi 0, %s92
    %s107 = sphi 0, %s93
    %s111 = sphi 0, %s111
    %s113 = sphi 0, %s111
    %s114 = sphi 0, %s113
    %s128 = sphi 0, %s114
    %s132 = sphi 0, %s132
    %s134 = sphi 0, %s132
    %s135 = sphi 0, %s134
    %s149 = sphi 0, %s135
    %s153 = sphi 0, %s153
    %s155 = sphi 0, %s153
    %s156 = sphi 0, %s155
    %s170 = sphi 0, %s156
    %s174 = sphi 0, %s174
    %s176 = sphi 0, %s174
    %s177 = sphi 0, %s176
    %s191 = sphi 0, %s177
    %s197 = sphi 0, %s199
    %s200 = sphi 0, %s197
    %s201 = sphi 0, %s200
    %s217 = sphi 0, %s201
  $region4: #{upsample3_forward.1} parent=0 // loop_header_branch
    %17 = sbr.rel (%p15) target = $region8
  $region5: #{upsample3_forward.1} parent=0 // loop_body
    %s19 = ssub.s32 %s14, 1
    %s20 = ssub.s32 %s14, 2
    %s21 = sadd.s32 %s14, 1
    %s22 = ssub.s32 %s14, %s21
    %p23 = scmp.eq.s32.totalorder %s22, 0
    %s25 = sadd.s32 %s24, 1
    %s26 = scalar_select %p23, %s24, %s25
    %p29 = pneg %p23
    %p30 = scmp.eq.s32.totalorder %s14, 1
    %p31 = por %p29, %p30
    %p32 = scmp.ne.s32.totalorder %s24, %s27
    %p33 = scmp.eq.s32.totalorder %s14, 0
    %p34 = por %p32, %p33
    %p35 = scmp.ne.s32.totalorder %s24, %s27
    %p36 = scmp.eq.s32.totalorder %s19, 1
    %p37 = por %p35, %p36
    %p38 = scmp.ne.s32.totalorder %s27, %s28
    %p39 = scmp.eq.s32.totalorder %s19, 0
    %p40 = por %p38, %p39
    %p41 = scmp.ne.s32.totalorder %s27, %s28
    %p42 = scmp.eq.s32.totalorder %s20, 1
    %p43 = por %p41, %p42
    %p45 = scmp.ne.s32.totalorder %s28, %s44
    %p46 = scmp.eq.s32.totalorder %s20, 0
    %p47 = por %p45, %p46
    %s49 = sadd.s32 %s48, 1
    %p52 = scmp.eq.s32.totalorder %s14, 1
    %p53 = scmp.ne.s32.totalorder %s48, %s50
    %p54 = scmp.eq.s32.totalorder %s14, 0
    %p55 = por %p53, %p54
    %p56 = scmp.ne.s32.totalorder %s48, %s50
    %p57 = scmp.eq.s32.totalorder %s19, 1
    %p58 = por %p56, %p57
    %p59 = scmp.ne.s32.totalorder %s50, %s51
    %p60 = scmp.eq.s32.totalorder %s19, 0
    %p61 = por %p59, %p60
    %p62 = scmp.ne.s32.totalorder %s50, %s51
    %p63 = scmp.eq.s32.totalorder %s20, 1
    %p64 = por %p62, %p63
    %p66 = scmp.ne.s32.totalorder %s51, %s65
    %p67 = scmp.eq.s32.totalorder %s20, 0
    %p68 = por %p66, %p67
    %s70 = sadd.s32 %s69, 1
    %p73 = scmp.eq.s32.totalorder %s14, 1
    %p74 = scmp.ne.s32.totalorder %s69, %s71
    %p75 = scmp.eq.s32.totalorder %s14, 0
    %p76 = por %p74, %p75
    %p77 = scmp.ne.s32.totalorder %s69, %s71
    %p78 = scmp.eq.s32.totalorder %s19, 1
    %p79 = por %p77, %p78
    %p80 = scmp.ne.s32.totalorder %s71, %s72
    %p81 = scmp.eq.s32.totalorder %s19, 0
    %p82 = por %p80, %p81
    %p83 = scmp.ne.s32.totalorder %s71, %s72
    %p84 = scmp.eq.s32.totalorder %s20, 1
    %p85 = por %p83, %p84
    %p87 = scmp.ne.s32.totalorder %s72, %s86
    %p88 = scmp.eq.s32.totalorder %s20, 0
    %p89 = por %p87, %p88
    %s91 = sadd.s32 %s90, 1
    %p94 = scmp.eq.s32.totalorder %s14, 1
    %p95 = scmp.ne.s32.totalorder %s90, %s92
    %p96 = scmp.eq.s32.totalorder %s14, 0
    %p97 = por %p95, %p96
    %p98 = scmp.ne.s32.totalorder %s90, %s92
    %p99 = scmp.eq.s32.totalorder %s19, 1
    %p100 = por %p98, %p99
    %p101 = scmp.ne.s32.totalorder %s92, %s93
    %p102 = scmp.eq.s32.totalorder %s19, 0
    %p103 = por %p101, %p102
    %p104 = scmp.ne.s32.totalorder %s92, %s93
    %p105 = scmp.eq.s32.totalorder %s20, 1
    %p106 = por %p104, %p105
    %p108 = scmp.ne.s32.totalorder %s93, %s107
    %p109 = scmp.eq.s32.totalorder %s20, 0
    %p110 = por %p108, %p109
    %s112 = sadd.s32 %s111, 1
    %p115 = scmp.eq.s32.totalorder %s14, 1
    %p116 = scmp.ne.s32.totalorder %s111, %s113
    %p117 = scmp.eq.s32.totalorder %s14, 0
    %p118 = por %p116, %p117
    %p119 = scmp.ne.s32.totalorder %s111, %s113
    %p120 = scmp.eq.s32.totalorder %s19, 1
    %p121 = por %p119, %p120
    %p122 = scmp.ne.s32.totalorder %s113, %s114
    %p123 = scmp.eq.s32.totalorder %s19, 0
    %p124 = por %p122, %p123
    %p125 = scmp.ne.s32.totalorder %s113, %s114
    %p126 = scmp.eq.s32.totalorder %s20, 1
    %p127 = por %p125, %p126
    %p129 = scmp.ne.s32.totalorder %s114, %s128
    %p130 = scmp.eq.s32.totalorder %s20, 0
    %p131 = por %p129, %p130
    %s133 = sadd.s32 %s132, 1
    %p136 = scmp.eq.s32.totalorder %s14, 1
    %p137 = scmp.ne.s32.totalorder %s132, %s134
    %p138 = scmp.eq.s32.totalorder %s14, 0
    %p139 = por %p137, %p138
    %p140 = scmp.ne.s32.totalorder %s132, %s134
    %p141 = scmp.eq.s32.totalorder %s19, 1
    %p142 = por %p140, %p141
    %p143 = scmp.ne.s32.totalorder %s134, %s135
    %p144 = scmp.eq.s32.totalorder %s19, 0
    %p145 = por %p143, %p144
    %p146 = scmp.ne.s32.totalorder %s134, %s135
    %p147 = scmp.eq.s32.totalorder %s20, 1
    %p148 = por %p146, %p147
    %p150 = scmp.ne.s32.totalorder %s135, %s149
    %p151 = scmp.eq.s32.totalorder %s20, 0
    %p152 = por %p150, %p151
    %s154 = sadd.s32 %s153, 1
    %p157 = scmp.eq.s32.totalorder %s14, 1
    %p158 = scmp.ne.s32.totalorder %s153, %s155
    %p159 = scmp.eq.s32.totalorder %s14, 0
    %p160 = por %p158, %p159
    %p161 = scmp.ne.s32.totalorder %s153, %s155
    %p162 = scmp.eq.s32.totalorder %s19, 1
    %p163 = por %p161, %p162
    %p164 = scmp.ne.s32.totalorder %s155, %s156
    %p165 = scmp.eq.s32.totalorder %s19, 0
    %p166 = por %p164, %p165
    %p167 = scmp.ne.s32.totalorder %s155, %s156
    %p168 = scmp.eq.s32.totalorder %s20, 1
    %p169 = por %p167, %p168
    %p171 = scmp.ne.s32.totalorder %s156, %s170
    %p172 = scmp.eq.s32.totalorder %s20, 0
    %p173 = por %p171, %p172
    %s175 = sadd.s32 %s174, 1
    %p178 = scmp.eq.s32.totalorder %s14, 1
    %p179 = scmp.ne.s32.totalorder %s174, %s176
    %p180 = scmp.eq.s32.totalorder %s14, 0
    %p181 = por %p179, %p180
    %p182 = scmp.ne.s32.totalorder %s174, %s176
    %p183 = scmp.eq.s32.totalorder %s19, 1
    %p184 = por %p182, %p183
    %p185 = scmp.ne.s32.totalorder %s176, %s177
    %p186 = scmp.eq.s32.totalorder %s19, 0
    %p187 = por %p185, %p186
    %p188 = scmp.ne.s32.totalorder %s176, %s177
    %p189 = scmp.eq.s32.totalorder %s20, 1
    %p190 = por %p188, %p189
    %p192 = scmp.ne.s32.totalorder %s177, %s191
    %p193 = scmp.eq.s32.totalorder %s20, 0
    %p194 = por %p192, %p193
    %s195 = ssub.s32 %s14, %s21
    %p196 = scmp.eq.s32.totalorder %s195, 0
    %s198 = sadd.s32 %s197, 1
    %s199 = scalar_select %p196, %s197, %s198
    %p202 = pneg %p196
    %p203 = scmp.eq.s32.totalorder %s14, 1
    %p204 = por %p202, %p203
    %p205 = scmp.ne.s32.totalorder %s197, %s200
    %p206 = scmp.eq.s32.totalorder %s14, 0
    %p207 = por %p205, %p206
    %p208 = scmp.ne.s32.totalorder %s197, %s200
    %p209 = scmp.eq.s32.totalorder %s19, 1
    %p210 = por %p208, %p209
    %p211 = scmp.ne.s32.totalorder %s200, %s201
    %p212 = scmp.eq.s32.totalorder %s19, 0
    %p213 = por %p211, %p212
    %p214 = scmp.ne.s32.totalorder %s200, %s201
    %p215 = scmp.eq.s32.totalorder %s20, 1
    %p216 = por %p214, %p215
    %p218 = scmp.ne.s32.totalorder %s201, %s217
    %p219 = scmp.eq.s32.totalorder %s20, 0
    %p220 = por %p218, %p219
    %p221 = scmp.le.s32.totalorder 1, %s14
    %p222 = scmp.lt.s32.totalorder %s14, 3
    %p223 = pnand %p221, %p222
    %p224 = pneg %p223
    // Predicated region
    $region9: #{upsample3_forward.1} parent=5 // pred_check
      _
    $region10: #{upsample3_forward.1} parent=5 // pred_check_branch
      %226 = sbr.rel (%p223) target = $region12
    $region11: #{upsample3_forward.1} parent=5 // pred_region
      %s227 = ssub.s32 %s14, 1
      // Predicated region
      $region13: #{upsample3_forward.1} parent=11 // pred_check
        %p228 = pneg %p61
      $region14: #{upsample3_forward.1} parent=11 // pred_check_branch
        %230 = sbr.rel (%p228) target = $region16
      $region15: #{upsample3_forward.1} parent=11 // pred_region
        _
      $region16: #{upsample3_forward.1} parent=11 // pred_fallthru
        _
      // Predicated region
      $region17: #{upsample3_forward.1} parent=11 // pred_check
        %p231 = pneg %p82
      $region18: #{upsample3_forward.1} parent=11 // pred_check_branch
        %233 = sbr.rel (%p231) target = $region20
      $region19: #{upsample3_forward.1} parent=11 // pred_region
        _
      $region20: #{upsample3_forward.1} parent=11 // pred_fallthru
        _
      // Predicated region
      $region21: #{upsample3_forward.1} parent=11 // pred_check
        %p234 = pneg %p103
      $region22: #{upsample3_forward.1} parent=11 // pred_check_branch
        %236 = sbr.rel (%p234) target = $region24
      $region23: #{upsample3_forward.1} parent=11 // pred_region
        _
      $region24: #{upsample3_forward.1} parent=11 // pred_fallthru
        _
      // Predicated region
      $region25: #{upsample3_forward.1} parent=11 // pred_check
        %p237 = pneg %p124
      $region26: #{upsample3_forward.1} parent=11 // pred_check_branch
        %239 = sbr.rel (%p237) target = $region28
      $region27: #{upsample3_forward.1} parent=11 // pred_region
        _
      $region28: #{upsample3_forward.1} parent=11 // pred_fallthru
        _
      // Predicated region
      $region29: #{upsample3_forward.1} parent=11 // pred_check
        %p240 = pneg %p145
      $region30: #{upsample3_forward.1} parent=11 // pred_check_branch
        %242 = sbr.rel (%p240) target = $region32
      $region31: #{upsample3_forward.1} parent=11 // pred_region
        _
      $region32: #{upsample3_forward.1} parent=11 // pred_fallthru
        _
      // Predicated region
      $region33: #{upsample3_forward.1} parent=11 // pred_check
        %p243 = pneg %p166
      $region34: #{upsample3_forward.1} parent=11 // pred_check_branch
        %245 = sbr.rel (%p243) target = $region36
      $region35: #{upsample3_forward.1} parent=11 // pred_region
        _
      $region36: #{upsample3_forward.1} parent=11 // pred_fallthru
        _
      // Predicated region
      $region37: #{upsample3_forward.1} parent=11 // pred_check
        %p246 = pneg %p187
      $region38: #{upsample3_forward.1} parent=11 // pred_check_branch
        %248 = sbr.rel (%p246) target = $region40
      $region39: #{upsample3_forward.1} parent=11 // pred_region
        _
      $region40: #{upsample3_forward.1} parent=11 // pred_fallthru
        _
    $region12: #{upsample3_forward.1} parent=5 // pred_fallthru
      _
    %p249 = scmp.lt.s32.totalorder %s14, 2
    // Predicated region
    $region41: #{upsample3_forward.1} parent=5 // pred_check
      %p250 = pneg %p249
    $region42: #{upsample3_forward.1} parent=5 // pred_check_branch
      %252 = sbr.rel (%p250) target = $region44
    $region43: #{upsample3_forward.1} parent=5 // pred_region
      // Predicated region
      $region45: #{upsample3_forward.1} parent=43 // pred_check
        %p253 = pneg %p34
      $region46: #{upsample3_forward.1} parent=43 // pred_check_branch
        %255 = sbr.rel (%p253) target = $region48
      $region47: #{upsample3_forward.1} parent=43 // pred_region
        %p256 = scmp.lt.s32.totalorder %s14, 1
        %s257 = scalar_select %p256, %s14, 1
        %s258 = smul.addr %s257, 5
        %s259 = smul.addr %s258, 8
        %s260 = scalar_lea.vmem %s0, %s259
      $region48: #{upsample3_forward.1} parent=43 // pred_fallthru
        _
    $region44: #{upsample3_forward.1} parent=5 // pred_fallthru
      _
    %p261 = scmp.le.s32.totalorder 1, %s14
    %p262 = scmp.lt.s32.totalorder %s14, 3
    %p263 = pnand %p261, %p262
    %p264 = pneg %p263
    // Predicated region
    $region49: #{upsample3_forward.1} parent=5 // pred_check
      _
    $region50: #{upsample3_forward.1} parent=5 // pred_check_branch
      %266 = sbr.rel (%p263) target = $region52
    $region51: #{upsample3_forward.1} parent=5 // pred_region
      %s267 = ssub.s32 %s14, 1
      %p268 = scmp.lt.s32.totalorder %s19, 1
      %s269 = scalar_select %p268, %s19, 1
      %s270 = smul.addr %s269, 5
      %s271 = smul.addr %s270, 8
      %s272 = scalar_lea.vmem %s0, %s271
      %p273 = pneg %p40
      %p274 = pneg %p37
      %p275 = pneg %p61
      %p276 = pneg %p58
      %p277 = pneg %p82
      %p278 = pneg %p79
      %p279 = pneg %p103
      %p280 = pneg %p100
      %p281 = pneg %p124
      %p282 = pneg %p121
      %p283 = pneg %p145
      %p284 = pneg %p142
      %p285 = pneg %p166
      %p286 = pneg %p163
      %p287 = pneg %p187
      %p288 = pneg %p184
      %p289 = pneg %p213
      %p290 = pneg %p210
      %p291 = scmp.lt.s32.totalorder %s19, 1
      %s292 = scalar_select %p291, %s19, 1
      %s293 = smul.addr %s292, 3
      %s294 = smul.addr %s293, 8
      %s295 = scalar_lea.vmem %s8, %s294
      %p296 = scmp.lt.s32.totalorder %s19, 1
      %s297 = scalar_select %p296, %s19, 1
      %s298 = smul.addr %s297, 5
      %s299 = smul.addr %s298, 8
      %s300 = scalar_lea.vmem %s0, %s299
      %p301 = scmp.lt.s32.totalorder %s19, 1
      %s302 = scalar_select %p301, %s19, 1
      %s303 = smul.addr %s302, 3
      %s304 = smul.addr %s303, 8
      %s305 = scalar_lea.vmem %s8, %s304
      %v307 = vld [vmem:[%s1] sm:$0x7]
      %308 = vst [vmem:[#allocation2] sm:$0x3] 0
      %309 = vst [vmem:[#allocation2 + $0x8] sm:$0x3] 0
      %310 = vst [vmem:[#allocation3] sm:$0x3] 0
      %311 = vst [vmem:[#allocation3 + $0x8] sm:$0x3] 0
      %v312 = vld [vmem:[%s300] sm:$0xff]
      %v313 = vld [vmem:[%s300 + $0x8] sm:$0xff]
      %v314 = vld [vmem:[%s300 + $0x10] sm:$0xff]
      %v315 = vld [vmem:[%s300 + $0x18] sm:$0xff]
      %v316 = vpack.c.bf16 %v312, %v312
      %v317 = vpack.c.bf16 %v313, %v313
      %v318 = vpack.c.bf16 %v314, %v314
      %v319 = vpack.c.bf16 %v315, %v315
      %v320 = vld [vmem:[%s2] sm:$0x3]
      %s321 = scalar_lea.vmem %s2, 2
      %v322 = vld [vmem:[%s321] sm:$0x3]
      %327 = vrot.lane.b32.xlu0 %v316, 19
      %v328 = vpop.permute.xlu0 %327
      %329 = vrot.lane.b32.xlu0 %v317, 19
      %v330 = vpop.permute.xlu0 %329
      %331 = vrot.lane.b32.xlu0 %v318, 19
      %v332 = vpop.permute.xlu0 %331
      %333 = vrot.lane.b32.xlu0 %v319, 19
      %v334 = vpop.permute.xlu0 %333
      %vm335 = vcmask 154624
      %v336 = vsel %vm335, %v328, %v330
      %v337 = vsel %vm335, %v330, %v332
      %v338 = vsel %vm335, %v332, %v334
      %vm339 = vcmask 64512
      %v341 = vsel %vm339, %v322, 0
      %vm343 = vcmask 1043456
      %v345 = vsel %vm343, %v336, 0
      %v348 = vsel %vm343, %v337, 0
      %v351 = vsel %vm343, %v338, 0
      %353 = vmatprep.subr.bf16.mxu0 %v348
      %354 = vmatpush1.bf16.msra.mxu0 %v345
      %355 = vmatprep.subr.bf16.mxu0 0
      %356 = vmatpush1.bf16.msra.mxu0 0
      %357 = vmatprep.subr.bf16.mxu0 0
      %358 = vmatpush1.bf16.msra.mxu0 0
      %359 = vmatprep.subr.bf16.mxu0 0
      %360 = vmatpush1.bf16.msra.mxu0 0
      %361 = vmatprep.subr.bf16.mxu0 0
      %362 = vmatpush1.bf16.msra.mxu0 0
      %363 = vmatprep.subr.bf16.mxu0 0
      %364 = vmatpush1.bf16.msra.mxu0 0
      %365 = vmatprep.subr.bf16.mxu0 0
      %366 = vmatpush1.bf16.msra.mxu0 0
      %367 = vmatprep.subr.bf16.mxu0 0
      %368 = vmatpush1.bf16.msra.mxu0 0
      %369 = vmatprep.subr.bf16.mxu0 0
      %370 = vmatpush1.bf16.msra.mxu0 0
      %371 = vmatprep.subr.bf16.mxu0 0
      %372 = vmatpush1.bf16.msra.mxu0 0
      %373 = vmatprep.subr.bf16.mxu0 0
      %374 = vmatpush1.bf16.msra.mxu0 0
      %375 = vmatprep.subr.bf16.mxu0 0
      %376 = vmatpush1.bf16.msra.mxu0 0
      %377 = vmatprep.subr.bf16.mxu0 0
      %378 = vmatpush1.bf16.msra.mxu0 0
      %379 = vmatprep.subr.bf16.mxu0 0
      %380 = vmatpush1.bf16.msra.mxu0 0
      %381 = vmatprep.subr.bf16.mxu0 0
      %382 = vmatpush1.bf16.msra.mxu0 0
      %383 = vmatprep.subr.bf16.mxu0 0
      %384 = vmatpush1.bf16.msra.mxu0 0
      %385 = vmatprep.mubr.bf16.mxu0 0
      %386 = vmatmul.mubr.bf16.gmra.mrb[0].mxu0 %v341
      %v387 = vpop.f32.mrb[0].mxu0
      %v388 = vadd.f32 0.0, %v387
      %v389 = vpop.f32.mrb[0].mxu0
      %v390 = vadd.f32 0.0, %v389
      %v391 = vpop.f32.mrb[0].mxu0
      %v392 = vpop.f32.mrb[0].mxu0
      %393 = vdwg.mxu0
      %394 = vmatprep.subr.bf16.mxu0 0
      %395 = vmatpush1.bf16.msra.mxu0 %v351
      %396 = vmatprep.subr.bf16.mxu0 0
      %397 = vmatpush1.bf16.msra.mxu0 0
      %398 = vmatprep.subr.bf16.mxu0 0
      %399 = vmatpush1.bf16.msra.mxu0 0
      %400 = vmatprep.subr.bf16.mxu0 0
      %401 = vmatpush1.bf16.msra.mxu0 0
      %402 = vmatprep.subr.bf16.mxu0 0
      %403 = vmatpush1.bf16.msra.mxu0 0
      %404 = vmatprep.subr.bf16.mxu0 0
      %405 = vmatpush1.bf16.msra.mxu0 0
      %406 = vmatprep.subr.bf16.mxu0 0
      %407 = vmatpush1.bf16.msra.mxu0 0
      %408 = vmatprep.subr.bf16.mxu0 0
      %409 = vmatpush1.bf16.msra.mxu0 0
      %410 = vmatprep.subr.bf16.mxu0 0
      %411 = vmatpush1.bf16.msra.mxu0 0
      %412 = vmatprep.subr.bf16.mxu0 0
      %413 = vmatpush1.bf16.msra.mxu0 0
      %414 = vmatprep.subr.bf16.mxu0 0
      %415 = vmatpush1.bf16.msra.mxu0 0
      %416 = vmatprep.subr.bf16.mxu0 0
      %417 = vmatpush1.bf16.msra.mxu0 0
      %418 = vmatprep.subr.bf16.mxu0 0
      %419 = vmatpush1.bf16.msra.mxu0 0
      %420 = vmatprep.subr.bf16.mxu0 0
      %421 = vmatpush1.bf16.msra.mxu0 0
      %422 = vmatprep.subr.bf16.mxu0 0
      %423 = vmatpush1.bf16.msra.mxu0 0
      %424 = vmatprep.subr.bf16.mxu0 0
      %425 = vmatpush1.bf16.msra.mxu0 0
      %426 = vmatprep.mubr.bf16.mxu0 0
      %427 = vmatmul.mubr.bf16.gmra.mrb[0].mxu0 %v341
      %v428 = vpop.f32.mrb[0].mxu0
      %v429 = vadd.f32 0.0, %v428
      %v430 = vpop.f32.mrb[0].mxu0
      %v431 = vpop.f32.mrb[0].mxu0
      %v432 = vpop.f32.mrb[0].mxu0
      %433 = vdwg.mxu0
      %434 = vrot.lane.b32.xlu0 %v316, 20
      %v435 = vpop.permute.xlu0 %434
      %436 = vrot.lane.b32.xlu0 %v317, 20
      %v437 = vpop.permute.xlu0 %436
      %438 = vrot.lane.b32.xlu0 %v318, 20
      %v439 = vpop.permute.xlu0 %438
      %440 = vrot.lane.b32.xlu0 %v319, 20
      %v441 = vpop.permute.xlu0 %440
      %vm442 = vcmask 162816
      %v443 = vsel %vm442, %v435, %v437
      %v444 = vsel %vm442, %v437, %v439
      %v445 = vsel %vm442, %v439, %v441
      %v447 = vsel %vm339, %v320, 0
      %v450 = vsel %vm343, %v443, 0
      %v453 = vsel %vm343, %v444, 0
      %v456 = vsel %vm343, %v445, 0
      %458 = vmatprep.subr.bf16.mxu0 %v453
      %459 = vmatpush1.bf16.msra.mxu0 %v450
      %460 = vmatprep.subr.bf16.mxu0 0
      %461 = vmatpush1.bf16.msra.mxu0 0
      %462 = vmatprep.subr.bf16.mxu0 0
      %463 = vmatpush1.bf16.msra.mxu0 0
      %464 = vmatprep.subr.bf16.mxu0 0
      %465 = vmatpush1.bf16.msra.mxu0 0
      %466 = vmatprep.subr.bf16.mxu0 0
      %467 = vmatpush1.bf16.msra.mxu0 0
      %468 = vmatprep.subr.bf16.mxu0 0
      %469 = vmatpush1.bf16.msra.mxu0 0
      %470 = vmatprep.subr.bf16.mxu0 0
      %471 = vmatpush1.bf16.msra.mxu0 0
      %472 = vmatprep.subr.bf16.mxu0 0
      %473 = vmatpush1.bf16.msra.mxu0 0
      %474 = vmatprep.subr.bf16.mxu0 0
      %475 = vmatpush1.bf16.msra.mxu0 0
      %476 = vmatprep.subr.bf16.mxu0 0
      %477 = vmatpush1.bf16.msra.mxu0 0
      %478 = vmatprep.subr.bf16.mxu0 0
      %479 = vmatpush1.bf16.msra.mxu0 0
      %480 = vmatprep.subr.bf16.mxu0 0
      %481 = vmatpush1.bf16.msra.mxu0 0
      %482 = vmatprep.subr.bf16.mxu0 0
      %483 = vmatpush1.bf16.msra.mxu0 0
      %484 = vmatprep.subr.bf16.mxu0 0
      %485 = vmatpush1.bf16.msra.mxu0 0
      %486 = vmatprep.subr.bf16.mxu0 0
      %487 = vmatpush1.bf16.msra.mxu0 0
      %488 = vmatprep.subr.bf16.mxu0 0
      %489 = vmatpush1.bf16.msra.mxu0 0
      %490 = vmatprep.mubr.bf16.mxu0 0
      %491 = vmatmul.mubr.bf16.gmra.mrb[0].mxu0 %v447
      %v492 = vpop.f32.mrb[0].mxu0
      %v493 = vadd.f32 %v388, %v492
      %v494 = vpop.f32.mrb[0].mxu0
      %v495 = vadd.f32 %v390, %v494
      %v496 = vpop.f32.mrb[0].mxu0
      %v497 = vpop.f32.mrb[0].mxu0
      %498 = vdwg.mxu0
      %499 = vmatprep.subr.bf16.mxu0 0
      %500 = vmatpush1.bf16.msra.mxu0 %v456
      %501 = vmatprep.subr.bf16.mxu0 0
      %502 = vmatpush1.bf16.msra.mxu0 0
      %503 = vmatprep.subr.bf16.mxu0 0
      %504 = vmatpush1.bf16.msra.mxu0 0
      %505 = vmatprep.subr.bf16.mxu0 0
      %506 = vmatpush1.bf16.msra.mxu0 0
      %507 = vmatprep.subr.bf16.mxu0 0
      %508 = vmatpush1.bf16.msra.mxu0 0
      %509 = vmatprep.subr.bf16.mxu0 0
      %510 = vmatpush1.bf16.msra.mxu0 0
      %511 = vmatprep.subr.bf16.mxu0 0
      %512 = vmatpush1.bf16.msra.mxu0 0
      %513 = vmatprep.subr.bf16.mxu0 0
      %514 = vmatpush1.bf16.msra.mxu0 0
      %515 = vmatprep.subr.bf16.mxu0 0
      %516 = vmatpush1.bf16.msra.mxu0 0
      %517 = vmatprep.subr.bf16.mxu0 0
      %518 = vmatpush1.bf16.msra.mxu0 0
      %519 = vmatprep.subr.bf16.mxu0 0
      %520 = vmatpush1.bf16.msra.mxu0 0
      %521 = vmatprep.subr.bf16.mxu0 0
      %522 = vmatpush1.bf16.msra.mxu0 0
      %523 = vmatprep.subr.bf16.mxu0 0
      %524 = vmatpush1.bf16.msra.mxu0 0
      %525 = vmatprep.subr.bf16.mxu0 0
      %526 = vmatpush1.bf16.msra.mxu0 0
      %527 = vmatprep.subr.bf16.mxu0 0
      %528 = vmatpush1.bf16.msra.mxu0 0
      %529 = vmatprep.subr.bf16.mxu0 0
      %530 = vmatpush1.bf16.msra.mxu0 0
      %531 = vmatprep.mubr.bf16.mxu0 0
      %532 = vmatmul.mubr.bf16.gmra.mrb[0].mxu0 %v447
      %v533 = vpop.f32.mrb[0].mxu0
      %v534 = vadd.f32 %v429, %v533
      %v535 = vpop.f32.mrb[0].mxu0
      %v536 = vpop.f32.mrb[0].mxu0
      %v537 = vpop.f32.mrb[0].mxu0
      %538 = vdwg.mxu0
      %s539 = scalar_lea.vmem %s2, 4
      %v540 = vld [vmem:[%s539] sm:$0x3]
      %541 = vrot.lane.b32.xlu0 %v316, 18
      %v542 = vpop.permute.xlu0 %541
      %543 = vrot.lane.b32.xlu0 %v317, 18
      %v544 = vpop.permute.xlu0 %543
      %545 = vrot.lane.b32.xlu0 %v318, 18
      %v546 = vpop.permute.xlu0 %545
      %547 = vrot.lane.b32.xlu0 %v319, 18
      %v548 = vpop.permute.xlu0 %547
      %vm549 = vcmask 146432
      %v550 = vsel %vm549, %v542, %v544
      %v551 = vsel %vm549, %v544, %v546
      %v552 = vsel %vm549, %v546, %v548
      %v554 = vsel %vm339, %v540, 0
      %v557 = vsel %vm343, %v550, 0
      %v560 = vsel %vm343, %v551, 0
      %v563 = vsel %vm343, %v552, 0
      %565 = vmatprep.subr.bf16.mxu0 %v560
      %566 = vmatpush1.bf16.msra.mxu0 %v557
      %567 = vmatprep.subr.bf16.mxu0 0
      %568 = vmatpush1.bf16.msra.mxu0 0
      %569 = vmatprep.subr.bf16.mxu0 0
      %570 = vmatpush1.bf16.msra.mxu0 0
      %571 = vmatprep.subr.bf16.mxu0 0
      %572 = vmatpush1.bf16.msra.mxu0 0
      %573 = vmatprep.subr.bf16.mxu0 0
      %574 = vmatpush1.bf16.msra.mxu0 0
      %575 = vmatprep.subr.bf16.mxu0 0
      %576 = vmatpush1.bf16.msra.mxu0 0
      %577 = vmatprep.subr.bf16.mxu0 0
      %578 = vmatpush1.bf16.msra.mxu0 0
      %579 = vmatprep.subr.bf16.mxu0 0
      %580 = vmatpush1.bf16.msra.mxu0 0
      %581 = vmatprep.subr.bf16.mxu0 0
      %582 = vmatpush1.bf16.msra.mxu0 0
      %583 = vmatprep.subr.bf16.mxu0 0
      %584 = vmatpush1.bf16.msra.mxu0 0
      %585 = vmatprep.subr.bf16.mxu0 0
      %586 = vmatpush1.bf16.msra.mxu0 0
      %587 = vmatprep.subr.bf16.mxu0 0
      %588 = vmatpush1.bf16.msra.mxu0 0
      %589 = vmatprep.subr.bf16.mxu0 0
      %590 = vmatpush1.bf16.msra.mxu0 0
      %591 = vmatprep.subr.bf16.mxu0 0
      %592 = vmatpush1.bf16.msra.mxu0 0
      %593 = vmatprep.subr.bf16.mxu0 0
      %594 = vmatpush1.bf16.msra.mxu0 0
      %595 = vmatprep.subr.bf16.mxu0 0
      %596 = vmatpush1.bf16.msra.mxu0 0
      %597 = vmatprep.mubr.bf16.mxu0 0
      %598 = vmatmul.mubr.bf16.gmra.mrb[0].mxu0 %v554
      %v599 = vpop.f32.mrb[0].mxu0
      %v600 = vadd.f32 0.0, %v599
      %v601 = vpop.f32.mrb[0].mxu0
      %v602 = vadd.f32 0.0, %v601
      %v603 = vpop.f32.mrb[0].mxu0
      %v604 = vpop.f32.mrb[0].mxu0
      %605 = vdwg.mxu0
      %606 = vmatprep.subr.bf16.mxu0 0
      %607 = vmatpush1.bf16.msra.mxu0 %v563
      %608 = vmatprep.subr.bf16.mxu0 0
      %609 = vmatpush1.bf16.msra.mxu0 0
      %610 = vmatprep.subr.bf16.mxu0 0
      %611 = vmatpush1.bf16.msra.mxu0 0
      %612 = vmatprep.subr.bf16.mxu0 0
      %613 = vmatpush1.bf16.msra.mxu0 0
      %614 = vmatprep.subr.bf16.mxu0 0
      %615 = vmatpush1.bf16.msra.mxu0 0
      %616 = vmatprep.subr.bf16.mxu0 0
      %617 = vmatpush1.bf16.msra.mxu0 0
      %618 = vmatprep.subr.bf16.mxu0 0
      %619 = vmatpush1.bf16.msra.mxu0 0
      %620 = vmatprep.subr.bf16.mxu0 0
      %621 = vmatpush1.bf16.msra.mxu0 0
      %622 = vmatprep.subr.bf16.mxu0 0
      %623 = vmatpush1.bf16.msra.mxu0 0
      %624 = vmatprep.subr.bf16.mxu0 0
      %625 = vmatpush1.bf16.msra.mxu0 0
      %626 = vmatprep.subr.bf16.mxu0 0
      %627 = vmatpush1.bf16.msra.mxu0 0
      %628 = vmatprep.subr.bf16.mxu0 0
      %629 = vmatpush1.bf16.msra.mxu0 0
      %630 = vmatprep.subr.bf16.mxu0 0
      %631 = vmatpush1.bf16.msra.mxu0 0
      %632 = vmatprep.subr.bf16.mxu0 0
      %633 = vmatpush1.bf16.msra.mxu0 0
      %634 = vmatprep.subr.bf16.mxu0 0
      %635 = vmatpush1.bf16.msra.mxu0 0
      %636 = vmatprep.subr.bf16.mxu0 0
      %637 = vmatpush1.bf16.msra.mxu0 0
      %638 = vmatprep.mubr.bf16.mxu0 0
      %639 = vmatmul.mubr.bf16.gmra.mrb[0].mxu0 %v554
      %v640 = vpop.f32.mrb[0].mxu0
      %v641 = vadd.f32 0.0, %v640
      %v642 = vpop.f32.mrb[0].mxu0
      %v643 = vpop.f32.mrb[0].mxu0
      %v644 = vpop.f32.mrb[0].mxu0
      %645 = vdwg.mxu0
      %v646 = vadd.f32 %v493, %v600
      %v647 = vadd.f32 %v495, %v602
      %v648 = vadd.f32 %v534, %v641
      %s649 = scalar_lea.vmem %s2, 6
      %v650 = vld [vmem:[%s649] sm:$0x3]
      %651 = vrot.lane.b32.xlu0 %v316, 1
      %v652 = vpop.permute.xlu0 %651
      %653 = vrot.lane.b32.xlu0 %v317, 1
      %v654 = vpop.permute.xlu0 %653
      %655 = vrot.lane.b32.xlu0 %v318, 1
      %v656 = vpop.permute.xlu0 %655
      %657 = vrot.lane.b32.xlu0 %v319, 1
      %v658 = vpop.permute.xlu0 %657
      %vm659 = vcmask 7168
      %v660 = vsel %vm659, %v652, %v654
      %v661 = vsel %vm659, %v654, %v656
      %v662 = vsel %vm659, %v656, %v658
      %v664 = vsel %vm339, %v650, 0
      %v667 = vsel %vm343, %v660, 0
      %v670 = vsel %vm343, %v661, 0
      %v673 = vsel %vm343, %v662, 0
      %675 = vmatprep.subr.bf16.mxu0 %v670
      %676 = vmatpush1.bf16.msra.mxu0 %v667
      %677 = vmatprep.subr.bf16.mxu0 0
      %678 = vmatpush1.bf16.msra.mxu0 0
      %679 = vmatprep.subr.bf16.mxu0 0
      %680 = vmatpush1.bf16.msra.mxu0 0
      %681 = vmatprep.subr.bf16.mxu0 0
      %682 = vmatpush1.bf16.msra.mxu0 0
      %683 = vmatprep.subr.bf16.mxu0 0
      %684 = vmatpush1.bf16.msra.mxu0 0
      %685 = vmatprep.subr.bf16.mxu0 0
      %686 = vmatpush1.bf16.msra.mxu0 0
      %687 = vmatprep.subr.bf16.mxu0 0
      %688 = vmatpush1.bf16.msra.mxu0 0
      %689 = vmatprep.subr.bf16.mxu0 0
      %690 = vmatpush1.bf16.msra.mxu0 0
      %691 = vmatprep.subr.bf16.mxu0 0
      %692 = vmatpush1.bf16.msra.mxu0 0
      %693 = vmatprep.subr.bf16.mxu0 0
      %694 = vmatpush1.bf16.msra.mxu0 0
      %695 = vmatprep.subr.bf16.mxu0 0
      %696 = vmatpush1.bf16.msra.mxu0 0
      %697 = vmatprep.subr.bf16.mxu0 0
      %698 = vmatpush1.bf16.msra.mxu0 0
      %699 = vmatprep.subr.bf16.mxu0 0
      %700 = vmatpush1.bf16.msra.mxu0 0
      %701 = vmatprep.subr.bf16.mxu0 0
      %702 = vmatpush1.bf16.msra.mxu0 0
      %703 = vmatprep.subr.bf16.mxu0 0
      %704 = vmatpush1.bf16.msra.mxu0 0
      %705 = vmatprep.subr.bf16.mxu0 0
      %706 = vmatpush1.bf16.msra.mxu0 0
      %707 = vmatprep.mubr.bf16.mxu0 0
      %708 = vmatmul.mubr.bf16.gmra.mrb[0].mxu0 %v664
      %v709 = vpop.f32.mrb[0].mxu0
      %v710 = vadd.f32 0.0, %v709
      %v711 = vpop.f32.mrb[0].mxu0
      %v712 = vadd.f32 0.0, %v711
      %v713 = vpop.f32.mrb[0].mxu0
      %v714 = vpop.f32.mrb[0].mxu0
      %715 = vdwg.mxu0
      %716 = vmatprep.subr.bf16.mxu0 0
      %717 = vmatpush1.bf16.msra.mxu0 %v673
      %718 = vmatprep.subr.bf16.mxu0 0
      %719 = vmatpush1.bf16.msra.mxu0 0
      %720 = vmatprep.subr.bf16.mxu0 0
      %721 = vmatpush1.bf16.msra.mxu0 0
      %722 = vmatprep.subr.bf16.mxu0 0
      %723 = vmatpush1.bf16.msra.mxu0 0
      %724 = vmatprep.subr.bf16.mxu0 0
      %725 = vmatpush1.bf16.msra.mxu0 0
      %726 = vmatprep.subr.bf16.mxu0 0
      %727 = vmatpush1.bf16.msra.mxu0 0
      %728 = vmatprep.subr.bf16.mxu0 0
      %729 = vmatpush1.bf16.msra.mxu0 0
      %730 = vmatprep.subr.bf16.mxu0 0
      %731 = vmatpush1.bf16.msra.mxu0 0
      %732 = vmatprep.subr.bf16.mxu0 0
      %733 = vmatpush1.bf16.msra.mxu0 0
      %734 = vmatprep.subr.bf16.mxu0 0
      %735 = vmatpush1.bf16.msra.mxu0 0
      %736 = vmatprep.subr.bf16.mxu0 0
      %737 = vmatpush1.bf16.msra.mxu0 0
      %738 = vmatprep.subr.bf16.mxu0 0
      %739 = vmatpush1.bf16.msra.mxu0 0
      %740 = vmatprep.subr.bf16.mxu0 0
      %741 = vmatpush1.bf16.msra.mxu0 0
      %742 = vmatprep.subr.bf16.mxu0 0
      %743 = vmatpush1.bf16.msra.mxu0 0
      %744 = vmatprep.subr.bf16.mxu0 0
      %745 = vmatpush1.bf16.msra.mxu0 0
      %746 = vmatprep.subr.bf16.mxu0 0
      %747 = vmatpush1.bf16.msra.mxu0 0
      %748 = vmatprep.mubr.bf16.mxu0 0
      %749 = vmatmul.mubr.bf16.gmra.mrb[0].mxu0 %v664
      %v750 = vpop.f32.mrb[0].mxu0
      %v751 = vadd.f32 0.0, %v750
      %v752 = vpop.f32.mrb[0].mxu0
      %v753 = vpop.f32.mrb[0].mxu0
      %v754 = vpop.f32.mrb[0].mxu0
      %755 = vdwg.mxu0
      %v756 = vadd.f32 %v646, %v710
      %v757 = vadd.f32 %v647, %v712
      %v758 = vadd.f32 %v648, %v751
      %s759 = scalar_lea.vmem %s2, 8
      %v760 = vld [vmem:[%s759] sm:$0x3]
      %v762 = vsel %vm339, %v760, 0
      %v765 = vsel %vm343, %v317, 0
      %v768 = vsel %vm343, %v318, 0
      %v771 = vsel %vm343, %v319, 0
      %773 = vmatprep.subr.bf16.mxu0 %v768
      %774 = vmatpush1.bf16.msra.mxu0 %v765
      %775 = vmatprep.subr.bf16.mxu0 0
      %776 = vmatpush1.bf16.msra.mxu0 0
      %777 = vmatprep.subr.bf16.mxu0 0
      %778 = vmatpush1.bf16.msra.mxu0 0
      %779 = vmatprep.subr.bf16.mxu0 0
      %780 = vmatpush1.bf16.msra.mxu0 0
      %781 = vmatprep.subr.bf16.mxu0 0
      %782 = vmatpush1.bf16.msra.mxu0 0
      %783 = vmatprep.subr.bf16.mxu0 0
      %784 = vmatpush1.bf16.msra.mxu0 0
      %785 = vmatprep.subr.bf16.mxu0 0
      %786 = vmatpush1.bf16.msra.mxu0 0
      %787 = vmatprep.subr.bf16.mxu0 0
      %788 = vmatpush1.bf16.msra.mxu0 0
      %789 = vmatprep.subr.bf16.mxu0 0
      %790 = vmatpush1.bf16.msra.mxu0 0
      %791 = vmatprep.subr.bf16.mxu0 0
      %792 = vmatpush1.bf16.msra.mxu0 0
      %793 = vmatprep.subr.bf16.mxu0 0
      %794 = vmatpush1.bf16.msra.mxu0 0
      %795 = vmatprep.subr.bf16.mxu0 0
      %796 = vmatpush1.bf16.msra.mxu0 0
      %797 = vmatprep.subr.bf16.mxu0 0
      %798 = vmatpush1.bf16.msra.mxu0 0
      %799 = vmatprep.subr.bf16.mxu0 0
      %800 = vmatpush1.bf16.msra.mxu0 0
      %801 = vmatprep.subr.bf16.mxu0 0
      %802 = vmatpush1.bf16.msra.mxu0 0
      %803 = vmatprep.subr.bf16.mxu0 0
      %804 = vmatpush1.bf16.msra.mxu0 0
      %805 = vmatprep.mubr.bf16.mxu0 0
      %806 = vmatmul.mubr.bf16.gmra.mrb[0].mxu0 %v762
      %v807 = vpop.f32.mrb[0].mxu0
      %v808 = vadd.f32 0.0, %v807
      %v809 = vpop.f32.mrb[0].mxu0
      %v810 = vadd.f32 0.0, %v809
      %v811 = vpop.f32.mrb[0].mxu0
      %v812 = vpop.f32.mrb[0].mxu0
      %813 = vdwg.mxu0
      %814 = vmatprep.subr.bf16.mxu0 0
      %815 = vmatpush1.bf16.msra.mxu0 %v771
      %816 = vmatprep.subr.bf16.mxu0 0
      %817 = vmatpush1.bf16.msra.mxu0 0
      %818 = vmatprep.subr.bf16.mxu0 0
      %819 = vmatpush1.bf16.msra.mxu0 0
      %820 = vmatprep.subr.bf16.mxu0 0
      %821 = vmatpush1.bf16.msra.mxu0 0
      %822 = vmatprep.subr.bf16.mxu0 0
      %823 = vmatpush1.bf16.msra.mxu0 0
      %824 = vmatprep.subr.bf16.mxu0 0
      %825 = vmatpush1.bf16.msra.mxu0 0
      %826 = vmatprep.subr.bf16.mxu0 0
      %827 = vmatpush1.bf16.msra.mxu0 0
      %828 = vmatprep.subr.bf16.mxu0 0
      %829 = vmatpush1.bf16.msra.mxu0 0
      %830 = vmatprep.subr.bf16.mxu0 0
      %831 = vmatpush1.bf16.msra.mxu0 0
      %832 = vmatprep.subr.bf16.mxu0 0
      %833 = vmatpush1.bf16.msra.mxu0 0
      %834 = vmatprep.subr.bf16.mxu0 0
      %835 = vmatpush1.bf16.msra.mxu0 0
      %836 = vmatprep.subr.bf16.mxu0 0
      %837 = vmatpush1.bf16.msra.mxu0 0
      %838 = vmatprep.subr.bf16.mxu0 0
      %839 = vmatpush1.bf16.msra.mxu0 0
      %840 = vmatprep.subr.bf16.mxu0 0
      %841 = vmatpush1.bf16.msra.mxu0 0
      %842 = vmatprep.subr.bf16.mxu0 0
      %843 = vmatpush1.bf16.msra.mxu0 0
      %844 = vmatprep.subr.bf16.mxu0 0
      %845 = vmatpush1.bf16.msra.mxu0 0
      %846 = vmatprep.mubr.bf16.mxu0 0
      %847 = vmatmul.mubr.bf16.gmra.mrb[0].mxu0 %v762
      %v848 = vpop.f32.mrb[0].mxu0
      %v849 = vadd.f32 0.0, %v848
      %v850 = vpop.f32.mrb[0].mxu0
      %v851 = vpop.f32.mrb[0].mxu0
      %v852 = vpop.f32.mrb[0].mxu0
      %853 = vdwg.mxu0
      %v854 = vadd.f32 %v756, %v808
      %v855 = vadd.f32 %v757, %v810
      %v856 = vadd.f32 %v758, %v849
      %v857 = vld [vmem:[%s300 + $0x8] sm:$0xff]
      %v858 = vld [vmem:[%s300 + $0x10] sm:$0xff]
      %v859 = vld [vmem:[%s300 + $0x18] sm:$0xff]
      %v860 = vld [vmem:[%s300 + $0x20] sm:$0xff]
      %v861 = vpack.c.bf16 %v857, %v857
      %v862 = vpack.c.bf16 %v858, %v858
      %v863 = vpack.c.bf16 %v859, %v859
      %v864 = vpack.c.bf16 %v860, %v860
      %s865 = scalar_lea.vmem %s2, 10
      %v866 = vld [vmem:[%s865] sm:$0x3]
      %871 = vrot.lane.b32.xlu0 %v861, 127
      %v872 = vpop.permute.xlu0 %871
      %873 = vrot.lane.b32.xlu0 %v862, 127
      %v874 = vpop.permute.xlu0 %873
      %875 = vrot.lane.b32.xlu0 %v863, 127
      %v876 = vpop.permute.xlu0 %875
      %877 = vrot.lane.b32.xlu0 %v864, 127
      %v878 = vpop.permute.xlu0 %877
      %vm879 = vcmask 1039360
      %v880 = vsel %vm879, %v872, %v874
      %v881 = vsel %vm879, %v874, %v876
      %v882 = vsel %vm879, %v876, %v878
      %v884 = vsel %vm339, %v866, 0
      %v887 = vsel %vm343, %v880, 0
      %v890 = vsel %vm343, %v881, 0
      %v893 = vsel %vm343, %v882, 0
      %895 = vmatprep.subr.bf16.mxu0 %v890
      %896 = vmatpush1.bf16.msra.mxu0 %v887
      %897 = vmatprep.subr.bf16.mxu0 0
      %898 = vmatpush1.bf16.msra.mxu0 0
      %899 = vmatprep.subr.bf16.mxu0 0
      %900 = vmatpush1.bf16.msra.mxu0 0
      %901 = vmatprep.subr.bf16.mxu0 0
      %902 = vmatpush1.bf16.msra.mxu0 0
      %903 = vmatprep.subr.bf16.mxu0 0
      %904 = vmatpush1.bf16.msra.mxu0 0
      %905 = vmatprep.subr.bf16.mxu0 0
      %906 = vmatpush1.bf16.msra.mxu0 0
      %907 = vmatprep.subr.bf16.mxu0 0
      %908 = vmatpush1.bf16.msra.mxu0 0
      %909 = vmatprep.subr.bf16.mxu0 0
      %910 = vmatpush1.bf16.msra.mxu0 0
      %911 = vmatprep.subr.bf16.mxu0 0
      %912 = vmatpush1.bf16.msra.mxu0 0
      %913 = vmatprep.subr.bf16.mxu0 0
      %914 = vmatpush1.bf16.msra.mxu0 0
      %915 = vmatprep.subr.bf16.mxu0 0
      %916 = vmatpush1.bf16.msra.mxu0 0
      %917 = vmatprep.subr.bf16.mxu0 0
      %918 = vmatpush1.bf16.msra.mxu0 0
      %919 = vmatprep.subr.bf16.mxu0 0
      %920 = vmatpush1.bf16.msra.mxu0 0
      %921 = vmatprep.subr.bf16.mxu0 0
      %922 = vmatpush1.bf16.msra.mxu0 0
      %923 = vmatprep.subr.bf16.mxu0 0
      %924 = vmatpush1.bf16.msra.mxu0 0
      %925 = vmatprep.subr.bf16.mxu0 0
      %926 = vmatpush1.bf16.msra.mxu0 0
      %927 = vmatprep.mubr.bf16.mxu0 0
      %928 = vmatmul.mubr.bf16.gmra.mrb[0].mxu0 %v884
      %v929 = vpop.f32.mrb[0].mxu0
      %v930 = vadd.f32 0.0, %v929
      %v931 = vpop.f32.mrb[0].mxu0
      %v932 = vadd.f32 0.0, %v931
      %v933 = vpop.f32.mrb[0].mxu0
      %v934 = vpop.f32.mrb[0].mxu0
      %935 = vdwg.mxu0
      %936 = vmatprep.subr.bf16.mxu0 0
      %937 = vmatpush1.bf16.msra.mxu0 %v893
      %938 = vmatprep.subr.bf16.mxu0 0
      %939 = vmatpush1.bf16.msra.mxu0 0
      %940 = vmatprep.subr.bf16.mxu0 0
      %941 = vmatpush1.bf16.msra.mxu0 0
      %942 = vmatprep.subr.bf16.mxu0 0
      %943 = vmatpush1.bf16.msra.mxu0 0
      %944 = vmatprep.subr.bf16.mxu0 0
      %945 = vmatpush1.bf16.msra.mxu0 0
      %946 = vmatprep.subr.bf16.mxu0 0
      %947 = vmatpush1.bf16.msra.mxu0 0
      %948 = vmatprep.subr.bf16.mxu0 0
      %949 = vmatpush1.bf16.msra.mxu0 0
      %950 = vmatprep.subr.bf16.mxu0 0
      %951 = vmatpush1.bf16.msra.mxu0 0
      %952 = vmatprep.subr.bf16.mxu0 0
      %953 = vmatpush1.bf16.msra.mxu0 0
      %954 = vmatprep.subr.bf16.mxu0 0
      %955 = vmatpush1.bf16.msra.mxu0 0
      %956 = vmatprep.subr.bf16.mxu0 0
      %957 = vmatpush1.bf16.msra.mxu0 0
      %958 = vmatprep.subr.bf16.mxu0 0
      %959 = vmatpush1.bf16.msra.mxu0 0
      %960 = vmatprep.subr.bf16.mxu0 0
      %961 = vmatpush1.bf16.msra.mxu0 0
      %962 = vmatprep.subr.bf16.mxu0 0
      %963 = vmatpush1.bf16.msra.mxu0 0
      %964 = vmatprep.subr.bf16.mxu0 0
      %965 = vmatpush1.bf16.msra.mxu0 0
      %966 = vmatprep.subr.bf16.mxu0 0
      %967 = vmatpush1.bf16.msra.mxu0 0
      %968 = vmatprep.mubr.bf16.mxu0 0
      %969 = vmatmul.mubr.bf16.gmra.mrb[0].mxu0 %v884
      %v970 = vpop.f32.mrb[0].mxu0
      %v971 = vadd.f32 0.0, %v970
      %v972 = vpop.f32.mrb[0].mxu0
      %v973 = vpop.f32.mrb[0].mxu0
      %v974 = vpop.f32.mrb[0].mxu0
      %975 = vdwg.mxu0
      %v976 = vadd.f32 %v854, %v930
      %v977 = vadd.f32 %v855, %v932
      %v978 = vadd.f32 %v856, %v971
      %s979 = scalar_lea.vmem %s2, 12
      %v980 = vld [vmem:[%s979] sm:$0x3]
      %981 = vrot.lane.b32.xlu0 %v861, 110
      %v982 = vpop.permute.xlu0 %981
      %983 = vrot.lane.b32.xlu0 %v862, 110
      %v984 = vpop.permute.xlu0 %983
      %985 = vrot.lane.b32.xlu0 %v863, 110
      %v986 = vpop.permute.xlu0 %985
      %987 = vrot.lane.b32.xlu0 %v864, 110
      %v988 = vpop.permute.xlu0 %987
      %vm989 = vcmask 900096
      %v990 = vsel %vm989, %v982, %v984
      %v991 = vsel %vm989, %v984, %v986
      %v992 = vsel %vm989, %v986, %v988
      %v994 = vsel %vm339, %v980, 0
      %v997 = vsel %vm343, %v990, 0
      %v1000 = vsel %vm343, %v991, 0
      %v1003 = vsel %vm343, %v992, 0
      %1005 = vmatprep.subr.bf16.mxu0 %v1000
      %1006 = vmatpush1.bf16.msra.mxu0 %v997
      %1007 = vmatprep.subr.bf16.mxu0 0
      %1008 = vmatpush1.bf16.msra.mxu0 0
      %1009 = vmatprep.subr.bf16.mxu0 0
      %1010 = vmatpush1.bf16.msra.mxu0 0
      %1011 = vmatprep.subr.bf16.mxu0 0
      %1012 = vmatpush1.bf16.msra.mxu0 0
      %1013 = vmatprep.subr.bf16.mxu0 0
      %1014 = vmatpush1.bf16.msra.mxu0 0
      %1015 = vmatprep.subr.bf16.mxu0 0
      %1016 = vmatpush1.bf16.msra.mxu0 0
      %1017 = vmatprep.subr.bf16.mxu0 0
      %1018 = vmatpush1.bf16.msra.mxu0 0
      %1019 = vmatprep.subr.bf16.mxu0 0
      %1020 = vmatpush1.bf16.msra.mxu0 0
      %1021 = vmatprep.subr.bf16.mxu0 0
      %1022 = vmatpush1.bf16.msra.mxu0 0
      %1023 = vmatprep.subr.bf16.mxu0 0
      %1024 = vmatpush1.bf16.msra.mxu0 0
      %1025 = vmatprep.subr.bf16.mxu0 0
      %1026 = vmatpush1.bf16.msra.mxu0 0
      %1027 = vmatprep.subr.bf16.mxu0 0
      %1028 = vmatpush1.bf16.msra.mxu0 0
      %1029 = vmatprep.subr.bf16.mxu0 0
      %1030 = vmatpush1.bf16.msra.mxu0 0
      %1031 = vmatprep.subr.bf16.mxu0 0
      %1032 = vmatpush1.bf16.msra.mxu0 0
      %1033 = vmatprep.subr.bf16.mxu0 0
      %1034 = vmatpush1.bf16.msra.mxu0 0
      %1035 = vmatprep.subr.bf16.mxu0 0
      %1036 = vmatpush1.bf16.msra.mxu0 0
      %1037 = vmatprep.mubr.bf16.mxu0 0
      %1038 = vmatmul.mubr.bf16.gmra.mrb[0].mxu0 %v994
      %v1039 = vpop.f32.mrb[0].mxu0
      %v1040 = vadd.f32 0.0, %v1039
      %v1041 = vpop.f32.mrb[0].mxu0
      %v1042 = vadd.f32 0.0, %v1041
      %v1043 = vpop.f32.mrb[0].mxu0
      %v1044 = vpop.f32.mrb[0].mxu0
      %1045 = vdwg.mxu0
      %1046 = vmatprep.subr.bf16.mxu0 0
      %1047 = vmatpush1.bf16.msra.mxu0 %v1003
      %1048 = vmatprep.subr.bf16.mxu0 0
      %1049 = vmatpush1.bf16.msra.mxu0 0
      %1050 = vmatprep.subr.bf16.mxu0 0
      %1051 = vmatpush1.bf16.msra.mxu0 0
      %1052 = vmatprep.subr.bf16.mxu0 0
      %1053 = vmatpush1.bf16.msra.mxu0 0
      %1054 = vmatprep.subr.bf16.mxu0 0
      %1055 = vmatpush1.bf16.msra.mxu0 0
      %1056 = vmatprep.subr.bf16.mxu0 0
      %1057 = vmatpush1.bf16.msra.mxu0 0
      %1058 = vmatprep.subr.bf16.mxu0 0
      %1059 = vmatpush1.bf16.msra.mxu0 0
      %1060 = vmatprep.subr.bf16.mxu0 0
      %1061 = vmatpush1.bf16.msra.mxu0 0
      %1062 = vmatprep.subr.bf16.mxu0 0
      %1063 = vmatpush1.bf16.msra.mxu0 0
      %1064 = vmatprep.subr.bf16.mxu0 0
      %1065 = vmatpush1.bf16.msra.mxu0 0
      %1066 = vmatprep.subr.bf16.mxu0 0
      %1067 = vmatpush1.bf16.msra.mxu0 0
      %1068 = vmatprep.subr.bf16.mxu0 0
      %1069 = vmatpush1.bf16.msra.mxu0 0
      %1070 = vmatprep.subr.bf16.mxu0 0
      %1071 = vmatpush1.bf16.msra.mxu0 0
      %1072 = vmatprep.subr.bf16.mxu0 0
      %1073 = vmatpush1.bf16.msra.mxu0 0
      %1074 = vmatprep.subr.bf16.mxu0 0
      %1075 = vmatpush1.bf16.msra.mxu0 0
      %1076 = vmatprep.subr.bf16.mxu0 0
      %1077 = vmatpush1.bf16.msra.mxu0 0
      %1078 = vmatprep.mubr.bf16.mxu0 0
      %1079 = vmatmul.mubr.bf16.gmra.mrb[0].mxu0 %v994
      %v1080 = vpop.f32.mrb[0].mxu0
      %v1081 = vadd.f32 0.0, %v1080
      %v1082 = vpop.f32.mrb[0].mxu0
      %v1083 = vpop.f32.mrb[0].mxu0
      %v1084 = vpop.f32.mrb[0].mxu0
      %1085 = vdwg.mxu0
      %v1086 = vadd.f32 %v976, %v1040
      %v1087 = vadd.f32 %v977, %v1042
      %v1088 = vadd.f32 %v978, %v1081
      %s1089 = scalar_lea.vmem %s2, 14
      %v1090 = vld [vmem:[%s1089] sm:$0x3]
      %1091 = vrot.lane.b32.xlu0 %v861, 109
      %v1092 = vpop.permute.xlu0 %1091
      %1093 = vrot.lane.b32.xlu0 %v862, 109
      %v1094 = vpop.permute.xlu0 %1093
      %1095 = vrot.lane.b32.xlu0 %v863, 109
      %v1096 = vpop.permute.xlu0 %1095
      %1097 = vrot.lane.b32.xlu0 %v864, 109
      %v1098 = vpop.permute.xlu0 %1097
      %vm1099 = vcmask 891904
      %v1100 = vsel %vm1099, %v1092, %v1094
      %v1101 = vsel %vm1099, %v1094, %v1096
      %v1102 = vsel %vm1099, %v1096, %v1098
      %v1104 = vsel %vm339, %v1090, 0
      %v1107 = vsel %vm343, %v1100, 0
      %v1110 = vsel %vm343, %v1101, 0
      %v1113 = vsel %vm343, %v1102, 0
      %1115 = vmatprep.subr.bf16.mxu0 %v1110
      %1116 = vmatpush1.bf16.msra.mxu0 %v1107
      %1117 = vmatprep.subr.bf16.mxu0 0
      %1118 = vmatpush1.bf16.msra.mxu0 0
      %1119 = vmatprep.subr.bf16.mxu0 0
      %1120 = vmatpush1.bf16.msra.mxu0 0
      %1121 = vmatprep.subr.bf16.mxu0 0
      %1122 = vmatpush1.bf16.msra.mxu0 0
      %1123 = vmatprep.subr.bf16.mxu0 0
      %1124 = vmatpush1.bf16.msra.mxu0 0
      %1125 = vmatprep.subr.bf16.mxu0 0
      %1126 = vmatpush1.bf16.msra.mxu0 0
      %1127 = vmatprep.subr.bf16.mxu0 0
      %1128 = vmatpush1.bf16.msra.mxu0 0
      %1129 = vmatprep.subr.bf16.mxu0 0
      %1130 = vmatpush1.bf16.msra.mxu0 0
      %1131 = vmatprep.subr.bf16.mxu0 0
      %1132 = vmatpush1.bf16.msra.mxu0 0
      %1133 = vmatprep.subr.bf16.mxu0 0
      %1134 = vmatpush1.bf16.msra.mxu0 0
      %1135 = vmatprep.subr.bf16.mxu0 0
      %1136 = vmatpush1.bf16.msra.mxu0 0
      %1137 = vmatprep.subr.bf16.mxu0 0
      %1138 = vmatpush1.bf16.msra.mxu0 0
      %1139 = vmatprep.subr.bf16.mxu0 0
      %1140 = vmatpush1.bf16.msra.mxu0 0
      %1141 = vmatprep.subr.bf16.mxu0 0
      %1142 = vmatpush1.bf16.msra.mxu0 0
      %1143 = vmatprep.subr.bf16.mxu0 0
      %1144 = vmatpush1.bf16.msra.mxu0 0
      %1145 = vmatprep.subr.bf16.mxu0 0
      %1146 = vmatpush1.bf16.msra.mxu0 0
      %1147 = vmatprep.mubr.bf16.mxu0 0
      %1148 = vmatmul.mubr.bf16.gmra.mrb[0].mxu0 %v1104
      %v1149 = vpop.f32.mrb[0].mxu0
      %v1150 = vadd.f32 0.0, %v1149
      %v1151 = vpop.f32.mrb[0].mxu0
      %v1152 = vadd.f32 0.0, %v1151
      %v1153 = vpop.f32.mrb[0].mxu0
      %v1154 = vpop.f32.mrb[0].mxu0
      %1155 = vdwg.mxu0
      %1156 = vmatprep.subr.bf16.mxu0 0
      %1157 = vmatpush1.bf16.msra.mxu0 %v1113
      %1158 = vmatprep.subr.bf16.mxu0 0
      %1159 = vmatpush1.bf16.msra.mxu0 0
      %1160 = vmatprep.subr.bf16.mxu0 0
      %1161 = vmatpush1.bf16.msra.mxu0 0
      %1162 = vmatprep.subr.bf16.mxu0 0
      %1163 = vmatpush1.bf16.msra.mxu0 0
      %1164 = vmatprep.subr.bf16.mxu0 0
      %1165 = vmatpush1.bf16.msra.mxu0 0
      %1166 = vmatprep.subr.bf16.mxu0 0
      %1167 = vmatpush1.bf16.msra.mxu0 0
      %1168 = vmatprep.subr.bf16.mxu0 0
      %1169 = vmatpush1.bf16.msra.mxu0 0
      %1170 = vmatprep.subr.bf16.mxu0 0
      %1171 = vmatpush1.bf16.msra.mxu0 0
      %1172 = vmatprep.subr.bf16.mxu0 0
      %1173 = vmatpush1.bf16.msra.mxu0 0
      %1174 = vmatprep.subr.bf16.mxu0 0
      %1175 = vmatpush1.bf16.msra.mxu0 0
      %1176 = vmatprep.subr.bf16.mxu0 0
      %1177 = vmatpush1.bf16.msra.mxu0 0
      %1178 = vmatprep.subr.bf16.mxu0 0
      %1179 = vmatpush1.bf16.msra.mxu0 0
      %1180 = vmatprep.subr.bf16.mxu0 0
      %1181 = vmatpush1.bf16.msra.mxu0 0
      %1182 = vmatprep.subr.bf16.mxu0 0
      %1183 = vmatpush1.bf16.msra.mxu0 0
      %1184 = vmatprep.subr.bf16.mxu0 0
      %1185 = vmatpush1.bf16.msra.mxu0 0
      %1186 = vmatprep.subr.bf16.mxu0 0
      %1187 = vmatpush1.bf16.msra.mxu0 0
      %1188 = vmatprep.mubr.bf16.mxu0 0
      %1189 = vmatmul.mubr.bf16.gmra.mrb[0].mxu0 %v1104
      %v1190 = vpop.f32.mrb[0].mxu0
      %v1191 = vadd.f32 0.0, %v1190
      %v1192 = vpop.f32.mrb[0].mxu0
      %v1193 = vpop.f32.mrb[0].mxu0
      %v1194 = vpop.f32.mrb[0].mxu0
      %1195 = vdwg.mxu0
      %v1196 = vadd.f32 %v1086, %v1150
      %v1197 = vadd.f32 %v1087, %v1152
      %v1198 = vadd.f32 %v1088, %v1191
      %s1199 = scalar_lea.vmem %s2, 16
      %v1200 = vld [vmem:[%s1199] sm:$0x3]
      %1201 = vrot.lane.b32.xlu0 %v861, 108
      %v1202 = vpop.permute.xlu0 %1201
      %1203 = vrot.lane.b32.xlu0 %v862, 108
      %v1204 = vpop.permute.xlu0 %1203
      %1205 = vrot.lane.b32.xlu0 %v863, 108
      %v1206 = vpop.permute.xlu0 %1205
      %1207 = vrot.lane.b32.xlu0 %v864, 108
      %v1208 = vpop.permute.xlu0 %1207
      %vm1209 = vcmask 883712
      %v1210 = vsel %vm1209, %v1202, %v1204
      %v1211 = vsel %vm1209, %v1204, %v1206
      %v1212 = vsel %vm1209, %v1206, %v1208
      %v1214 = vsel %vm339, %v1200, 0
      %v1217 = vsel %vm343, %v1210, 0
      %v1220 = vsel %vm343, %v1211, 0
      %v1223 = vsel %vm343, %v1212, 0
      %1225 = vmatprep.subr.bf16.mxu0 %v1220
      %1226 = vmatpush1.bf16.msra.mxu0 %v1217
      %1227 = vmatprep.subr.bf16.mxu0 0
      %1228 = vmatpush1.bf16.msra.mxu0 0
      %1229 = vmatprep.subr.bf16.mxu0 0
      %1230 = vmatpush1.bf16.msra.mxu0 0
      %1231 = vmatprep.subr.bf16.mxu0 0
      %1232 = vmatpush1.bf16.msra.mxu0 0
      %1233 = vmatprep.subr.bf16.mxu0 0
      %1234 = vmatpush1.bf16.msra.mxu0 0
      %1235 = vmatprep.subr.bf16.mxu0 0
      %1236 = vmatpush1.bf16.msra.mxu0 0
      %1237 = vmatprep.subr.bf16.mxu0 0
      %1238 = vmatpush1.bf16.msra.mxu0 0
      %1239 = vmatprep.subr.bf16.mxu0 0
      %1240 = vmatpush1.bf16.msra.mxu0 0
      %1241 = vmatprep.subr.bf16.mxu0 0
      %1242 = vmatpush1.bf16.msra.mxu0 0
      %1243 = vmatprep.subr.bf16.mxu0 0
      %1244 = vmatpush1.bf16.msra.mxu0 0
      %1245 = vmatprep.subr.bf16.mxu0 0
      %1246 = vmatpush1.bf16.msra.mxu0 0
      %1247 = vmatprep.subr.bf16.mxu0 0
      %1248 = vmatpush1.bf16.msra.mxu0 0
      %1249 = vmatprep.subr.bf16.mxu0 0
      %1250 = vmatpush1.bf16.msra.mxu0 0
      %1251 = vmatprep.subr.bf16.mxu0 0
      %1252 = vmatpush1.bf16.msra.mxu0 0
      %1253 = vmatprep.subr.bf16.mxu0 0
      %1254 = vmatpush1.bf16.msra.mxu0 0
      %1255 = vmatprep.subr.bf16.mxu0 0
      %1256 = vmatpush1.bf16.msra.mxu0 0
      %1257 = vmatprep.mubr.bf16.mxu0 0
      %1258 = vmatmul.mubr.bf16.gmra.mrb[0].mxu0 %v1214
      %v1259 = vpop.f32.mrb[0].mxu0
      %v1260 = vadd.f32 0.0, %v1259
      %v1261 = vpop.f32.mrb[0].mxu0
      %v1262 = vadd.f32 0.0, %v1261
      %v1263 = vpop.f32.mrb[0].mxu0
      %v1264 = vpop.f32.mrb[0].mxu0
      %1265 = vdwg.mxu0
      %1266 = vmatprep.subr.bf16.mxu0 0
      %1267 = vmatpush1.bf16.msra.mxu0 %v1223
      %1268 = vmatprep.subr.bf16.mxu0 0
      %1269 = vmatpush1.bf16.msra.mxu0 0
      %1270 = vmatprep.subr.bf16.mxu0 0
      %1271 = vmatpush1.bf16.msra.mxu0 0
      %1272 = vmatprep.subr.bf16.mxu0 0
      %1273 = vmatpush1.bf16.msra.mxu0 0
      %1274 = vmatprep.subr.bf16.mxu0 0
      %1275 = vmatpush1.bf16.msra.mxu0 0
      %1276 = vmatprep.subr.bf16.mxu0 0
      %1277 = vmatpush1.bf16.msra.mxu0 0
      %1278 = vmatprep.subr.bf16.mxu0 0
      %1279 = vmatpush1.bf16.msra.mxu0 0
      %1280 = vmatprep.subr.bf16.mxu0 0
      %1281 = vmatpush1.bf16.msra.mxu0 0
      %1282 = vmatprep.subr.bf16.mxu0 0
      %1283 = vmatpush1.bf16.msra.mxu0 0
      %1284 = vmatprep.subr.bf16.mxu0 0
      %1285 = vmatpush1.bf16.msra.mxu0 0
      %1286 = vmatprep.subr.bf16.mxu0 0
      %1287 = vmatpush1.bf16.msra.mxu0 0
      %1288 = vmatprep.subr.bf16.mxu0 0
      %1289 = vmatpush1.bf16.msra.mxu0 0
      %1290 = vmatprep.subr.bf16.mxu0 0
      %1291 = vmatpush1.bf16.msra.mxu0 0
      %1292 = vmatprep.subr.bf16.mxu0 0
      %1293 = vmatpush1.bf16.msra.mxu0 0
      %1294 = vmatprep.subr.bf16.mxu0 0
      %1295 = vmatpush1.bf16.msra.mxu0 0
      %1296 = vmatprep.subr.bf16.mxu0 0
      %1297 = vmatpush1.bf16.msra.mxu0 0
      %1298 = vmatprep.mubr.bf16.mxu0 0
      %1299 = vmatmul.mubr.bf16.gmra.mrb[0].mxu0 %v1214
      %v1300 = vpop.f32.mrb[0].mxu0
      %v1301 = vadd.f32 0.0, %v1300
      %v1302 = vpop.f32.mrb[0].mxu0
      %v1303 = vpop.f32.mrb[0].mxu0
      %v1304 = vpop.f32.mrb[0].mxu0
      %1305 = vdwg.mxu0
      %v1306 = vadd.f32 %v1196, %v1260
      %v1307 = vadd.f32 %v1197, %v1262
      %v1308 = vadd.f32 %v1198, %v1301
      %v1309 = vld [vmem:[%s3] sm:$0xf]
      %1311 = vset.pattern.permute.xlu0 0
      %1312 = vperm.xlu0 %1311, %v1309
      %v1313 = vpop.permute.xlu0 %1312
      %v1315 = vadd.f32 %v1306, %v1313
      %v1316 = vadd.f32 %v1307, %v1313
      %v1317 = vadd.f32 %v1308, %v1313
      %v1318 = vmax.f32 %v1315, 0.0
      %v1319 = vmax.f32 %v1316, 0.0
      %v1320 = vmax.f32 %v1317, 0.0
      %v1322 = vlaneseq
      %v1323 = vshrl.u32 %v1322, 7
      %v1324 = vsub.s32 0, %v1323
      %v1325 = vrot.slane %v307, %v1324
      %v1326 = vlaneseq
      %v1327 = vshrl.u32 %v1326, 7
      %v1328 = vsub.s32 1, %v1327
      %v1329 = vrot.slane %v307, %v1328
      %v1330 = vlaneseq
      %v1331 = vshrl.u32 %v1330, 7
      %v1332 = vsub.s32 2, %v1331
      %v1333 = vrot.slane %v307, %v1332
      %v1337 = vmul.f32 %v1318, %v1325
      %v1338 = vmul.f32 %v1319, %v1329
      %v1339 = vmul.f32 %v1320, %v1333
      %v1340 = vpack.c.bf16 %v1337, %v1337
      %v1341 = vpack.c.bf16 %v1338, %v1338
      %v1342 = vpack.c.bf16 %v1339, %v1339
      %v1346 = vcombine.low %v1340, %v1341
      %v1348 = vunpack.c.l.s4 1983009808
      %v1349 = vunpack.c.0.s8 %v1348
      %v1350 = vlaneseq
      %v1351 = vshrl.u32 %v1350, 7
      %v1352 = vsub.s32 %v1349, %v1351
      %v1353 = vrot.slane %v1346, %v1352
      %v1355 = vunpack.c.l.s4 1983009808
      %v1356 = vunpack.c.0.s8 %v1355
      %v1357 = vlaneseq
      %v1358 = vshrl.u32 %v1357, 7
      %v1359 = vsub.s32 %v1356, %v1358
      %v1360 = vrot.slane %v1342, %v1359
      %v1361 = vcombine.low %v1353, %v1360
      %1363 = vst [vmem:[#allocation2 + $0x2] sm:$0x3f] %v1361
      %v1364 = vld [vmem:[#allocation2] sm:$0xff]
      %v1365 = vld [vmem:[%s4] sm:$0x3]
      %s1366 = scalar_lea.vmem %s4, 2
      %v1367 = vld [vmem:[%s1366] sm:$0x3]
      %v1369 = vcombine.high %v1364, %v1364
      %v1371 = vunpack.c.l.s4 1983009808
      %v1372 = vunpack.c.0.s8 %v1371
      %v1373 = vlaneseq
      %v1374 = vshrl.u32 %v1373, 7
      %v1375 = vsub.s32 %v1372, %v1374
      %v1376 = vrot.slane %v1364, %v1375
      %v1378 = vunpack.c.l.s4 1983009808
      %v1379 = vunpack.c.0.s8 %v1378
      %v1380 = vlaneseq
      %v1381 = vshrl.u32 %v1380, 7
      %v1382 = vsub.s32 %v1379, %v1381
      %v1383 = vrot.slane %v1369, %v1382
      %v1384 = vcombine.high %v1376, %v1376
      %v1385 = vcombine.high %v1383, %v1383
      %1386 = vrot.lane.b32.xlu0 %v1376, 19
      %v1387 = vpop.permute.xlu0 %1386
      %1388 = vrot.lane.b32.xlu0 %v1384, 19
      %v1389 = vpop.permute.xlu0 %1388
      %1390 = vrot.lane.b32.xlu0 %v1383, 19
      %v1391 = vpop.permute.xlu0 %1390
      %1392 = vrot.lane.b32.xlu0 %v1385, 19
      %v1393 = vpop.permute.xlu0 %1392
      %v1394 = vsel %vm335, %v1387, %v1389
      %v1395 = vsel %vm335, %v1389, %v1391
      %v1396 = vsel %vm335, %v1391, %v1393
      %vm1397 = vcmask 31744
      %v1399 = vsel %vm1397, %v1367, 0
      %vm1401 = vcmask 1041408
      %v1403 = vsel %vm1401, %v1394, 0
      %v1406 = vsel %vm1401, %v1395, 0
      %v1409 = vsel %vm1401, %v1396, 0
      %1411 = vmatprep.subr.bf16.mxu0 %v1406
      %1412 = vmatpush1.bf16.msra.mxu0 %v1403
      %1413 = vmatprep.subr.bf16.mxu0 0
      %1414 = vmatpush1.bf16.msra.mxu0 0
      %1415 = vmatprep.subr.bf16.mxu0 0
      %1416 = vmatpush1.bf16.msra.mxu0 0
      %1417 = vmatprep.subr.bf16.mxu0 0
      %1418 = vmatpush1.bf16.msra.mxu0 0
      %1419 = vmatprep.subr.bf16.mxu0 0
      %1420 = vmatpush1.bf16.msra.mxu0 0
      %1421 = vmatprep.subr.bf16.mxu0 0
      %1422 = vmatpush1.bf16.msra.mxu0 0
      %1423 = vmatprep.subr.bf16.mxu0 0
      %1424 = vmatpush1.bf16.msra.mxu0 0
      %1425 = vmatprep.subr.bf16.mxu0 0
      %1426 = vmatpush1.bf16.msra.mxu0 0
      %1427 = vmatprep.subr.bf16.mxu0 0
      %1428 = vmatpush1.bf16.msra.mxu0 0
      %1429 = vmatprep.subr.bf16.mxu0 0
      %1430 = vmatpush1.bf16.msra.mxu0 0
      %1431 = vmatprep.subr.bf16.mxu0 0
      %1432 = vmatpush1.bf16.msra.mxu0 0
      %1433 = vmatprep.subr.bf16.mxu0 0
      %1434 = vmatpush1.bf16.msra.mxu0 0
      %1435 = vmatprep.subr.bf16.mxu0 0
      %1436 = vmatpush1.bf16.msra.mxu0 0
      %1437 = vmatprep.subr.bf16.mxu0 0
      %1438 = vmatpush1.bf16.msra.mxu0 0
      %1439 = vmatprep.subr.bf16.mxu0 0
      %1440 = vmatpush1.bf16.msra.mxu0 0
      %1441 = vmatprep.subr.bf16.mxu0 0
      %1442 = vmatpush1.bf16.msra.mxu0 0
      %1443 = vmatprep.mubr.bf16.mxu0 0
      %1444 = vmatmul.mubr.bf16.gmra.mrb[0].mxu0 %v1399
      %v1445 = vpop.f32.mrb[0].mxu0
      %v1446 = vadd.f32 0.0, %v1445
      %v1447 = vpop.f32.mrb[0].mxu0
      %v1448 = vadd.f32 0.0, %v1447
      %v1449 = vpop.f32.mrb[0].mxu0
      %v1450 = vpop.f32.mrb[0].mxu0
      %1451 = vdwg.mxu0
      %1452 = vmatprep.subr.bf16.mxu0 0
      %1453 = vmatpush1.bf16.msra.mxu0 %v1409
      %1454 = vmatprep.subr.bf16.mxu0 0
      %1455 = vmatpush1.bf16.msra.mxu0 0
      %1456 = vmatprep.subr.bf16.mxu0 0
      %1457 = vmatpush1.bf16.msra.mxu0 0
      %1458 = vmatprep.subr.bf16.mxu0 0
      %1459 = vmatpush1.bf16.msra.mxu0 0
      %1460 = vmatprep.subr.bf16.mxu0 0
      %1461 = vmatpush1.bf16.msra.mxu0 0
      %1462 = vmatprep.subr.bf16.mxu0 0
      %1463 = vmatpush1.bf16.msra.mxu0 0
      %1464 = vmatprep.subr.bf16.mxu0 0
      %1465 = vmatpush1.bf16.msra.mxu0 0
      %1466 = vmatprep.subr.bf16.mxu0 0
      %1467 = vmatpush1.bf16.msra.mxu0 0
      %1468 = vmatprep.subr.bf16.mxu0 0
      %1469 = vmatpush1.bf16.msra.mxu0 0
      %1470 = vmatprep.subr.bf16.mxu0 0
      %1471 = vmatpush1.bf16.msra.mxu0 0
      %1472 = vmatprep.subr.bf16.mxu0 0
      %1473 = vmatpush1.bf16.msra.mxu0 0
      %1474 = vmatprep.subr.bf16.mxu0 0
      %1475 = vmatpush1.bf16.msra.mxu0 0
      %1476 = vmatprep.subr.bf16.mxu0 0
      %1477 = vmatpush1.bf16.msra.mxu0 0
      %1478 = vmatprep.subr.bf16.mxu0 0
      %1479 = vmatpush1.bf16.msra.mxu0 0
      %1480 = vmatprep.subr.bf16.mxu0 0
      %1481 = vmatpush1.bf16.msra.mxu0 0
      %1482 = vmatprep.subr.bf16.mxu0 0
      %1483 = vmatpush1.bf16.msra.mxu0 0
      %1484 = vmatprep.mubr.bf16.mxu0 0
      %1485 = vmatmul.mubr.bf16.gmra.mrb[0].mxu0 %v1399
      %v1486 = vpop.f32.mrb[0].mxu0
      %v1487 = vadd.f32 0.0, %v1486
      %v1488 = vpop.f32.mrb[0].mxu0
      %v1489 = vpop.f32.mrb[0].mxu0
      %v1490 = vpop.f32.mrb[0].mxu0
      %1491 = vdwg.mxu0
      %1492 = vrot.lane.b32.xlu0 %v1376, 20
      %v1493 = vpop.permute.xlu0 %1492
      %1494 = vrot.lane.b32.xlu0 %v1384, 20
      %v1495 = vpop.permute.xlu0 %1494
      %1496 = vrot.lane.b32.xlu0 %v1383, 20
      %v1497 = vpop.permute.xlu0 %1496
      %1498 = vrot.lane.b32.xlu0 %v1385, 20
      %v1499 = vpop.permute.xlu0 %1498
      %v1500 = vsel %vm442, %v1493, %v1495
      %v1501 = vsel %vm442, %v1495, %v1497
      %v1502 = vsel %vm442, %v1497, %v1499
      %v1504 = vsel %vm1397, %v1365, 0
      %v1507 = vsel %vm1401, %v1500, 0
      %v1510 = vsel %vm1401, %v1501, 0
      %v1513 = vsel %vm1401, %v1502, 0
      %1515 = vmatprep.subr.bf16.mxu0 %v1510
      %1516 = vmatpush1.bf16.msra.mxu0 %v1507
      %1517 = vmatprep.subr.bf16.mxu0 0
      %1518 = vmatpush1.bf16.msra.mxu0 0
      %1519 = vmatprep.subr.bf16.mxu0 0
      %1520 = vmatpush1.bf16.msra.mxu0 0
      %1521 = vmatprep.subr.bf16.mxu0 0
      %1522 = vmatpush1.bf16.msra.mxu0 0
      %1523 = vmatprep.subr.bf16.mxu0 0
      %1524 = vmatpush1.bf16.msra.mxu0 0
      %1525 = vmatprep.subr.bf16.mxu0 0
      %1526 = vmatpush1.bf16.msra.mxu0 0
      %1527 = vmatprep.subr.bf16.mxu0 0
      %1528 = vmatpush1.bf16.msra.mxu0 0
      %1529 = vmatprep.subr.bf16.mxu0 0
      %1530 = vmatpush1.bf16.msra.mxu0 0
      %1531 = vmatprep.subr.bf16.mxu0 0
      %1532 = vmatpush1.bf16.msra.mxu0 0
      %1533 = vmatprep.subr.bf16.mxu0 0
      %1534 = vmatpush1.bf16.msra.mxu0 0
      %1535 = vmatprep.subr.bf16.mxu0 0
      %1536 = vmatpush1.bf16.msra.mxu0 0
      %1537 = vmatprep.subr.bf16.mxu0 0
      %1538 = vmatpush1.bf16.msra.mxu0 0
      %1539 = vmatprep.subr.bf16.mxu0 0
      %1540 = vmatpush1.bf16.msra.mxu0 0
      %1541 = vmatprep.subr.bf16.mxu0 0
      %1542 = vmatpush1.bf16.msra.mxu0 0
      %1543 = vmatprep.subr.bf16.mxu0 0
      %1544 = vmatpush1.bf16.msra.mxu0 0
      %1545 = vmatprep.subr.bf16.mxu0 0
      %1546 = vmatpush1.bf16.msra.mxu0 0
      %1547 = vmatprep.mubr.bf16.mxu0 0
      %1548 = vmatmul.mubr.bf16.gmra.mrb[0].mxu0 %v1504
      %v1549 = vpop.f32.mrb[0].mxu0
      %v1550 = vadd.f32 %v1446, %v1549
      %v1551 = vpop.f32.mrb[0].mxu0
      %v1552 = vadd.f32 %v1448, %v1551
      %v1553 = vpop.f32.mrb[0].mxu0
      %v1554 = vpop.f32.mrb[0].mxu0
      %1555 = vdwg.mxu0
      %1556 = vmatprep.subr.bf16.mxu0 0
      %1557 = vmatpush1.bf16.msra.mxu0 %v1513
      %1558 = vmatprep.subr.bf16.mxu0 0
      %1559 = vmatpush1.bf16.msra.mxu0 0
      %1560 = vmatprep.subr.bf16.mxu0 0
      %1561 = vmatpush1.bf16.msra.mxu0 0
      %1562 = vmatprep.subr.bf16.mxu0 0
      %1563 = vmatpush1.bf16.msra.mxu0 0
      %1564 = vmatprep.subr.bf16.mxu0 0
      %1565 = vmatpush1.bf16.msra.mxu0 0
      %1566 = vmatprep.subr.bf16.mxu0 0
      %1567 = vmatpush1.bf16.msra.mxu0 0
      %1568 = vmatprep.subr.bf16.mxu0 0
      %1569 = vmatpush1.bf16.msra.mxu0 0
      %1570 = vmatprep.subr.bf16.mxu0 0
      %1571 = vmatpush1.bf16.msra.mxu0 0
      %1572 = vmatprep.subr.bf16.mxu0 0
      %1573 = vmatpush1.bf16.msra.mxu0 0
      %1574 = vmatprep.subr.bf16.mxu0 0
      %1575 = vmatpush1.bf16.msra.mxu0 0
      %1576 = vmatprep.subr.bf16.mxu0 0
      %1577 = vmatpush1.bf16.msra.mxu0 0
      %1578 = vmatprep.subr.bf16.mxu0 0
      %1579 = vmatpush1.bf16.msra.mxu0 0
      %1580 = vmatprep.subr.bf16.mxu0 0
      %1581 = vmatpush1.bf16.msra.mxu0 0
      %1582 = vmatprep.subr.bf16.mxu0 0
      %1583 = vmatpush1.bf16.msra.mxu0 0
      %1584 = vmatprep.subr.bf16.mxu0 0
      %1585 = vmatpush1.bf16.msra.mxu0 0
      %1586 = vmatprep.subr.bf16.mxu0 0
      %1587 = vmatpush1.bf16.msra.mxu0 0
      %1588 = vmatprep.mubr.bf16.mxu0 0
      %1589 = vmatmul.mubr.bf16.gmra.mrb[0].mxu0 %v1504
      %v1590 = vpop.f32.mrb[0].mxu0
      %v1591 = vadd.f32 %v1487, %v1590
      %v1592 = vpop.f32.mrb[0].mxu0
      %v1593 = vpop.f32.mrb[0].mxu0
      %v1594 = vpop.f32.mrb[0].mxu0
      %1595 = vdwg.mxu0
      %v1596 = vld [vmem:[#allocation2] sm:$0xff]
      %s1597 = scalar_lea.vmem %s4, 4
      %v1598 = vld [vmem:[%s1597] sm:$0x3]
      %v1600 = vcombine.high %v1596, %v1596
      %v1602 = vunpack.c.l.s4 1983009808
      %v1603 = vunpack.c.0.s8 %v1602
      %v1604 = vlaneseq
      %v1605 = vshrl.u32 %v1604, 7
      %v1606 = vsub.s32 %v1603, %v1605
      %v1607 = vrot.slane %v1596, %v1606
      %v1609 = vunpack.c.l.s4 1983009808
      %v1610 = vunpack.c.0.s8 %v1609
      %v1611 = vlaneseq
      %v1612 = vshrl.u32 %v1611, 7
      %v1613 = vsub.s32 %v1610, %v1612
      %v1614 = vrot.slane %v1600, %v1613
      %v1615 = vcombine.high %v1607, %v1607
      %v1616 = vcombine.high %v1614, %v1614
      %1617 = vrot.lane.b32.xlu0 %v1607, 18
      %v1618 = vpop.permute.xlu0 %1617
      %1619 = vrot.lane.b32.xlu0 %v1615, 18
      %v1620 = vpop.permute.xlu0 %1619
      %1621 = vrot.lane.b32.xlu0 %v1614, 18
      %v1622 = vpop.permute.xlu0 %1621
      %1623 = vrot.lane.b32.xlu0 %v1616, 18
      %v1624 = vpop.permute.xlu0 %1623
      %v1625 = vsel %vm549, %v1618, %v1620
      %v1626 = vsel %vm549, %v1620, %v1622
      %v1627 = vsel %vm549, %v1622, %v1624
      %v1629 = vsel %vm1397, %v1598, 0
      %v1632 = vsel %vm1401, %v1625, 0
      %v1635 = vsel %vm1401, %v1626, 0
      %v1638 = vsel %vm1401, %v1627, 0
      %1640 = vmatprep.subr.bf16.mxu0 %v1635
      %1641 = vmatpush1.bf16.msra.mxu0 %v1632
      %1642 = vmatprep.subr.bf16.mxu0 0
      %1643 = vmatpush1.bf16.msra.mxu0 0
      %1644 = vmatprep.subr.bf16.mxu0 0
      %1645 = vmatpush1.bf16.msra.mxu0 0
      %1646 = vmatprep.subr.bf16.mxu0 0
      %1647 = vmatpush1.bf16.msra.mxu0 0
      %1648 = vmatprep.subr.bf16.mxu0 0
      %1649 = vmatpush1.bf16.msra.mxu0 0
      %1650 = vmatprep.subr.bf16.mxu0 0
      %1651 = vmatpush1.bf16.msra.mxu0 0
      %1652 = vmatprep.subr.bf16.mxu0 0
      %1653 = vmatpush1.bf16.msra.mxu0 0
      %1654 = vmatprep.subr.bf16.mxu0 0
      %1655 = vmatpush1.bf16.msra.mxu0 0
      %1656 = vmatprep.subr.bf16.mxu0 0
      %1657 = vmatpush1.bf16.msra.mxu0 0
      %1658 = vmatprep.subr.bf16.mxu0 0
      %1659 = vmatpush1.bf16.msra.mxu0 0
      %1660 = vmatprep.subr.bf16.mxu0 0
      %1661 = vmatpush1.bf16.msra.mxu0 0
      %1662 = vmatprep.subr.bf16.mxu0 0
      %1663 = vmatpush1.bf16.msra.mxu0 0
      %1664 = vmatprep.subr.bf16.mxu0 0
      %1665 = vmatpush1.bf16.msra.mxu0 0
      %1666 = vmatprep.subr.bf16.mxu0 0
      %1667 = vmatpush1.bf16.msra.mxu0 0
      %1668 = vmatprep.subr.bf16.mxu0 0
      %1669 = vmatpush1.bf16.msra.mxu0 0
      %1670 = vmatprep.subr.bf16.mxu0 0
      %1671 = vmatpush1.bf16.msra.mxu0 0
      %1672 = vmatprep.mubr.bf16.mxu0 0
      %1673 = vmatmul.mubr.bf16.gmra.mrb[0].mxu0 %v1629
      %v1674 = vpop.f32.mrb[0].mxu0
      %v1675 = vadd.f32 0.0, %v1674
      %v1676 = vpop.f32.mrb[0].mxu0
      %v1677 = vadd.f32 0.0, %v1676
      %v1678 = vpop.f32.mrb[0].mxu0
      %v1679 = vpop.f32.mrb[0].mxu0
      %1680 = vdwg.mxu0
      %1681 = vmatprep.subr.bf16.mxu0 0
      %1682 = vmatpush1.bf16.msra.mxu0 %v1638
      %1683 = vmatprep.subr.bf16.mxu0 0
      %1684 = vmatpush1.bf16.msra.mxu0 0
      %1685 = vmatprep.subr.bf16.mxu0 0
      %1686 = vmatpush1.bf16.msra.mxu0 0
      %1687 = vmatprep.subr.bf16.mxu0 0
      %1688 = vmatpush1.bf16.msra.mxu0 0
      %1689 = vmatprep.subr.bf16.mxu0 0
      %1690 = vmatpush1.bf16.msra.mxu0 0
      %1691 = vmatprep.subr.bf16.mxu0 0
      %1692 = vmatpush1.bf16.msra.mxu0 0
      %1693 = vmatprep.subr.bf16.mxu0 0
      %1694 = vmatpush1.bf16.msra.mxu0 0
      %1695 = vmatprep.subr.bf16.mxu0 0
      %1696 = vmatpush1.bf16.msra.mxu0 0
      %1697 = vmatprep.subr.bf16.mxu0 0
      %1698 = vmatpush1.bf16.msra.mxu0 0
      %1699 = vmatprep.subr.bf16.mxu0 0
      %1700 = vmatpush1.bf16.msra.mxu0 0
      %1701 = vmatprep.subr.bf16.mxu0 0
      %1702 = vmatpush1.bf16.msra.mxu0 0
      %1703 = vmatprep.subr.bf16.mxu0 0
      %1704 = vmatpush1.bf16.msra.mxu0 0
      %1705 = vmatprep.subr.bf16.mxu0 0
      %1706 = vmatpush1.bf16.msra.mxu0 0
      %1707 = vmatprep.subr.bf16.mxu0 0
      %1708 = vmatpush1.bf16.msra.mxu0 0
      %1709 = vmatprep.subr.bf16.mxu0 0
      %1710 = vmatpush1.bf16.msra.mxu0 0
      %1711 = vmatprep.subr.bf16.mxu0 0
      %1712 = vmatpush1.bf16.msra.mxu0 0
      %1713 = vmatprep.mubr.bf16.mxu0 0
      %1714 = vmatmul.mubr.bf16.gmra.mrb[0].mxu0 %v1629
      %v1715 = vpop.f32.mrb[0].mxu0
      %v1716 = vadd.f32 0.0, %v1715
      %v1717 = vpop.f32.mrb[0].mxu0
      %v1718 = vpop.f32.mrb[0].mxu0
      %v1719 = vpop.f32.mrb[0].mxu0
      %1720 = vdwg.mxu0
      %v1721 = vadd.f32 %v1550, %v1675
      %v1722 = vadd.f32 %v1552, %v1677
      %v1723 = vadd.f32 %v1591, %v1716
      %v1724 = vld [vmem:[#allocation2] sm:$0xff]
      %s1725 = scalar_lea.vmem %s4, 6
      %v1726 = vld [vmem:[%s1725] sm:$0x3]
      %v1728 = vcombine.high %v1724, %v1724
      %v1730 = vunpack.c.l.s4 1983009808
      %v1731 = vunpack.c.0.s8 %v1730
      %v1732 = vlaneseq
      %v1733 = vshrl.u32 %v1732, 7
      %v1734 = vsub.s32 %v1731, %v1733
      %v1735 = vrot.slane %v1724, %v1734
      %v1737 = vunpack.c.l.s4 1983009808
      %v1738 = vunpack.c.0.s8 %v1737
      %v1739 = vlaneseq
      %v1740 = vshrl.u32 %v1739, 7
      %v1741 = vsub.s32 %v1738, %v1740
      %v1742 = vrot.slane %v1728, %v1741
      %v1743 = vcombine.high %v1735, %v1735
      %v1744 = vcombine.high %v1742, %v1742
      %1745 = vrot.lane.b32.xlu0 %v1735, 1
      %v1746 = vpop.permute.xlu0 %1745
      %1747 = vrot.lane.b32.xlu0 %v1743, 1
      %v1748 = vpop.permute.xlu0 %1747
      %1749 = vrot.lane.b32.xlu0 %v1742, 1
      %v1750 = vpop.permute.xlu0 %1749
      %1751 = vrot.lane.b32.xlu0 %v1744, 1
      %v1752 = vpop.permute.xlu0 %1751
      %v1753 = vsel %vm659, %v1746, %v1748
      %v1754 = vsel %vm659, %v1748, %v1750
      %v1755 = vsel %vm659, %v1750, %v1752
      %v1757 = vsel %vm1397, %v1726, 0
      %v1760 = vsel %vm1401, %v1753, 0
      %v1763 = vsel %vm1401, %v1754, 0
      %v1766 = vsel %vm1401, %v1755, 0
      %1768 = vmatprep.subr.bf16.mxu0 %v1763
      %1769 = vmatpush1.bf16.msra.mxu0 %v1760
      %1770 = vmatprep.subr.bf16.mxu0 0
      %1771 = vmatpush1.bf16.msra.mxu0 0
      %1772 = vmatprep.subr.bf16.mxu0 0
      %1773 = vmatpush1.bf16.msra.mxu0 0
      %1774 = vmatprep.subr.bf16.mxu0 0
      %1775 = vmatpush1.bf16.msra.mxu0 0
      %1776 = vmatprep.subr.bf16.mxu0 0
      %1777 = vmatpush1.bf16.msra.mxu0 0
      %1778 = vmatprep.subr.bf16.mxu0 0
      %1779 = vmatpush1.bf16.msra.mxu0 0
      %1780 = vmatprep.subr.bf16.mxu0 0
      %1781 = vmatpush1.bf16.msra.mxu0 0
      %1782 = vmatprep.subr.bf16.mxu0 0
      %1783 = vmatpush1.bf16.msra.mxu0 0
      %1784 = vmatprep.subr.bf16.mxu0 0
      %1785 = vmatpush1.bf16.msra.mxu0 0
      %1786 = vmatprep.subr.bf16.mxu0 0
      %1787 = vmatpush1.bf16.msra.mxu0 0
      %1788 = vmatprep.subr.bf16.mxu0 0
      %1789 = vmatpush1.bf16.msra.mxu0 0
      %1790 = vmatprep.subr.bf16.mxu0 0
      %1791 = vmatpush1.bf16.msra.mxu0 0
      %1792 = vmatprep.subr.bf16.mxu0 0
      %1793 = vmatpush1.bf16.msra.mxu0 0
      %1794 = vmatprep.subr.bf16.mxu0 0
      %1795 = vmatpush1.bf16.msra.mxu0 0
      %1796 = vmatprep.subr.bf16.mxu0 0
      %1797 = vmatpush1.bf16.msra.mxu0 0
      %1798 = vmatprep.subr.bf16.mxu0 0
      %1799 = vmatpush1.bf16.msra.mxu0 0
      %1800 = vmatprep.mubr.bf16.mxu0 0
      %1801 = vmatmul.mubr.bf16.gmra.mrb[0].mxu0 %v1757
      %v1802 = vpop.f32.mrb[0].mxu0
      %v1803 = vadd.f32 0.0, %v1802
      %v1804 = vpop.f32.mrb[0].mxu0
      %v1805 = vadd.f32 0.0, %v1804
      %v1806 = vpop.f32.mrb[0].mxu0
      %v1807 = vpop.f32.mrb[0].mxu0
      %1808 = vdwg.mxu0
      %1809 = vmatprep.subr.bf16.mxu0 0
      %1810 = vmatpush1.bf16.msra.mxu0 %v1766
      %1811 = vmatprep.subr.bf16.mxu0 0
      %1812 = vmatpush1.bf16.msra.mxu0 0
      %1813 = vmatprep.subr.bf16.mxu0 0
      %1814 = vmatpush1.bf16.msra.mxu0 0
      %1815 = vmatprep.subr.bf16.mxu0 0
      %1816 = vmatpush1.bf16.msra.mxu0 0
      %1817 = vmatprep.subr.bf16.mxu0 0
      %1818 = vmatpush1.bf16.msra.mxu0 0
      %1819 = vmatprep.subr.bf16.mxu0 0
      %1820 = vmatpush1.bf16.msra.mxu0 0
      %1821 = vmatprep.subr.bf16.mxu0 0
      %1822 = vmatpush1.bf16.msra.mxu0 0
      %1823 = vmatprep.subr.bf16.mxu0 0
      %1824 = vmatpush1.bf16.msra.mxu0 0
      %1825 = vmatprep.subr.bf16.mxu0 0
      %1826 = vmatpush1.bf16.msra.mxu0 0
      %1827 = vmatprep.subr.bf16.mxu0 0
      %1828 = vmatpush1.bf16.msra.mxu0 0
      %1829 = vmatprep.subr.bf16.mxu0 0
      %1830 = vmatpush1.bf16.msra.mxu0 0
      %1831 = vmatprep.subr.bf16.mxu0 0
      %1832 = vmatpush1.bf16.msra.mxu0 0
      %1833 = vmatprep.subr.bf16.mxu0 0
      %1834 = vmatpush1.bf16.msra.mxu0 0
      %1835 = vmatprep.subr.bf16.mxu0 0
      %1836 = vmatpush1.bf16.msra.mxu0 0
      %1837 = vmatprep.subr.bf16.mxu0 0
      %1838 = vmatpush1.bf16.msra.mxu0 0
      %1839 = vmatprep.subr.bf16.mxu0 0
      %1840 = vmatpush1.bf16.msra.mxu0 0
      %1841 = vmatprep.mubr.bf16.mxu0 0
      %1842 = vmatmul.mubr.bf16.gmra.mrb[0].mxu0 %v1757
      %v1843 = vpop.f32.mrb[0].mxu0
      %v1844 = vadd.f32 0.0, %v1843
      %v1845 = vpop.f32.mrb[0].mxu0
      %v1846 = vpop.f32.mrb[0].mxu0
      %v1847 = vpop.f32.mrb[0].mxu0
      %1848 = vdwg.mxu0
      %v1849 = vadd.f32 %v1721, %v1803
      %v1850 = vadd.f32 %v1722, %v1805
      %v1851 = vadd.f32 %v1723, %v1844
      %v1852 = vld [vmem:[#allocation2 + $0x2] sm:$0x3f]
      %s1853 = scalar_lea.vmem %s4, 8
      %v1854 = vld [vmem:[%s1853] sm:$0x3]
      %v1856 = vcombine.high %v1852, %v1852
      %v1858 = vunpack.c.l.s4 1983009808
      %v1859 = vunpack.c.0.s8 %v1858
      %v1860 = vlaneseq
      %v1861 = vshrl.u32 %v1860, 7
      %v1862 = vsub.s32 %v1859, %v1861
      %v1863 = vrot.slane %v1852, %v1862
      %v1865 = vunpack.c.l.s4 1983009808
      %v1866 = vunpack.c.0.s8 %v1865
      %v1867 = vlaneseq
      %v1868 = vshrl.u32 %v1867, 7
      %v1869 = vsub.s32 %v1866, %v1868
      %v1870 = vrot.slane %v1856, %v1869
      %v1871 = vcombine.high %v1863, %v1863
      %v1873 = vsel %vm1397, %v1854, 0
      %v1876 = vsel %vm1401, %v1863, 0
      %v1879 = vsel %vm1401, %v1871, 0
      %v1882 = vsel %vm1401, %v1870, 0
      %1884 = vmatprep.subr.bf16.mxu0 %v1879
      %1885 = vmatpush1.bf16.msra.mxu0 %v1876
      %1886 = vmatprep.subr.bf16.mxu0 0
      %1887 = vmatpush1.bf16.msra.mxu0 0
      %1888 = vmatprep.subr.bf16.mxu0 0
      %1889 = vmatpush1.bf16.msra.mxu0 0
      %1890 = vmatprep.subr.bf16.mxu0 0
      %1891 = vmatpush1.bf16.msra.mxu0 0
      %1892 = vmatprep.subr.bf16.mxu0 0
      %1893 = vmatpush1.bf16.msra.mxu0 0
      %1894 = vmatprep.subr.bf16.mxu0 0
      %1895 = vmatpush1.bf16.msra.mxu0 0
      %1896 = vmatprep.subr.bf16.mxu0 0
      %1897 = vmatpush1.bf16.msra.mxu0 0
      %1898 = vmatprep.subr.bf16.mxu0 0
      %1899 = vmatpush1.bf16.msra.mxu0 0
      %1900 = vmatprep.subr.bf16.mxu0 0
      %1901 = vmatpush1.bf16.msra.mxu0 0
      %1902 = vmatprep.subr.bf16.mxu0 0
      %1903 = vmatpush1.bf16.msra.mxu0 0
      %1904 = vmatprep.subr.bf16.mxu0 0
      %1905 = vmatpush1.bf16.msra.mxu0 0
      %1906 = vmatprep.subr.bf16.mxu0 0
      %1907 = vmatpush1.bf16.msra.mxu0 0
      %1908 = vmatprep.subr.bf16.mxu0 0
      %1909 = vmatpush1.bf16.msra.mxu0 0
      %1910 = vmatprep.subr.bf16.mxu0 0
      %1911 = vmatpush1.bf16.msra.mxu0 0
      %1912 = vmatprep.subr.bf16.mxu0 0
      %1913 = vmatpush1.bf16.msra.mxu0 0
      %1914 = vmatprep.subr.bf16.mxu0 0
      %1915 = vmatpush1.bf16.msra.mxu0 0
      %1916 = vmatprep.mubr.bf16.mxu0 0
      %1917 = vmatmul.mubr.bf16.gmra.mrb[0].mxu0 %v1873
      %v1918 = vpop.f32.mrb[0].mxu0
      %v1919 = vadd.f32 0.0, %v1918
      %v1920 = vpop.f32.mrb[0].mxu0
      %v1921 = vadd.f32 0.0, %v1920
      %v1922 = vpop.f32.mrb[0].mxu0
      %v1923 = vpop.f32.mrb[0].mxu0
      %1924 = vdwg.mxu0
      %1925 = vmatprep.subr.bf16.mxu0 0
      %1926 = vmatpush1.bf16.msra.mxu0 %v1882
      %1927 = vmatprep.subr.bf16.mxu0 0
      %1928 = vmatpush1.bf16.msra.mxu0 0
      %1929 = vmatprep.subr.bf16.mxu0 0
      %1930 = vmatpush1.bf16.msra.mxu0 0
      %1931 = vmatprep.subr.bf16.mxu0 0
      %1932 = vmatpush1.bf16.msra.mxu0 0
      %1933 = vmatprep.subr.bf16.mxu0 0
      %1934 = vmatpush1.bf16.msra.mxu0 0
      %1935 = vmatprep.subr.bf16.mxu0 0
      %1936 = vmatpush1.bf16.msra.mxu0 0
      %1937 = vmatprep.subr.bf16.mxu0 0
      %1938 = vmatpush1.bf16.msra.mxu0 0
      %1939 = vmatprep.subr.bf16.mxu0 0
      %1940 = vmatpush1.bf16.msra.mxu0 0
      %1941 = vmatprep.subr.bf16.mxu0 0
      %1942 = vmatpush1.bf16.msra.mxu0 0
      %1943 = vmatprep.subr.bf16.mxu0 0
      %1944 = vmatpush1.bf16.msra.mxu0 0
      %1945 = vmatprep.subr.bf16.mxu0 0
      %1946 = vmatpush1.bf16.msra.mxu0 0
      %1947 = vmatprep.subr.bf16.mxu0 0
      %1948 = vmatpush1.bf16.msra.mxu0 0
      %1949 = vmatprep.subr.bf16.mxu0 0
      %1950 = vmatpush1.bf16.msra.mxu0 0
      %1951 = vmatprep.subr.bf16.mxu0 0
      %1952 = vmatpush1.bf16.msra.mxu0 0
      %1953 = vmatprep.subr.bf16.mxu0 0
      %1954 = vmatpush1.bf16.msra.mxu0 0
      %1955 = vmatprep.subr.bf16.mxu0 0
      %1956 = vmatpush1.bf16.msra.mxu0 0
      %1957 = vmatprep.mubr.bf16.mxu0 0
      %1958 = vmatmul.mubr.bf16.gmra.mrb[0].mxu0 %v1873
      %v1959 = vpop.f32.mrb[0].mxu0
      %v1960 = vadd.f32 0.0, %v1959
      %v1961 = vpop.f32.mrb[0].mxu0
      %v1962 = vpop.f32.mrb[0].mxu0
      %v1963 = vpop.f32.mrb[0].mxu0
      %1964 = vdwg.mxu0
      %v1965 = vadd.f32 %v1849, %v1919
      %v1966 = vadd.f32 %v1850, %v1921
      %v1967 = vadd.f32 %v1851, %v1960
      %v1968 = vld [vmem:[#allocation2 + $0x2] sm:$0xff]
      %s1969 = scalar_lea.vmem %s4, 10
      %v1970 = vld [vmem:[%s1969] sm:$0x3]
      %v1972 = vcombine.high %v1968, %v1968
      %v1974 = vunpack.c.l.s4 1983009808
      %v1975 = vunpack.c.0.s8 %v1974
      %v1976 = vlaneseq
      %v1977 = vshrl.u32 %v1976, 7
      %v1978 = vsub.s32 %v1975, %v1977
      %v1979 = vrot.slane %v1968, %v1978
      %v1981 = vunpack.c.l.s4 1983009808
      %v1982 = vunpack.c.0.s8 %v1981
      %v1983 = vlaneseq
      %v1984 = vshrl.u32 %v1983, 7
      %v1985 = vsub.s32 %v1982, %v1984
      %v1986 = vrot.slane %v1972, %v1985
      %v1987 = vcombine.high %v1979, %v1979
      %v1988 = vcombine.high %v1986, %v1986
      %1989 = vrot.lane.b32.xlu0 %v1979, 127
      %v1990 = vpop.permute.xlu0 %1989
      %1991 = vrot.lane.b32.xlu0 %v1987, 127
      %v1992 = vpop.permute.xlu0 %1991
      %1993 = vrot.lane.b32.xlu0 %v1986, 127
      %v1994 = vpop.permute.xlu0 %1993
      %1995 = vrot.lane.b32.xlu0 %v1988, 127
      %v1996 = vpop.permute.xlu0 %1995
      %v1997 = vsel %vm879, %v1990, %v1992
      %v1998 = vsel %vm879, %v1992, %v1994
      %v1999 = vsel %vm879, %v1994, %v1996
      %v2001 = vsel %vm1397, %v1970, 0
      %v2004 = vsel %vm1401, %v1997, 0
      %v2007 = vsel %vm1401, %v1998, 0
      %v2010 = vsel %vm1401, %v1999, 0
      %2012 = vmatprep.subr.bf16.mxu0 %v2007
      %2013 = vmatpush1.bf16.msra.mxu0 %v2004
      %2014 = vmatprep.subr.bf16.mxu0 0
      %2015 = vmatpush1.bf16.msra.mxu0 0
      %2016 = vmatprep.subr.bf16.mxu0 0
      %2017 = vmatpush1.bf16.msra.mxu0 0
      %2018 = vmatprep.subr.bf16.mxu0 0
      %2019 = vmatpush1.bf16.msra.mxu0 0
      %2020 = vmatprep.subr.bf16.mxu0 0
      %2021 = vmatpush1.bf16.msra.mxu0 0
      %2022 = vmatprep.subr.bf16.mxu0 0
      %2023 = vmatpush1.bf16.msra.mxu0 0
      %2024 = vmatprep.subr.bf16.mxu0 0
      %2025 = vmatpush1.bf16.msra.mxu0 0
      %2026 = vmatprep.subr.bf16.mxu0 0
      %2027 = vmatpush1.bf16.msra.mxu0 0
      %2028 = vmatprep.subr.bf16.mxu0 0
      %2029 = vmatpush1.bf16.msra.mxu0 0
      %2030 = vmatprep.subr.bf16.mxu0 0
      %2031 = vmatpush1.bf16.msra.mxu0 0
      %2032 = vmatprep.subr.bf16.mxu0 0
      %2033 = vmatpush1.bf16.msra.mxu0 0
      %2034 = vmatprep.subr.bf16.mxu0 0
      %2035 = vmatpush1.bf16.msra.mxu0 0
      %2036 = vmatprep.subr.bf16.mxu0 0
      %2037 = vmatpush1.bf16.msra.mxu0 0
      %2038 = vmatprep.subr.bf16.mxu0 0
      %2039 = vmatpush1.bf16.msra.mxu0 0
      %2040 = vmatprep.subr.bf16.mxu0 0
      %2041 = vmatpush1.bf16.msra.mxu0 0
      %2042 = vmatprep.subr.bf16.mxu0 0
      %2043 = vmatpush1.bf16.msra.mxu0 0
      %2044 = vmatprep.mubr.bf16.mxu0 0
      %2045 = vmatmul.mubr.bf16.gmra.mrb[0].mxu0 %v2001
      %v2046 = vpop.f32.mrb[0].mxu0
      %v2047 = vadd.f32 0.0, %v2046
      %v2048 = vpop.f32.mrb[0].mxu0
      %v2049 = vadd.f32 0.0, %v2048
      %v2050 = vpop.f32.mrb[0].mxu0
      %v2051 = vpop.f32.mrb[0].mxu0
      %2052 = vdwg.mxu0
      %2053 = vmatprep.subr.bf16.mxu0 0
      %2054 = vmatpush1.bf16.msra.mxu0 %v2010
      %2055 = vmatprep.subr.bf16.mxu0 0
      %2056 = vmatpush1.bf16.msra.mxu0 0
      %2057 = vmatprep.subr.bf16.mxu0 0
      %2058 = vmatpush1.bf16.msra.mxu0 0
      %2059 = vmatprep.subr.bf16.mxu0 0
      %2060 = vmatpush1.bf16.msra.mxu0 0
      %2061 = vmatprep.subr.bf16.mxu0 0
      %2062 = vmatpush1.bf16.msra.mxu0 0
      %2063 = vmatprep.subr.bf16.mxu0 0
      %2064 = vmatpush1.bf16.msra.mxu0 0
      %2065 = vmatprep.subr.bf16.mxu0 0
      %2066 = vmatpush1.bf16.msra.mxu0 0
      %2067 = vmatprep.subr.bf16.mxu0 0
      %2068 = vmatpush1.bf16.msra.mxu0 0
      %2069 = vmatprep.subr.bf16.mxu0 0
      %2070 = vmatpush1.bf16.msra.mxu0 0
      %2071 = vmatprep.subr.bf16.mxu0 0
      %2072 = vmatpush1.bf16.msra.mxu0 0
      %2073 = vmatprep.subr.bf16.mxu0 0
      %2074 = vmatpush1.bf16.msra.mxu0 0
      %2075 = vmatprep.subr.bf16.mxu0 0
      %2076 = vmatpush1.bf16.msra.mxu0 0
      %2077 = vmatprep.subr.bf16.mxu0 0
      %2078 = vmatpush1.bf16.msra.mxu0 0
      %2079 = vmatprep.subr.bf16.mxu0 0
      %2080 = vmatpush1.bf16.msra.mxu0 0
      %2081 = vmatprep.subr.bf16.mxu0 0
      %2082 = vmatpush1.bf16.msra.mxu0 0
      %2083 = vmatprep.subr.bf16.mxu0 0
      %2084 = vmatpush1.bf16.msra.mxu0 0
      %2085 = vmatprep.mubr.bf16.mxu0 0
      %2086 = vmatmul.mubr.bf16.gmra.mrb[0].mxu0 %v2001
      %v2087 = vpop.f32.mrb[0].mxu0
      %v2088 = vadd.f32 0.0, %v2087
      %v2089 = vpop.f32.mrb[0].mxu0
      %v2090 = vpop.f32.mrb[0].mxu0
      %v2091 = vpop.f32.mrb[0].mxu0
      %2092 = vdwg.mxu0
      %v2093 = vadd.f32 %v1965, %v2047
      %v2094 = vadd.f32 %v1966, %v2049
      %v2095 = vadd.f32 %v1967, %v2088
      %v2096 = vld [vmem:[#allocation2 + $0x2] sm:$0xff]
      %s2097 = scalar_lea.vmem %s4, 12
      %v2098 = vld [vmem:[%s2097] sm:$0x3]
      %v2100 = vcombine.high %v2096, %v2096
      %v2102 = vunpack.c.l.s4 1983009808
      %v2103 = vunpack.c.0.s8 %v2102
      %v2104 = vlaneseq
      %v2105 = vshrl.u32 %v2104, 7
      %v2106 = vsub.s32 %v2103, %v2105
      %v2107 = vrot.slane %v2096, %v2106
      %v2109 = vunpack.c.l.s4 1983009808
      %v2110 = vunpack.c.0.s8 %v2109
      %v2111 = vlaneseq
      %v2112 = vshrl.u32 %v2111, 7
      %v2113 = vsub.s32 %v2110, %v2112
      %v2114 = vrot.slane %v2100, %v2113
      %v2115 = vcombine.high %v2107, %v2107
      %v2116 = vcombine.high %v2114, %v2114
      %2117 = vrot.lane.b32.xlu0 %v2107, 110
      %v2118 = vpop.permute.xlu0 %2117
      %2119 = vrot.lane.b32.xlu0 %v2115, 110
      %v2120 = vpop.permute.xlu0 %2119
      %2121 = vrot.lane.b32.xlu0 %v2114, 110
      %v2122 = vpop.permute.xlu0 %2121
      %2123 = vrot.lane.b32.xlu0 %v2116, 110
      %v2124 = vpop.permute.xlu0 %2123
      %v2125 = vsel %vm989, %v2118, %v2120
      %v2126 = vsel %vm989, %v2120, %v2122
      %v2127 = vsel %vm989, %v2122, %v2124
      %v2129 = vsel %vm1397, %v2098, 0
      %v2132 = vsel %vm1401, %v2125, 0
      %v2135 = vsel %vm1401, %v2126, 0
      %v2138 = vsel %vm1401, %v2127, 0
      %2140 = vmatprep.subr.bf16.mxu0 %v2135
      %2141 = vmatpush1.bf16.msra.mxu0 %v2132
      %2142 = vmatprep.subr.bf16.mxu0 0
      %2143 = vmatpush1.bf16.msra.mxu0 0
      %2144 = vmatprep.subr.bf16.mxu0 0
      %2145 = vmatpush1.bf16.msra.mxu0 0
      %2146 = vmatprep.subr.bf16.mxu0 0
      %2147 = vmatpush1.bf16.msra.mxu0 0
      %2148 = vmatprep.subr.bf16.mxu0 0
      %2149 = vmatpush1.bf16.msra.mxu0 0
      %2150 = vmatprep.subr.bf16.mxu0 0
      %2151 = vmatpush1.bf16.msra.mxu0 0
      %2152 = vmatprep.subr.bf16.mxu0 0
      %2153 = vmatpush1.bf16.msra.mxu0 0
      %2154 = vmatprep.subr.bf16.mxu0 0
      %2155 = vmatpush1.bf16.msra.mxu0 0
      %2156 = vmatprep.subr.bf16.mxu0 0
      %2157 = vmatpush1.bf16.msra.mxu0 0
      %2158 = vmatprep.subr.bf16.mxu0 0
      %2159 = vmatpush1.bf16.msra.mxu0 0
      %2160 = vmatprep.subr.bf16.mxu0 0
      %2161 = vmatpush1.bf16.msra.mxu0 0
      %2162 = vmatprep.subr.bf16.mxu0 0
      %2163 = vmatpush1.bf16.msra.mxu0 0
      %2164 = vmatprep.subr.bf16.mxu0 0
      %2165 = vmatpush1.bf16.msra.mxu0 0
      %2166 = vmatprep.subr.bf16.mxu0 0
      %2167 = vmatpush1.bf16.msra.mxu0 0
      %2168 = vmatprep.subr.bf16.mxu0 0
      %2169 = vmatpush1.bf16.msra.mxu0 0
      %2170 = vmatprep.subr.bf16.mxu0 0
      %2171 = vmatpush1.bf16.msra.mxu0 0
      %2172 = vmatprep.mubr.bf16.mxu0 0
      %2173 = vmatmul.mubr.bf16.gmra.mrb[0].mxu0 %v2129
      %v2174 = vpop.f32.mrb[0].mxu0
      %v2175 = vadd.f32 0.0, %v2174
      %v2176 = vpop.f32.mrb[0].mxu0
      %v2177 = vadd.f32 0.0, %v2176
      %v2178 = vpop.f32.mrb[0].mxu0
      %v2179 = vpop.f32.mrb[0].mxu0
      %2180 = vdwg.mxu0
      %2181 = vmatprep.subr.bf16.mxu0 0
      %2182 = vmatpush1.bf16.msra.mxu0 %v2138
      %2183 = vmatprep.subr.bf16.mxu0 0
      %2184 = vmatpush1.bf16.msra.mxu0 0
      %2185 = vmatprep.subr.bf16.mxu0 0
      %2186 = vmatpush1.bf16.msra.mxu0 0
      %2187 = vmatprep.subr.bf16.mxu0 0
      %2188 = vmatpush1.bf16.msra.mxu0 0
      %2189 = vmatprep.subr.bf16.mxu0 0
      %2190 = vmatpush1.bf16.msra.mxu0 0
      %2191 = vmatprep.subr.bf16.mxu0 0
      %2192 = vmatpush1.bf16.msra.mxu0 0
      %2193 = vmatprep.subr.bf16.mxu0 0
      %2194 = vmatpush1.bf16.msra.mxu0 0
      %2195 = vmatprep.subr.bf16.mxu0 0
      %2196 = vmatpush1.bf16.msra.mxu0 0
      %2197 = vmatprep.subr.bf16.mxu0 0
      %2198 = vmatpush1.bf16.msra.mxu0 0
      %2199 = vmatprep.subr.bf16.mxu0 0
      %2200 = vmatpush1.bf16.msra.mxu0 0
      %2201 = vmatprep.subr.bf16.mxu0 0
      %2202 = vmatpush1.bf16.msra.mxu0 0
      %2203 = vmatprep.subr.bf16.mxu0 0
      %2204 = vmatpush1.bf16.msra.mxu0 0
      %2205 = vmatprep.subr.bf16.mxu0 0
      %2206 = vmatpush1.bf16.msra.mxu0 0
      %2207 = vmatprep.subr.bf16.mxu0 0
      %2208 = vmatpush1.bf16.msra.mxu0 0
      %2209 = vmatprep.subr.bf16.mxu0 0
      %2210 = vmatpush1.bf16.msra.mxu0 0
      %2211 = vmatprep.subr.bf16.mxu0 0
      %2212 = vmatpush1.bf16.msra.mxu0 0
      %2213 = vmatprep.mubr.bf16.mxu0 0
      %2214 = vmatmul.mubr.bf16.gmra.mrb[0].mxu0 %v2129
      %v2215 = vpop.f32.mrb[0].mxu0
      %v2216 = vadd.f32 0.0, %v2215
      %v2217 = vpop.f32.mrb[0].mxu0
      %v2218 = vpop.f32.mrb[0].mxu0
      %v2219 = vpop.f32.mrb[0].mxu0
      %2220 = vdwg.mxu0
      %v2221 = vadd.f32 %v2093, %v2175
      %v2222 = vadd.f32 %v2094, %v2177
      %v2223 = vadd.f32 %v2095, %v2216
      %v2224 = vld [vmem:[#allocation2 + $0x2] sm:$0xff]
      %s2225 = scalar_lea.vmem %s4, 14
      %v2226 = vld [vmem:[%s2225] sm:$0x3]
      %v2228 = vcombine.high %v2224, %v2224
      %v2230 = vunpack.c.l.s4 1983009808
      %v2231 = vunpack.c.0.s8 %v2230
      %v2232 = vlaneseq
      %v2233 = vshrl.u32 %v2232, 7
      %v2234 = vsub.s32 %v2231, %v2233
      %v2235 = vrot.slane %v2224, %v2234
      %v2237 = vunpack.c.l.s4 1983009808
      %v2238 = vunpack.c.0.s8 %v2237
      %v2239 = vlaneseq
      %v2240 = vshrl.u32 %v2239, 7
      %v2241 = vsub.s32 %v2238, %v2240
      %v2242 = vrot.slane %v2228, %v2241
      %v2243 = vcombine.high %v2235, %v2235
      %v2244 = vcombine.high %v2242, %v2242
      %2245 = vrot.lane.b32.xlu0 %v2235, 109
      %v2246 = vpop.permute.xlu0 %2245
      %2247 = vrot.lane.b32.xlu0 %v2243, 109
      %v2248 = vpop.permute.xlu0 %2247
      %2249 = vrot.lane.b32.xlu0 %v2242, 109
      %v2250 = vpop.permute.xlu0 %2249
      %2251 = vrot.lane.b32.xlu0 %v2244, 109
      %v2252 = vpop.permute.xlu0 %2251
      %v2253 = vsel %vm1099, %v2246, %v2248
      %v2254 = vsel %vm1099, %v2248, %v2250
      %v2255 = vsel %vm1099, %v2250, %v2252
      %v2257 = vsel %vm1397, %v2226, 0
      %v2260 = vsel %vm1401, %v2253, 0
      %v2263 = vsel %vm1401, %v2254, 0
      %v2266 = vsel %vm1401, %v2255, 0
      %2268 = vmatprep.subr.bf16.mxu0 %v2263
      %2269 = vmatpush1.bf16.msra.mxu0 %v2260
      %2270 = vmatprep.subr.bf16.mxu0 0
      %2271 = vmatpush1.bf16.msra.mxu0 0
      %2272 = vmatprep.subr.bf16.mxu0 0
      %2273 = vmatpush1.bf16.msra.mxu0 0
      %2274 = vmatprep.subr.bf16.mxu0 0
      %2275 = vmatpush1.bf16.msra.mxu0 0
      %2276 = vmatprep.subr.bf16.mxu0 0
      %2277 = vmatpush1.bf16.msra.mxu0 0
      %2278 = vmatprep.subr.bf16.mxu0 0
      %2279 = vmatpush1.bf16.msra.mxu0 0
      %2280 = vmatprep.subr.bf16.mxu0 0
      %2281 = vmatpush1.bf16.msra.mxu0 0
      %2282 = vmatprep.subr.bf16.mxu0 0
      %2283 = vmatpush1.bf16.msra.mxu0 0
      %2284 = vmatprep.subr.bf16.mxu0 0
      %2285 = vmatpush1.bf16.msra.mxu0 0
      %2286 = vmatprep.subr.bf16.mxu0 0
      %2287 = vmatpush1.bf16.msra.mxu0 0
      %2288 = vmatprep.subr.bf16.mxu0 0
      %2289 = vmatpush1.bf16.msra.mxu0 0
      %2290 = vmatprep.subr.bf16.mxu0 0
      %2291 = vmatpush1.bf16.msra.mxu0 0
      %2292 = vmatprep.subr.bf16.mxu0 0
      %2293 = vmatpush1.bf16.msra.mxu0 0
      %2294 = vmatprep.subr.bf16.mxu0 0
      %2295 = vmatpush1.bf16.msra.mxu0 0
      %2296 = vmatprep.subr.bf16.mxu0 0
      %2297 = vmatpush1.bf16.msra.mxu0 0
      %2298 = vmatprep.subr.bf16.mxu0 0
      %2299 = vmatpush1.bf16.msra.mxu0 0
      %2300 = vmatprep.mubr.bf16.mxu0 0
      %2301 = vmatmul.mubr.bf16.gmra.mrb[0].mxu0 %v2257
      %v2302 = vpop.f32.mrb[0].mxu0
      %v2303 = vadd.f32 0.0, %v2302
      %v2304 = vpop.f32.mrb[0].mxu0
      %v2305 = vadd.f32 0.0, %v2304
      %v2306 = vpop.f32.mrb[0].mxu0
      %v2307 = vpop.f32.mrb[0].mxu0
      %2308 = vdwg.mxu0
      %2309 = vmatprep.subr.bf16.mxu0 0
      %2310 = vmatpush1.bf16.msra.mxu0 %v2266
      %2311 = vmatprep.subr.bf16.mxu0 0
      %2312 = vmatpush1.bf16.msra.mxu0 0
      %2313 = vmatprep.subr.bf16.mxu0 0
      %2314 = vmatpush1.bf16.msra.mxu0 0
      %2315 = vmatprep.subr.bf16.mxu0 0
      %2316 = vmatpush1.bf16.msra.mxu0 0
      %2317 = vmatprep.subr.bf16.mxu0 0
      %2318 = vmatpush1.bf16.msra.mxu0 0
      %2319 = vmatprep.subr.bf16.mxu0 0
      %2320 = vmatpush1.bf16.msra.mxu0 0
      %2321 = vmatprep.subr.bf16.mxu0 0
      %2322 = vmatpush1.bf16.msra.mxu0 0
      %2323 = vmatprep.subr.bf16.mxu0 0
      %2324 = vmatpush1.bf16.msra.mxu0 0
      %2325 = vmatprep.subr.bf16.mxu0 0
      %2326 = vmatpush1.bf16.msra.mxu0 0
      %2327 = vmatprep.subr.bf16.mxu0 0
      %2328 = vmatpush1.bf16.msra.mxu0 0
      %2329 = vmatprep.subr.bf16.mxu0 0
      %2330 = vmatpush1.bf16.msra.mxu0 0
      %2331 = vmatprep.subr.bf16.mxu0 0
      %2332 = vmatpush1.bf16.msra.mxu0 0
      %2333 = vmatprep.subr.bf16.mxu0 0
      %2334 = vmatpush1.bf16.msra.mxu0 0
      %2335 = vmatprep.subr.bf16.mxu0 0
      %2336 = vmatpush1.bf16.msra.mxu0 0
      %2337 = vmatprep.subr.bf16.mxu0 0
      %2338 = vmatpush1.bf16.msra.mxu0 0
      %2339 = vmatprep.subr.bf16.mxu0 0
      %2340 = vmatpush1.bf16.msra.mxu0 0
      %2341 = vmatprep.mubr.bf16.mxu0 0
      %2342 = vmatmul.mubr.bf16.gmra.mrb[0].mxu0 %v2257
      %v2343 = vpop.f32.mrb[0].mxu0
      %v2344 = vadd.f32 0.0, %v2343
      %v2345 = vpop.f32.mrb[0].mxu0
      %v2346 = vpop.f32.mrb[0].mxu0
      %v2347 = vpop.f32.mrb[0].mxu0
      %2348 = vdwg.mxu0
      %v2349 = vadd.f32 %v2221, %v2303
      %v2350 = vadd.f32 %v2222, %v2305
      %v2351 = vadd.f32 %v2223, %v2344
      %v2352 = vld [vmem:[#allocation2 + $0x2] sm:$0xff]
      %s2353 = scalar_lea.vmem %s4, 16
      %v2354 = vld [vmem:[%s2353] sm:$0x3]
      %v2356 = vcombine.high %v2352, %v2352
      %v2358 = vunpack.c.l.s4 1983009808
      %v2359 = vunpack.c.0.s8 %v2358
      %v2360 = vlaneseq
      %v2361 = vshrl.u32 %v2360, 7
      %v2362 = vsub.s32 %v2359, %v2361
      %v2363 = vrot.slane %v2352, %v2362
      %v2365 = vunpack.c.l.s4 1983009808
      %v2366 = vunpack.c.0.s8 %v2365
      %v2367 = vlaneseq
      %v2368 = vshrl.u32 %v2367, 7
      %v2369 = vsub.s32 %v2366, %v2368
      %v2370 = vrot.slane %v2356, %v2369
      %v2371 = vcombine.high %v2363, %v2363
      %v2372 = vcombine.high %v2370, %v2370
      %2373 = vrot.lane.b32.xlu0 %v2363, 108
      %v2374 = vpop.permute.xlu0 %2373
      %2375 = vrot.lane.b32.xlu0 %v2371, 108
      %v2376 = vpop.permute.xlu0 %2375
      %2377 = vrot.lane.b32.xlu0 %v2370, 108
      %v2378 = vpop.permute.xlu0 %2377
      %2379 = vrot.lane.b32.xlu0 %v2372, 108
      %v2380 = vpop.permute.xlu0 %2379
      %v2381 = vsel %vm1209, %v2374, %v2376
      %v2382 = vsel %vm1209, %v2376, %v2378
      %v2383 = vsel %vm1209, %v2378, %v2380
      %v2385 = vsel %vm1397, %v2354, 0
      %v2388 = vsel %vm1401, %v2381, 0
      %v2391 = vsel %vm1401, %v2382, 0
      %v2394 = vsel %vm1401, %v2383, 0
      %2396 = vmatprep.subr.bf16.mxu0 %v2391
      %2397 = vmatpush1.bf16.msra.mxu0 %v2388
      %2398 = vmatprep.subr.bf16.mxu0 0
      %2399 = vmatpush1.bf16.msra.mxu0 0
      %2400 = vmatprep.subr.bf16.mxu0 0
      %2401 = vmatpush1.bf16.msra.mxu0 0
      %2402 = vmatprep.subr.bf16.mxu0 0
      %2403 = vmatpush1.bf16.msra.mxu0 0
      %2404 = vmatprep.subr.bf16.mxu0 0
      %2405 = vmatpush1.bf16.msra.mxu0 0
      %2406 = vmatprep.subr.bf16.mxu0 0
      %2407 = vmatpush1.bf16.msra.mxu0 0
      %2408 = vmatprep.subr.bf16.mxu0 0
      %2409 = vmatpush1.bf16.msra.mxu0 0
      %2410 = vmatprep.subr.bf16.mxu0 0
      %2411 = vmatpush1.bf16.msra.mxu0 0
      %2412 = vmatprep.subr.bf16.mxu0 0
      %2413 = vmatpush1.bf16.msra.mxu0 0
      %2414 = vmatprep.subr.bf16.mxu0 0
      %2415 = vmatpush1.bf16.msra.mxu0 0
      %2416 = vmatprep.subr.bf16.mxu0 0
      %2417 = vmatpush1.bf16.msra.mxu0 0
      %2418 = vmatprep.subr.bf16.mxu0 0
      %2419 = vmatpush1.bf16.msra.mxu0 0
      %2420 = vmatprep.subr.bf16.mxu0 0
      %2421 = vmatpush1.bf16.msra.mxu0 0
      %2422 = vmatprep.subr.bf16.mxu0 0
      %2423 = vmatpush1.bf16.msra.mxu0 0
      %2424 = vmatprep.subr.bf16.mxu0 0
      %2425 = vmatpush1.bf16.msra.mxu0 0
      %2426 = vmatprep.subr.bf16.mxu0 0
      %2427 = vmatpush1.bf16.msra.mxu0 0
      %2428 = vmatprep.mubr.bf16.mxu0 0
      %2429 = vmatmul.mubr.bf16.gmra.mrb[0].mxu0 %v2385
      %v2430 = vpop.f32.mrb[0].mxu0
      %v2431 = vadd.f32 0.0, %v2430
      %v2432 = vpop.f32.mrb[0].mxu0
      %v2433 = vadd.f32 0.0, %v2432
      %v2434 = vpop.f32.mrb[0].mxu0
      %v2435 = vpop.f32.mrb[0].mxu0
      %2436 = vdwg.mxu0
      %2437 = vmatprep.subr.bf16.mxu0 0
      %2438 = vmatpush1.bf16.msra.mxu0 %v2394
      %2439 = vmatprep.subr.bf16.mxu0 0
      %2440 = vmatpush1.bf16.msra.mxu0 0
      %2441 = vmatprep.subr.bf16.mxu0 0
      %2442 = vmatpush1.bf16.msra.mxu0 0
      %2443 = vmatprep.subr.bf16.mxu0 0
      %2444 = vmatpush1.bf16.msra.mxu0 0
      %2445 = vmatprep.subr.bf16.mxu0 0
      %2446 = vmatpush1.bf16.msra.mxu0 0
      %2447 = vmatprep.subr.bf16.mxu0 0
      %2448 = vmatpush1.bf16.msra.mxu0 0
      %2449 = vmatprep.subr.bf16.mxu0 0
      %2450 = vmatpush1.bf16.msra.mxu0 0
      %2451 = vmatprep.subr.bf16.mxu0 0
      %2452 = vmatpush1.bf16.msra.mxu0 0
      %2453 = vmatprep.subr.bf16.mxu0 0
      %2454 = vmatpush1.bf16.msra.mxu0 0
      %2455 = vmatprep.subr.bf16.mxu0 0
      %2456 = vmatpush1.bf16.msra.mxu0 0
      %2457 = vmatprep.subr.bf16.mxu0 0
      %2458 = vmatpush1.bf16.msra.mxu0 0
      %2459 = vmatprep.subr.bf16.mxu0 0
      %2460 = vmatpush1.bf16.msra.mxu0 0
      %2461 = vmatprep.subr.bf16.mxu0 0
      %2462 = vmatpush1.bf16.msra.mxu0 0
      %2463 = vmatprep.subr.bf16.mxu0 0
      %2464 = vmatpush1.bf16.msra.mxu0 0
      %2465 = vmatprep.subr.bf16.mxu0 0
      %2466 = vmatpush1.bf16.msra.mxu0 0
      %2467 = vmatprep.subr.bf16.mxu0 0
      %2468 = vmatpush1.bf16.msra.mxu0 0
      %2469 = vmatprep.mubr.bf16.mxu0 0
      %2470 = vmatmul.mubr.bf16.gmra.mrb[0].mxu0 %v2385
      %v2471 = vpop.f32.mrb[0].mxu0
      %v2472 = vadd.f32 0.0, %v2471
      %v2473 = vpop.f32.mrb[0].mxu0
      %v2474 = vpop.f32.mrb[0].mxu0
      %v2475 = vpop.f32.mrb[0].mxu0
      %2476 = vdwg.mxu0
      %v2477 = vadd.f32 %v2349, %v2431
      %v2478 = vadd.f32 %v2350, %v2433
      %v2479 = vadd.f32 %v2351, %v2472
      %v2480 = vld [vmem:[%s5] sm:$0xf]
      %2482 = vset.pattern.permute.xlu0 0
      %2483 = vperm.xlu0 %2482, %v2480
      %v2484 = vpop.permute.xlu0 %2483
      %v2486 = vadd.f32 %v2477, %v2484
      %v2487 = vadd.f32 %v2478, %v2484
      %v2488 = vadd.f32 %v2479, %v2484
      %v2489 = vmax.f32 %v2486, 0.0
      %v2490 = vmax.f32 %v2487, 0.0
      %v2491 = vmax.f32 %v2488, 0.0
      %v2492 = vmul.f32 %v2489, %v1325
      %v2493 = vmul.f32 %v2490, %v1329
      %v2494 = vmul.f32 %v2491, %v1333
      %v2495 = vpack.c.bf16 %v2492, %v2492
      %v2496 = vpack.c.bf16 %v2493, %v2493
      %v2497 = vpack.c.bf16 %v2494, %v2494
      %v2501 = vcombine.low %v2495, %v2496
      %v2503 = vunpack.c.l.s4 1983009808
      %v2504 = vunpack.c.0.s8 %v2503
      %v2505 = vlaneseq
      %v2506 = vshrl.u32 %v2505, 7
      %v2507 = vsub.s32 %v2504, %v2506
      %v2508 = vrot.slane %v2501, %v2507
      %v2510 = vunpack.c.l.s4 1983009808
      %v2511 = vunpack.c.0.s8 %v2510
      %v2512 = vlaneseq
      %v2513 = vshrl.u32 %v2512, 7
      %v2514 = vsub.s32 %v2511, %v2513
      %v2515 = vrot.slane %v2497, %v2514
      %v2516 = vcombine.low %v2508, %v2515
      %2518 = vst [vmem:[#allocation3 + $0x2] sm:$0x3f] %v2516
      %v2519 = vld [vmem:[#allocation3] sm:$0xff]
      %v2520 = vld [vmem:[%s6] sm:$0xf]
      %s2521 = scalar_lea.vmem %s6, 4
      %v2522 = vld [vmem:[%s2521] sm:$0xf]
      %v2524 = vcombine.high %v2519, %v2519
      %v2526 = vunpack.c.l.s4 1983009808
      %v2527 = vunpack.c.0.s8 %v2526
      %v2528 = vlaneseq
      %v2529 = vshrl.u32 %v2528, 7
      %v2530 = vsub.s32 %v2527, %v2529
      %v2531 = vrot.slane %v2519, %v2530
      %v2533 = vunpack.c.l.s4 1983009808
      %v2534 = vunpack.c.0.s8 %v2533
      %v2535 = vlaneseq
      %v2536 = vshrl.u32 %v2535, 7
      %v2537 = vsub.s32 %v2534, %v2536
      %v2538 = vrot.slane %v2524, %v2537
      %v2539 = vcombine.high %v2531, %v2531
      %v2540 = vcombine.high %v2538, %v2538
      %2541 = vrot.lane.b32.xlu0 %v2531, 19
      %v2542 = vpop.permute.xlu0 %2541
      %2543 = vrot.lane.b32.xlu0 %v2539, 19
      %v2544 = vpop.permute.xlu0 %2543
      %2545 = vrot.lane.b32.xlu0 %v2538, 19
      %v2546 = vpop.permute.xlu0 %2545
      %2547 = vrot.lane.b32.xlu0 %v2540, 19
      %v2548 = vpop.permute.xlu0 %2547
      %v2549 = vsel %vm335, %v2542, %v2544
      %v2550 = vsel %vm335, %v2544, %v2546
      %v2551 = vsel %vm335, %v2546, %v2548
      %v2553 = vsel %vm1397, %v2522, 0
      %v2556 = vsel %vm1401, %v2549, 0
      %v2559 = vsel %vm1401, %v2550, 0
      %v2562 = vsel %vm1401, %v2551, 0
      %2564 = vmatprep.subr.bf16.mxu0 %v2559
      %2565 = vmatpush1.bf16.msra.mxu0 %v2556
      %2566 = vmatprep.subr.bf16.mxu0 0
      %2567 = vmatpush1.bf16.msra.mxu0 0
      %2568 = vmatprep.subr.bf16.mxu0 0
      %2569 = vmatpush1.bf16.msra.mxu0 0
      %2570 = vmatprep.subr.bf16.mxu0 0
      %2571 = vmatpush1.bf16.msra.mxu0 0
      %2572 = vmatprep.subr.bf16.mxu0 0
      %2573 = vmatpush1.bf16.msra.mxu0 0
      %2574 = vmatprep.subr.bf16.mxu0 0
      %2575 = vmatpush1.bf16.msra.mxu0 0
      %2576 = vmatprep.subr.bf16.mxu0 0
      %2577 = vmatpush1.bf16.msra.mxu0 0
      %2578 = vmatprep.subr.bf16.mxu0 0
      %2579 = vmatpush1.bf16.msra.mxu0 0
      %2580 = vmatprep.subr.bf16.mxu0 0
      %2581 = vmatpush1.bf16.msra.mxu0 0
      %2582 = vmatprep.subr.bf16.mxu0 0
      %2583 = vmatpush1.bf16.msra.mxu0 0
      %2584 = vmatprep.subr.bf16.mxu0 0
      %2585 = vmatpush1.bf16.msra.mxu0 0
      %2586 = vmatprep.subr.bf16.mxu0 0
      %2587 = vmatpush1.bf16.msra.mxu0 0
      %2588 = vmatprep.subr.bf16.mxu0 0
      %2589 = vmatpush1.bf16.msra.mxu0 0
      %2590 = vmatprep.subr.bf16.mxu0 0
      %2591 = vmatpush1.bf16.msra.mxu0 0
      %2592 = vmatprep.subr.bf16.mxu0 0
      %2593 = vmatpush1.bf16.msra.mxu0 0
      %2594 = vmatprep.subr.bf16.mxu0 0
      %2595 = vmatpush1.bf16.msra.mxu0 0
      %2596 = vmatprep.mubr.bf16.mxu0 0
      %2597 = vmatmul.mubr.bf16.gmra.mrb[0].mxu0 %v2553
      %v2598 = vpop.f32.mrb[0].mxu0
      %v2599 = vadd.f32 0.0, %v2598
      %v2600 = vpop.f32.mrb[0].mxu0
      %v2601 = vadd.f32 0.0, %v2600
      %v2602 = vpop.f32.mrb[0].mxu0
      %v2603 = vpop.f32.mrb[0].mxu0
      %2604 = vdwg.mxu0
      %2605 = vmatprep.subr.bf16.mxu0 0
      %2606 = vmatpush1.bf16.msra.mxu0 %v2562
      %2607 = vmatprep.subr.bf16.mxu0 0
      %2608 = vmatpush1.bf16.msra.mxu0 0
      %2609 = vmatprep.subr.bf16.mxu0 0
      %2610 = vmatpush1.bf16.msra.mxu0 0
      %2611 = vmatprep.subr.bf16.mxu0 0
      %2612 = vmatpush1.bf16.msra.mxu0 0
      %2613 = vmatprep.subr.bf16.mxu0 0
      %2614 = vmatpush1.bf16.msra.mxu0 0
      %2615 = vmatprep.subr.bf16.mxu0 0
      %2616 = vmatpush1.bf16.msra.mxu0 0
      %2617 = vmatprep.subr.bf16.mxu0 0
      %2618 = vmatpush1.bf16.msra.mxu0 0
      %2619 = vmatprep.subr.bf16.mxu0 0
      %2620 = vmatpush1.bf16.msra.mxu0 0
      %2621 = vmatprep.subr.bf16.mxu0 0
      %2622 = vmatpush1.bf16.msra.mxu0 0
      %2623 = vmatprep.subr.bf16.mxu0 0
      %2624 = vmatpush1.bf16.msra.mxu0 0
      %2625 = vmatprep.subr.bf16.mxu0 0
      %2626 = vmatpush1.bf16.msra.mxu0 0
      %2627 = vmatprep.subr.bf16.mxu0 0
      %2628 = vmatpush1.bf16.msra.mxu0 0
      %2629 = vmatprep.subr.bf16.mxu0 0
      %2630 = vmatpush1.bf16.msra.mxu0 0
      %2631 = vmatprep.subr.bf16.mxu0 0
      %2632 = vmatpush1.bf16.msra.mxu0 0
      %2633 = vmatprep.subr.bf16.mxu0 0
      %2634 = vmatpush1.bf16.msra.mxu0 0
      %2635 = vmatprep.subr.bf16.mxu0 0
      %2636 = vmatpush1.bf16.msra.mxu0 0
      %2637 = vmatprep.mubr.bf16.mxu0 0
      %2638 = vmatmul.mubr.bf16.gmra.mrb[0].mxu0 %v2553
      %v2639 = vpop.f32.mrb[0].mxu0
      %v2640 = vadd.f32 0.0, %v2639
      %v2641 = vpop.f32.mrb[0].mxu0
      %v2642 = vpop.f32.mrb[0].mxu0
      %v2643 = vpop.f32.mrb[0].mxu0
      %2644 = vdwg.mxu0
      %2645 = vrot.lane.b32.xlu0 %v2531, 20
      %v2646 = vpop.permute.xlu0 %2645
      %2647 = vrot.lane.b32.xlu0 %v2539, 20
      %v2648 = vpop.permute.xlu0 %2647
      %2649 = vrot.lane.b32.xlu0 %v2538, 20
      %v2650 = vpop.permute.xlu0 %2649
      %2651 = vrot.lane.b32.xlu0 %v2540, 20
      %v2652 = vpop.permute.xlu0 %2651
      %v2653 = vsel %vm442, %v2646, %v2648
      %v2654 = vsel %vm442, %v2648, %v2650
      %v2655 = vsel %vm442, %v2650, %v2652
      %v2657 = vsel %vm1397, %v2520, 0
      %v2660 = vsel %vm1401, %v2653, 0
      %v2663 = vsel %vm1401, %v2654, 0
      %v2666 = vsel %vm1401, %v2655, 0
      %2668 = vmatprep.subr.bf16.mxu0 %v2663
      %2669 = vmatpush1.bf16.msra.mxu0 %v2660
      %2670 = vmatprep.subr.bf16.mxu0 0
      %2671 = vmatpush1.bf16.msra.mxu0 0
      %2672 = vmatprep.subr.bf16.mxu0 0
      %2673 = vmatpush1.bf16.msra.mxu0 0
      %2674 = vmatprep.subr.bf16.mxu0 0
      %2675 = vmatpush1.bf16.msra.mxu0 0
      %2676 = vmatprep.subr.bf16.mxu0 0
      %2677 = vmatpush1.bf16.msra.mxu0 0
      %2678 = vmatprep.subr.bf16.mxu0 0
      %2679 = vmatpush1.bf16.msra.mxu0 0
      %2680 = vmatprep.subr.bf16.mxu0 0
      %2681 = vmatpush1.bf16.msra.mxu0 0
      %2682 = vmatprep.subr.bf16.mxu0 0
      %2683 = vmatpush1.bf16.msra.mxu0 0
      %2684 = vmatprep.subr.bf16.mxu0 0
      %2685 = vmatpush1.bf16.msra.mxu0 0
      %2686 = vmatprep.subr.bf16.mxu0 0
      %2687 = vmatpush1.bf16.msra.mxu0 0
      %2688 = vmatprep.subr.bf16.mxu0 0
      %2689 = vmatpush1.bf16.msra.mxu0 0
      %2690 = vmatprep.subr.bf16.mxu0 0
      %2691 = vmatpush1.bf16.msra.mxu0 0
      %2692 = vmatprep.subr.bf16.mxu0 0
      %2693 = vmatpush1.bf16.msra.mxu0 0
      %2694 = vmatprep.subr.bf16.mxu0 0
      %2695 = vmatpush1.bf16.msra.mxu0 0
      %2696 = vmatprep.subr.bf16.mxu0 0
      %2697 = vmatpush1.bf16.msra.mxu0 0
      %2698 = vmatprep.subr.bf16.mxu0 0
      %2699 = vmatpush1.bf16.msra.mxu0 0
      %2700 = vmatprep.mubr.bf16.mxu0 0
      %2701 = vmatmul.mubr.bf16.gmra.mrb[0].mxu0 %v2657
      %v2702 = vpop.f32.mrb[0].mxu0
      %v2703 = vadd.f32 %v2599, %v2702
      %v2704 = vpop.f32.mrb[0].mxu0
      %v2705 = vadd.f32 %v2601, %v2704
      %v2706 = vpop.f32.mrb[0].mxu0
      %v2707 = vpop.f32.mrb[0].mxu0
      %2708 = vdwg.mxu0
      %2709 = vmatprep.subr.bf16.mxu0 0
      %2710 = vmatpush1.bf16.msra.mxu0 %v2666
      %2711 = vmatprep.subr.bf16.mxu0 0
      %2712 = vmatpush1.bf16.msra.mxu0 0
      %2713 = vmatprep.subr.bf16.mxu0 0
      %2714 = vmatpush1.bf16.msra.mxu0 0
      %2715 = vmatprep.subr.bf16.mxu0 0
      %2716 = vmatpush1.bf16.msra.mxu0 0
      %2717 = vmatprep.subr.bf16.mxu0 0
      %2718 = vmatpush1.bf16.msra.mxu0 0
      %2719 = vmatprep.subr.bf16.mxu0 0
      %2720 = vmatpush1.bf16.msra.mxu0 0
      %2721 = vmatprep.subr.bf16.mxu0 0
      %2722 = vmatpush1.bf16.msra.mxu0 0
      %2723 = vmatprep.subr.bf16.mxu0 0
      %2724 = vmatpush1.bf16.msra.mxu0 0
      %2725 = vmatprep.subr.bf16.mxu0 0
      %2726 = vmatpush1.bf16.msra.mxu0 0
      %2727 = vmatprep.subr.bf16.mxu0 0
      %2728 = vmatpush1.bf16.msra.mxu0 0
      %2729 = vmatprep.subr.bf16.mxu0 0
      %2730 = vmatpush1.bf16.msra.mxu0 0
      %2731 = vmatprep.subr.bf16.mxu0 0
      %2732 = vmatpush1.bf16.msra.mxu0 0
      %2733 = vmatprep.subr.bf16.mxu0 0
      %2734 = vmatpush1.bf16.msra.mxu0 0
      %2735 = vmatprep.subr.bf16.mxu0 0
      %2736 = vmatpush1.bf16.msra.mxu0 0
      %2737 = vmatprep.subr.bf16.mxu0 0
      %2738 = vmatpush1.bf16.msra.mxu0 0
      %2739 = vmatprep.subr.bf16.mxu0 0
      %2740 = vmatpush1.bf16.msra.mxu0 0
      %2741 = vmatprep.mubr.bf16.mxu0 0
      %2742 = vmatmul.mubr.bf16.gmra.mrb[0].mxu0 %v2657
      %v2743 = vpop.f32.mrb[0].mxu0
      %v2744 = vadd.f32 %v2640, %v2743
      %v2745 = vpop.f32.mrb[0].mxu0
      %v2746 = vpop.f32.mrb[0].mxu0
      %v2747 = vpop.f32.mrb[0].mxu0
      %2748 = vdwg.mxu0
      %v2749 = vld [vmem:[#allocation3] sm:$0xff]
      %s2750 = scalar_lea.vmem %s6, 8
      %v2751 = vld [vmem:[%s2750] sm:$0xf]
      %v2753 = vcombine.high %v2749, %v2749
      %v2755 = vunpack.c.l.s4 1983009808
      %v2756 = vunpack.c.0.s8 %v2755
      %v2757 = vlaneseq
      %v2758 = vshrl.u32 %v2757, 7
      %v2759 = vsub.s32 %v2756, %v2758
      %v2760 = vrot.slane %v2749, %v2759
      %v2762 = vunpack.c.l.s4 1983009808
      %v2763 = vunpack.c.0.s8 %v2762
      %v2764 = vlaneseq
      %v2765 = vshrl.u32 %v2764, 7
      %v2766 = vsub.s32 %v2763, %v2765
      %v2767 = vrot.slane %v2753, %v2766
      %v2768 = vcombine.high %v2760, %v2760
      %v2769 = vcombine.high %v2767, %v2767
      %2770 = vrot.lane.b32.xlu0 %v2760, 18
      %v2771 = vpop.permute.xlu0 %2770
      %2772 = vrot.lane.b32.xlu0 %v2768, 18
      %v2773 = vpop.permute.xlu0 %2772
      %2774 = vrot.lane.b32.xlu0 %v2767, 18
      %v2775 = vpop.permute.xlu0 %2774
      %2776 = vrot.lane.b32.xlu0 %v2769, 18
      %v2777 = vpop.permute.xlu0 %2776
      %v2778 = vsel %vm549, %v2771, %v2773
      %v2779 = vsel %vm549, %v2773, %v2775
      %v2780 = vsel %vm549, %v2775, %v2777
      %v2782 = vsel %vm1397, %v2751, 0
      %v2785 = vsel %vm1401, %v2778, 0
      %v2788 = vsel %vm1401, %v2779, 0
      %v2791 = vsel %vm1401, %v2780, 0
      %2793 = vmatprep.subr.bf16.mxu0 %v2788
      %2794 = vmatpush1.bf16.msra.mxu0 %v2785
      %2795 = vmatprep.subr.bf16.mxu0 0
      %2796 = vmatpush1.bf16.msra.mxu0 0
      %2797 = vmatprep.subr.bf16.mxu0 0
      %2798 = vmatpush1.bf16.msra.mxu0 0
      %2799 = vmatprep.subr.bf16.mxu0 0
      %2800 = vmatpush1.bf16.msra.mxu0 0
      %2801 = vmatprep.subr.bf16.mxu0 0
      %2802 = vmatpush1.bf16.msra.mxu0 0
      %2803 = vmatprep.subr.bf16.mxu0 0
      %2804 = vmatpush1.bf16.msra.mxu0 0
      %2805 = vmatprep.subr.bf16.mxu0 0
      %2806 = vmatpush1.bf16.msra.mxu0 0
      %2807 = vmatprep.subr.bf16.mxu0 0
      %2808 = vmatpush1.bf16.msra.mxu0 0
      %2809 = vmatprep.subr.bf16.mxu0 0
      %2810 = vmatpush1.bf16.msra.mxu0 0
      %2811 = vmatprep.subr.bf16.mxu0 0
      %2812 = vmatpush1.bf16.msra.mxu0 0
      %2813 = vmatprep.subr.bf16.mxu0 0
      %2814 = vmatpush1.bf16.msra.mxu0 0
      %2815 = vmatprep.subr.bf16.mxu0 0
      %2816 = vmatpush1.bf16.msra.mxu0 0
      %2817 = vmatprep.subr.bf16.mxu0 0
      %2818 = vmatpush1.bf16.msra.mxu0 0
      %2819 = vmatprep.subr.bf16.mxu0 0
      %2820 = vmatpush1.bf16.msra.mxu0 0
      %2821 = vmatprep.subr.bf16.mxu0 0
      %2822 = vmatpush1.bf16.msra.mxu0 0
      %2823 = vmatprep.subr.bf16.mxu0 0
      %2824 = vmatpush1.bf16.msra.mxu0 0
      %2825 = vmatprep.mubr.bf16.mxu0 0
      %2826 = vmatmul.mubr.bf16.gmra.mrb[0].mxu0 %v2782
      %v2827 = vpop.f32.mrb[0].mxu0
      %v2828 = vadd.f32 0.0, %v2827
      %v2829 = vpop.f32.mrb[0].mxu0
      %v2830 = vadd.f32 0.0, %v2829
      %v2831 = vpop.f32.mrb[0].mxu0
      %v2832 = vpop.f32.mrb[0].mxu0
      %2833 = vdwg.mxu0
      %2834 = vmatprep.subr.bf16.mxu0 0
      %2835 = vmatpush1.bf16.msra.mxu0 %v2791
      %2836 = vmatprep.subr.bf16.mxu0 0
      %2837 = vmatpush1.bf16.msra.mxu0 0
      %2838 = vmatprep.subr.bf16.mxu0 0
      %2839 = vmatpush1.bf16.msra.mxu0 0
      %2840 = vmatprep.subr.bf16.mxu0 0
      %2841 = vmatpush1.bf16.msra.mxu0 0
      %2842 = vmatprep.subr.bf16.mxu0 0
      %2843 = vmatpush1.bf16.msra.mxu0 0
      %2844 = vmatprep.subr.bf16.mxu0 0
      %2845 = vmatpush1.bf16.msra.mxu0 0
      %2846 = vmatprep.subr.bf16.mxu0 0
      %2847 = vmatpush1.bf16.msra.mxu0 0
      %2848 = vmatprep.subr.bf16.mxu0 0
      %2849 = vmatpush1.bf16.msra.mxu0 0
      %2850 = vmatprep.subr.bf16.mxu0 0
      %2851 = vmatpush1.bf16.msra.mxu0 0
      %2852 = vmatprep.subr.bf16.mxu0 0
      %2853 = vmatpush1.bf16.msra.mxu0 0
      %2854 = vmatprep.subr.bf16.mxu0 0
      %2855 = vmatpush1.bf16.msra.mxu0 0
      %2856 = vmatprep.subr.bf16.mxu0 0
      %2857 = vmatpush1.bf16.msra.mxu0 0
      %2858 = vmatprep.subr.bf16.mxu0 0
      %2859 = vmatpush1.bf16.msra.mxu0 0
      %2860 = vmatprep.subr.bf16.mxu0 0
      %2861 = vmatpush1.bf16.msra.mxu0 0
      %2862 = vmatprep.subr.bf16.mxu0 0
      %2863 = vmatpush1.bf16.msra.mxu0 0
      %2864 = vmatprep.subr.bf16.mxu0 0
      %2865 = vmatpush1.bf16.msra.mxu0 0
      %2866 = vmatprep.mubr.bf16.mxu0 0
      %2867 = vmatmul.mubr.bf16.gmra.mrb[0].mxu0 %v2782
      %v2868 = vpop.f32.mrb[0].mxu0
      %v2869 = vadd.f32 0.0, %v2868
      %v2870 = vpop.f32.mrb[0].mxu0
      %v2871 = vpop.f32.mrb[0].mxu0
      %v2872 = vpop.f32.mrb[0].mxu0
      %2873 = vdwg.mxu0
      %v2874 = vadd.f32 %v2703, %v2828
      %v2875 = vadd.f32 %v2705, %v2830
      %v2876 = vadd.f32 %v2744, %v2869
      %v2877 = vld [vmem:[#allocation3] sm:$0xff]
      %s2878 = scalar_lea.vmem %s6, 12
      %v2879 = vld [vmem:[%s2878] sm:$0xf]
      %v2881 = vcombine.high %v2877, %v2877
      %v2883 = vunpack.c.l.s4 1983009808
      %v2884 = vunpack.c.0.s8 %v2883
      %v2885 = vlaneseq
      %v2886 = vshrl.u32 %v2885, 7
      %v2887 = vsub.s32 %v2884, %v2886
      %v2888 = vrot.slane %v2877, %v2887
      %v2890 = vunpack.c.l.s4 1983009808
      %v2891 = vunpack.c.0.s8 %v2890
      %v2892 = vlaneseq
      %v2893 = vshrl.u32 %v2892, 7
      %v2894 = vsub.s32 %v2891, %v2893
      %v2895 = vrot.slane %v2881, %v2894
      %v2896 = vcombine.high %v2888, %v2888
      %v2897 = vcombine.high %v2895, %v2895
      %2898 = vrot.lane.b32.xlu0 %v2888, 1
      %v2899 = vpop.permute.xlu0 %2898
      %2900 = vrot.lane.b32.xlu0 %v2896, 1
      %v2901 = vpop.permute.xlu0 %2900
      %2902 = vrot.lane.b32.xlu0 %v2895, 1
      %v2903 = vpop.permute.xlu0 %2902
      %2904 = vrot.lane.b32.xlu0 %v2897, 1
      %v2905 = vpop.permute.xlu0 %2904
      %v2906 = vsel %vm659, %v2899, %v2901
      %v2907 = vsel %vm659, %v2901, %v2903
      %v2908 = vsel %vm659, %v2903, %v2905
      %v2910 = vsel %vm1397, %v2879, 0
      %v2913 = vsel %vm1401, %v2906, 0
      %v2916 = vsel %vm1401, %v2907, 0
      %v2919 = vsel %vm1401, %v2908, 0
      %2921 = vmatprep.subr.bf16.mxu0 %v2916
      %2922 = vmatpush1.bf16.msra.mxu0 %v2913
      %2923 = vmatprep.subr.bf16.mxu0 0
      %2924 = vmatpush1.bf16.msra.mxu0 0
      %2925 = vmatprep.subr.bf16.mxu0 0
      %2926 = vmatpush1.bf16.msra.mxu0 0
      %2927 = vmatprep.subr.bf16.mxu0 0
      %2928 = vmatpush1.bf16.msra.mxu0 0
      %2929 = vmatprep.subr.bf16.mxu0 0
      %2930 = vmatpush1.bf16.msra.mxu0 0
      %2931 = vmatprep.subr.bf16.mxu0 0
      %2932 = vmatpush1.bf16.msra.mxu0 0
      %2933 = vmatprep.subr.bf16.mxu0 0
      %2934 = vmatpush1.bf16.msra.mxu0 0
      %2935 = vmatprep.subr.bf16.mxu0 0
      %2936 = vmatpush1.bf16.msra.mxu0 0
      %2937 = vmatprep.subr.bf16.mxu0 0
      %2938 = vmatpush1.bf16.msra.mxu0 0
      %2939 = vmatprep.subr.bf16.mxu0 0
      %2940 = vmatpush1.bf16.msra.mxu0 0
      %2941 = vmatprep.subr.bf16.mxu0 0
      %2942 = vmatpush1.bf16.msra.mxu0 0
      %2943 = vmatprep.subr.bf16.mxu0 0
      %2944 = vmatpush1.bf16.msra.mxu0 0
      %2945 = vmatprep.subr.bf16.mxu0 0
      %2946 = vmatpush1.bf16.msra.mxu0 0
      %2947 = vmatprep.subr.bf16.mxu0 0
      %2948 = vmatpush1.bf16.msra.mxu0 0
      %2949 = vmatprep.subr.bf16.mxu0 0
      %2950 = vmatpush1.bf16.msra.mxu0 0
      %2951 = vmatprep.subr.bf16.mxu0 0
      %2952 = vmatpush1.bf16.msra.mxu0 0
      %2953 = vmatprep.mubr.bf16.mxu0 0
      %2954 = vmatmul.mubr.bf16.gmra.mrb[0].mxu0 %v2910
      %v2955 = vpop.f32.mrb[0].mxu0
      %v2956 = vadd.f32 0.0, %v2955
      %v2957 = vpop.f32.mrb[0].mxu0
      %v2958 = vadd.f32 0.0, %v2957
      %v2959 = vpop.f32.mrb[0].mxu0
      %v2960 = vpop.f32.mrb[0].mxu0
      %2961 = vdwg.mxu0
      %2962 = vmatprep.subr.bf16.mxu0 0
      %2963 = vmatpush1.bf16.msra.mxu0 %v2919
      %2964 = vmatprep.subr.bf16.mxu0 0
      %2965 = vmatpush1.bf16.msra.mxu0 0
      %2966 = vmatprep.subr.bf16.mxu0 0
      %2967 = vmatpush1.bf16.msra.mxu0 0
      %2968 = vmatprep.subr.bf16.mxu0 0
      %2969 = vmatpush1.bf16.msra.mxu0 0
      %2970 = vmatprep.subr.bf16.mxu0 0
      %2971 = vmatpush1.bf16.msra.mxu0 0
      %2972 = vmatprep.subr.bf16.mxu0 0
      %2973 = vmatpush1.bf16.msra.mxu0 0
      %2974 = vmatprep.subr.bf16.mxu0 0
      %2975 = vmatpush1.bf16.msra.mxu0 0
      %2976 = vmatprep.subr.bf16.mxu0 0
      %2977 = vmatpush1.bf16.msra.mxu0 0
      %2978 = vmatprep.subr.bf16.mxu0 0
      %2979 = vmatpush1.bf16.msra.mxu0 0
      %2980 = vmatprep.subr.bf16.mxu0 0
      %2981 = vmatpush1.bf16.msra.mxu0 0
      %2982 = vmatprep.subr.bf16.mxu0 0
      %2983 = vmatpush1.bf16.msra.mxu0 0
      %2984 = vmatprep.subr.bf16.mxu0 0
      %2985 = vmatpush1.bf16.msra.mxu0 0
      %2986 = vmatprep.subr.bf16.mxu0 0
      %2987 = vmatpush1.bf16.msra.mxu0 0
      %2988 = vmatprep.subr.bf16.mxu0 0
      %2989 = vmatpush1.bf16.msra.mxu0 0
      %2990 = vmatprep.subr.bf16.mxu0 0
      %2991 = vmatpush1.bf16.msra.mxu0 0
      %2992 = vmatprep.subr.bf16.mxu0 0
      %2993 = vmatpush1.bf16.msra.mxu0 0
      %2994 = vmatprep.mubr.bf16.mxu0 0
      %2995 = vmatmul.mubr.bf16.gmra.mrb[0].mxu0 %v2910
      %v2996 = vpop.f32.mrb[0].mxu0
      %v2997 = vadd.f32 0.0, %v2996
      %v2998 = vpop.f32.mrb[0].mxu0
      %v2999 = vpop.f32.mrb[0].mxu0
      %v3000 = vpop.f32.mrb[0].mxu0
      %3001 = vdwg.mxu0
      %v3002 = vadd.f32 %v2874, %v2956
      %v3003 = vadd.f32 %v2875, %v2958
      %v3004 = vadd.f32 %v2876, %v2997
      %v3005 = vld [vmem:[#allocation3 + $0x2] sm:$0x3f]
      %s3006 = scalar_lea.vmem %s6, 16
      %v3007 = vld [vmem:[%s3006] sm:$0xf]
      %v3009 = vcombine.high %v3005, %v3005
      %v3011 = vunpack.c.l.s4 1983009808
      %v3012 = vunpack.c.0.s8 %v3011
      %v3013 = vlaneseq
      %v3014 = vshrl.u32 %v3013, 7
      %v3015 = vsub.s32 %v3012, %v3014
      %v3016 = vrot.slane %v3005, %v3015
      %v3018 = vunpack.c.l.s4 1983009808
      %v3019 = vunpack.c.0.s8 %v3018
      %v3020 = vlaneseq
      %v3021 = vshrl.u32 %v3020, 7
      %v3022 = vsub.s32 %v3019, %v3021
      %v3023 = vrot.slane %v3009, %v3022
      %v3024 = vcombine.high %v3016, %v3016
      %v3026 = vsel %vm1397, %v3007, 0
      %v3029 = vsel %vm1401, %v3016, 0
      %v3032 = vsel %vm1401, %v3024, 0
      %v3035 = vsel %vm1401, %v3023, 0
      %3037 = vmatprep.subr.bf16.mxu0 %v3032
      %3038 = vmatpush1.bf16.msra.mxu0 %v3029
      %3039 = vmatprep.subr.bf16.mxu0 0
      %3040 = vmatpush1.bf16.msra.mxu0 0
      %3041 = vmatprep.subr.bf16.mxu0 0
      %3042 = vmatpush1.bf16.msra.mxu0 0
      %3043 = vmatprep.subr.bf16.mxu0 0
      %3044 = vmatpush1.bf16.msra.mxu0 0
      %3045 = vmatprep.subr.bf16.mxu0 0
      %3046 = vmatpush1.bf16.msra.mxu0 0
      %3047 = vmatprep.subr.bf16.mxu0 0
      %3048 = vmatpush1.bf16.msra.mxu0 0
      %3049 = vmatprep.subr.bf16.mxu0 0
      %3050 = vmatpush1.bf16.msra.mxu0 0
      %3051 = vmatprep.subr.bf16.mxu0 0
      %3052 = vmatpush1.bf16.msra.mxu0 0
      %3053 = vmatprep.subr.bf16.mxu0 0
      %3054 = vmatpush1.bf16.msra.mxu0 0
      %3055 = vmatprep.subr.bf16.mxu0 0
      %3056 = vmatpush1.bf16.msra.mxu0 0
      %3057 = vmatprep.subr.bf16.mxu0 0
      %3058 = vmatpush1.bf16.msra.mxu0 0
      %3059 = vmatprep.subr.bf16.mxu0 0
      %3060 = vmatpush1.bf16.msra.mxu0 0
      %3061 = vmatprep.subr.bf16.mxu0 0
      %3062 = vmatpush1.bf16.msra.mxu0 0
      %3063 = vmatprep.subr.bf16.mxu0 0
      %3064 = vmatpush1.bf16.msra.mxu0 0
      %3065 = vmatprep.subr.bf16.mxu0 0
      %3066 = vmatpush1.bf16.msra.mxu0 0
      %3067 = vmatprep.subr.bf16.mxu0 0
      %3068 = vmatpush1.bf16.msra.mxu0 0
      %3069 = vmatprep.mubr.bf16.mxu0 0
      %3070 = vmatmul.mubr.bf16.gmra.mrb[0].mxu0 %v3026
      %v3071 = vpop.f32.mrb[0].mxu0
      %v3072 = vadd.f32 0.0, %v3071
      %v3073 = vpop.f32.mrb[0].mxu0
      %v3074 = vadd.f32 0.0, %v3073
      %v3075 = vpop.f32.mrb[0].mxu0
      %v3076 = vpop.f32.mrb[0].mxu0
      %3077 = vdwg.mxu0
      %3078 = vmatprep.subr.bf16.mxu0 0
      %3079 = vmatpush1.bf16.msra.mxu0 %v3035
      %3080 = vmatprep.subr.bf16.mxu0 0
      %3081 = vmatpush1.bf16.msra.mxu0 0
      %3082 = vmatprep.subr.bf16.mxu0 0
      %3083 = vmatpush1.bf16.msra.mxu0 0
      %3084 = vmatprep.subr.bf16.mxu0 0
      %3085 = vmatpush1.bf16.msra.mxu0 0
      %3086 = vmatprep.subr.bf16.mxu0 0
      %3087 = vmatpush1.bf16.msra.mxu0 0
      %3088 = vmatprep.subr.bf16.mxu0 0
      %3089 = vmatpush1.bf16.msra.mxu0 0
      %3090 = vmatprep.subr.bf16.mxu0 0
      %3091 = vmatpush1.bf16.msra.mxu0 0
      %3092 = vmatprep.subr.bf16.mxu0 0
      %3093 = vmatpush1.bf16.msra.mxu0 0
      %3094 = vmatprep.subr.bf16.mxu0 0
      %3095 = vmatpush1.bf16.msra.mxu0 0
      %3096 = vmatprep.subr.bf16.mxu0 0
      %3097 = vmatpush1.bf16.msra.mxu0 0
      %3098 = vmatprep.subr.bf16.mxu0 0
      %3099 = vmatpush1.bf16.msra.mxu0 0
      %3100 = vmatprep.subr.bf16.mxu0 0
      %3101 = vmatpush1.bf16.msra.mxu0 0
      %3102 = vmatprep.subr.bf16.mxu0 0
      %3103 = vmatpush1.bf16.msra.mxu0 0
      %3104 = vmatprep.subr.bf16.mxu0 0
      %3105 = vmatpush1.bf16.msra.mxu0 0
      %3106 = vmatprep.subr.bf16.mxu0 0
      %3107 = vmatpush1.bf16.msra.mxu0 0
      %3108 = vmatprep.subr.bf16.mxu0 0
      %3109 = vmatpush1.bf16.msra.mxu0 0
      %3110 = vmatprep.mubr.bf16.mxu0 0
      %3111 = vmatmul.mubr.bf16.gmra.mrb[0].mxu0 %v3026
      %v3112 = vpop.f32.mrb[0].mxu0
      %v3113 = vadd.f32 0.0, %v3112
      %v3114 = vpop.f32.mrb[0].mxu0
      %v3115 = vpop.f32.mrb[0].mxu0
      %v3116 = vpop.f32.mrb[0].mxu0
      %3117 = vdwg.mxu0
      %v3118 = vadd.f32 %v3002, %v3072
      %v3119 = vadd.f32 %v3003, %v3074
      %v3120 = vadd.f32 %v3004, %v3113
      %v3121 = vld [vmem:[#allocation3 + $0x2] sm:$0xff]
      %s3122 = scalar_lea.vmem %s6, 20
      %v3123 = vld [vmem:[%s3122] sm:$0xf]
      %v3125 = vcombine.high %v3121, %v3121
      %v3127 = vunpack.c.l.s4 1983009808
      %v3128 = vunpack.c.0.s8 %v3127
      %v3129 = vlaneseq
      %v3130 = vshrl.u32 %v3129, 7
      %v3131 = vsub.s32 %v3128, %v3130
      %v3132 = vrot.slane %v3121, %v3131
      %v3134 = vunpack.c.l.s4 1983009808
      %v3135 = vunpack.c.0.s8 %v3134
      %v3136 = vlaneseq
      %v3137 = vshrl.u32 %v3136, 7
      %v3138 = vsub.s32 %v3135, %v3137
      %v3139 = vrot.slane %v3125, %v3138
      %v3140 = vcombine.high %v3132, %v3132
      %v3141 = vcombine.high %v3139, %v3139
      %3142 = vrot.lane.b32.xlu0 %v3132, 127
      %v3143 = vpop.permute.xlu0 %3142
      %3144 = vrot.lane.b32.xlu0 %v3140, 127
      %v3145 = vpop.permute.xlu0 %3144
      %3146 = vrot.lane.b32.xlu0 %v3139, 127
      %v3147 = vpop.permute.xlu0 %3146
      %3148 = vrot.lane.b32.xlu0 %v3141, 127
      %v3149 = vpop.permute.xlu0 %3148
      %v3150 = vsel %vm879, %v3143, %v3145
      %v3151 = vsel %vm879, %v3145, %v3147
      %v3152 = vsel %vm879, %v3147, %v3149
      %v3154 = vsel %vm1397, %v3123, 0
      %v3157 = vsel %vm1401, %v3150, 0
      %v3160 = vsel %vm1401, %v3151, 0
      %v3163 = vsel %vm1401, %v3152, 0
      %3165 = vmatprep.subr.bf16.mxu0 %v3160
      %3166 = vmatpush1.bf16.msra.mxu0 %v3157
      %3167 = vmatprep.subr.bf16.mxu0 0
      %3168 = vmatpush1.bf16.msra.mxu0 0
      %3169 = vmatprep.subr.bf16.mxu0 0
      %3170 = vmatpush1.bf16.msra.mxu0 0
      %3171 = vmatprep.subr.bf16.mxu0 0
      %3172 = vmatpush1.bf16.msra.mxu0 0
      %3173 = vmatprep.subr.bf16.mxu0 0
      %3174 = vmatpush1.bf16.msra.mxu0 0
      %3175 = vmatprep.subr.bf16.mxu0 0
      %3176 = vmatpush1.bf16.msra.mxu0 0
      %3177 = vmatprep.subr.bf16.mxu0 0
      %3178 = vmatpush1.bf16.msra.mxu0 0
      %3179 = vmatprep.subr.bf16.mxu0 0
      %3180 = vmatpush1.bf16.msra.mxu0 0
      %3181 = vmatprep.subr.bf16.mxu0 0
      %3182 = vmatpush1.bf16.msra.mxu0 0
      %3183 = vmatprep.subr.bf16.mxu0 0
      %3184 = vmatpush1.bf16.msra.mxu0 0
      %3185 = vmatprep.subr.bf16.mxu0 0
      %3186 = vmatpush1.bf16.msra.mxu0 0
      %3187 = vmatprep.subr.bf16.mxu0 0
      %3188 = vmatpush1.bf16.msra.mxu0 0
      %3189 = vmatprep.subr.bf16.mxu0 0
      %3190 = vmatpush1.bf16.msra.mxu0 0
      %3191 = vmatprep.subr.bf16.mxu0 0
      %3192 = vmatpush1.bf16.msra.mxu0 0
      %3193 = vmatprep.subr.bf16.mxu0 0
      %3194 = vmatpush1.bf16.msra.mxu0 0
      %3195 = vmatprep.subr.bf16.mxu0 0
      %3196 = vmatpush1.bf16.msra.mxu0 0
      %3197 = vmatprep.mubr.bf16.mxu0 0
      %3198 = vmatmul.mubr.bf16.gmra.mrb[0].mxu0 %v3154
      %v3199 = vpop.f32.mrb[0].mxu0
      %v3200 = vadd.f32 0.0, %v3199
      %v3201 = vpop.f32.mrb[0].mxu0
      %v3202 = vadd.f32 0.0, %v3201
      %v3203 = vpop.f32.mrb[0].mxu0
      %v3204 = vpop.f32.mrb[0].mxu0
      %3205 = vdwg.mxu0
      %3206 = vmatprep.subr.bf16.mxu0 0
      %3207 = vmatpush1.bf16.msra.mxu0 %v3163
      %3208 = vmatprep.subr.bf16.mxu0 0
      %3209 = vmatpush1.bf16.msra.mxu0 0
      %3210 = vmatprep.subr.bf16.mxu0 0
      %3211 = vmatpush1.bf16.msra.mxu0 0
      %3212 = vmatprep.subr.bf16.mxu0 0
      %3213 = vmatpush1.bf16.msra.mxu0 0
      %3214 = vmatprep.subr.bf16.mxu0 0
      %3215 = vmatpush1.bf16.msra.mxu0 0
      %3216 = vmatprep.subr.bf16.mxu0 0
      %3217 = vmatpush1.bf16.msra.mxu0 0
      %3218 = vmatprep.subr.bf16.mxu0 0
      %3219 = vmatpush1.bf16.msra.mxu0 0
      %3220 = vmatprep.subr.bf16.mxu0 0
      %3221 = vmatpush1.bf16.msra.mxu0 0
      %3222 = vmatprep.subr.bf16.mxu0 0
      %3223 = vmatpush1.bf16.msra.mxu0 0
      %3224 = vmatprep.subr.bf16.mxu0 0
      %3225 = vmatpush1.bf16.msra.mxu0 0
      %3226 = vmatprep.subr.bf16.mxu0 0
      %3227 = vmatpush1.bf16.msra.mxu0 0
      %3228 = vmatprep.subr.bf16.mxu0 0
      %3229 = vmatpush1.bf16.msra.mxu0 0
      %3230 = vmatprep.subr.bf16.mxu0 0
      %3231 = vmatpush1.bf16.msra.mxu0 0
      %3232 = vmatprep.subr.bf16.mxu0 0
      %3233 = vmatpush1.bf16.msra.mxu0 0
      %3234 = vmatprep.subr.bf16.mxu0 0
      %3235 = vmatpush1.bf16.msra.mxu0 0
      %3236 = vmatprep.subr.bf16.mxu0 0
      %3237 = vmatpush1.bf16.msra.mxu0 0
      %3238 = vmatprep.mubr.bf16.mxu0 0
      %3239 = vmatmul.mubr.bf16.gmra.mrb[0].mxu0 %v3154
      %v3240 = vpop.f32.mrb[0].mxu0
      %v3241 = vadd.f32 0.0, %v3240
      %v3242 = vpop.f32.mrb[0].mxu0
      %v3243 = vpop.f32.mrb[0].mxu0
      %v3244 = vpop.f32.mrb[0].mxu0
      %3245 = vdwg.mxu0
      %v3246 = vadd.f32 %v3118, %v3200
      %v3247 = vadd.f32 %v3119, %v3202
      %v3248 = vadd.f32 %v3120, %v3241
      %v3249 = vld [vmem:[#allocation3 + $0x2] sm:$0xff]
      %s3250 = scalar_lea.vmem %s6, 24
      %v3251 = vld [vmem:[%s3250] sm:$0xf]
      %v3253 = vcombine.high %v3249, %v3249
      %v3255 = vunpack.c.l.s4 1983009808
      %v3256 = vunpack.c.0.s8 %v3255
      %v3257 = vlaneseq
      %v3258 = vshrl.u32 %v3257, 7
      %v3259 = vsub.s32 %v3256, %v3258
      %v3260 = vrot.slane %v3249, %v3259
      %v3262 = vunpack.c.l.s4 1983009808
      %v3263 = vunpack.c.0.s8 %v3262
      %v3264 = vlaneseq
      %v3265 = vshrl.u32 %v3264, 7
      %v3266 = vsub.s32 %v3263, %v3265
      %v3267 = vrot.slane %v3253, %v3266
      %v3268 = vcombine.high %v3260, %v3260
      %v3269 = vcombine.high %v3267, %v3267
      %3270 = vrot.lane.b32.xlu0 %v3260, 110
      %v3271 = vpop.permute.xlu0 %3270
      %3272 = vrot.lane.b32.xlu0 %v3268, 110
      %v3273 = vpop.permute.xlu0 %3272
      %3274 = vrot.lane.b32.xlu0 %v3267, 110
      %v3275 = vpop.permute.xlu0 %3274
      %3276 = vrot.lane.b32.xlu0 %v3269, 110
      %v3277 = vpop.permute.xlu0 %3276
      %v3278 = vsel %vm989, %v3271, %v3273
      %v3279 = vsel %vm989, %v3273, %v3275
      %v3280 = vsel %vm989, %v3275, %v3277
      %v3282 = vsel %vm1397, %v3251, 0
      %v3285 = vsel %vm1401, %v3278, 0
      %v3288 = vsel %vm1401, %v3279, 0
      %v3291 = vsel %vm1401, %v3280, 0
      %3293 = vmatprep.subr.bf16.mxu0 %v3288
      %3294 = vmatpush1.bf16.msra.mxu0 %v3285
      %3295 = vmatprep.subr.bf16.mxu0 0
      %3296 = vmatpush1.bf16.msra.mxu0 0
      %3297 = vmatprep.subr.bf16.mxu0 0
      %3298 = vmatpush1.bf16.msra.mxu0 0
      %3299 = vmatprep.subr.bf16.mxu0 0
      %3300 = vmatpush1.bf16.msra.mxu0 0
      %3301 = vmatprep.subr.bf16.mxu0 0
      %3302 = vmatpush1.bf16.msra.mxu0 0
      %3303 = vmatprep.subr.bf16.mxu0 0
      %3304 = vmatpush1.bf16.msra.mxu0 0
      %3305 = vmatprep.subr.bf16.mxu0 0
      %3306 = vmatpush1.bf16.msra.mxu0 0
      %3307 = vmatprep.subr.bf16.mxu0 0
      %3308 = vmatpush1.bf16.msra.mxu0 0
      %3309 = vmatprep.subr.bf16.mxu0 0
      %3310 = vmatpush1.bf16.msra.mxu0 0
      %3311 = vmatprep.subr.bf16.mxu0 0
      %3312 = vmatpush1.bf16.msra.mxu0 0
      %3313 = vmatprep.subr.bf16.mxu0 0
      %3314 = vmatpush1.bf16.msra.mxu0 0
      %3315 = vmatprep.subr.bf16.mxu0 0
      %3316 = vmatpush1.bf16.msra.mxu0 0
      %3317 = vmatprep.subr.bf16.mxu0 0
      %3318 = vmatpush1.bf16.msra.mxu0 0
      %3319 = vmatprep.subr.bf16.mxu0 0
      %3320 = vmatpush1.bf16.msra.mxu0 0
      %3321 = vmatprep.subr.bf16.mxu0 0
      %3322 = vmatpush1.bf16.msra.mxu0 0
      %3323 = vmatprep.subr.bf16.mxu0 0
      %3324 = vmatpush1.bf16.msra.mxu0 0
      %3325 = vmatprep.mubr.bf16.mxu0 0
      %3326 = vmatmul.mubr.bf16.gmra.mrb[0].mxu0 %v3282
      %v3327 = vpop.f32.mrb[0].mxu0
      %v3328 = vadd.f32 0.0, %v3327
      %v3329 = vpop.f32.mrb[0].mxu0
      %v3330 = vadd.f32 0.0, %v3329
      %v3331 = vpop.f32.mrb[0].mxu0
      %v3332 = vpop.f32.mrb[0].mxu0
      %3333 = vdwg.mxu0
      %3334 = vmatprep.subr.bf16.mxu0 0
      %3335 = vmatpush1.bf16.msra.mxu0 %v3291
      %3336 = vmatprep.subr.bf16.mxu0 0
      %3337 = vmatpush1.bf16.msra.mxu0 0
      %3338 = vmatprep.subr.bf16.mxu0 0
      %3339 = vmatpush1.bf16.msra.mxu0 0
      %3340 = vmatprep.subr.bf16.mxu0 0
      %3341 = vmatpush1.bf16.msra.mxu0 0
      %3342 = vmatprep.subr.bf16.mxu0 0
      %3343 = vmatpush1.bf16.msra.mxu0 0
      %3344 = vmatprep.subr.bf16.mxu0 0
      %3345 = vmatpush1.bf16.msra.mxu0 0
      %3346 = vmatprep.subr.bf16.mxu0 0
      %3347 = vmatpush1.bf16.msra.mxu0 0
      %3348 = vmatprep.subr.bf16.mxu0 0
      %3349 = vmatpush1.bf16.msra.mxu0 0
      %3350 = vmatprep.subr.bf16.mxu0 0
      %3351 = vmatpush1.bf16.msra.mxu0 0
      %3352 = vmatprep.subr.bf16.mxu0 0
      %3353 = vmatpush1.bf16.msra.mxu0 0
      %3354 = vmatprep.subr.bf16.mxu0 0
      %3355 = vmatpush1.bf16.msra.mxu0 0
      %3356 = vmatprep.subr.bf16.mxu0 0
      %3357 = vmatpush1.bf16.msra.mxu0 0
      %3358 = vmatprep.subr.bf16.mxu0 0
      %3359 = vmatpush1.bf16.msra.mxu0 0
      %3360 = vmatprep.subr.bf16.mxu0 0
      %3361 = vmatpush1.bf16.msra.mxu0 0
      %3362 = vmatprep.subr.bf16.mxu0 0
      %3363 = vmatpush1.bf16.msra.mxu0 0
      %3364 = vmatprep.subr.bf16.mxu0 0
      %3365 = vmatpush1.bf16.msra.mxu0 0
      %3366 = vmatprep.mubr.bf16.mxu0 0
      %3367 = vmatmul.mubr.bf16.gmra.mrb[0].mxu0 %v3282
      %v3368 = vpop.f32.mrb[0].mxu0
      %v3369 = vadd.f32 0.0, %v3368
      %v3370 = vpop.f32.mrb[0].mxu0
      %v3371 = vpop.f32.mrb[0].mxu0
      %v3372 = vpop.f32.mrb[0].mxu0
      %3373 = vdwg.mxu0
      %v3374 = vadd.f32 %v3246, %v3328
      %v3375 = vadd.f32 %v3247, %v3330
      %v3376 = vadd.f32 %v3248, %v3369
      %v3377 = vld [vmem:[#allocation3 + $0x2] sm:$0xff]
      %s3378 = scalar_lea.vmem %s6, 28
      %v3379 = vld [vmem:[%s3378] sm:$0xf]
      %v3381 = vcombine.high %v3377, %v3377
      %v3383 = vunpack.c.l.s4 1983009808
      %v3384 = vunpack.c.0.s8 %v3383
      %v3385 = vlaneseq
      %v3386 = vshrl.u32 %v3385, 7
      %v3387 = vsub.s32 %v3384, %v3386
      %v3388 = vrot.slane %v3377, %v3387
      %v3390 = vunpack.c.l.s4 1983009808
      %v3391 = vunpack.c.0.s8 %v3390
      %v3392 = vlaneseq
      %v3393 = vshrl.u32 %v3392, 7
      %v3394 = vsub.s32 %v3391, %v3393
      %v3395 = vrot.slane %v3381, %v3394
      %v3396 = vcombine.high %v3388, %v3388
      %v3397 = vcombine.high %v3395, %v3395
      %3398 = vrot.lane.b32.xlu0 %v3388, 109
      %v3399 = vpop.permute.xlu0 %3398
      %3400 = vrot.lane.b32.xlu0 %v3396, 109
      %v3401 = vpop.permute.xlu0 %3400
      %3402 = vrot.lane.b32.xlu0 %v3395, 109
      %v3403 = vpop.permute.xlu0 %3402
      %3404 = vrot.lane.b32.xlu0 %v3397, 109
      %v3405 = vpop.permute.xlu0 %3404
      %v3406 = vsel %vm1099, %v3399, %v3401
      %v3407 = vsel %vm1099, %v3401, %v3403
      %v3408 = vsel %vm1099, %v3403, %v3405
      %v3410 = vsel %vm1397, %v3379, 0
      %v3413 = vsel %vm1401, %v3406, 0
      %v3416 = vsel %vm1401, %v3407, 0
      %v3419 = vsel %vm1401, %v3408, 0
      %3421 = vmatprep.subr.bf16.mxu0 %v3416
      %3422 = vmatpush1.bf16.msra.mxu0 %v3413
      %3423 = vmatprep.subr.bf16.mxu0 0
      %3424 = vmatpush1.bf16.msra.mxu0 0
      %3425 = vmatprep.subr.bf16.mxu0 0
      %3426 = vmatpush1.bf16.msra.mxu0 0
      %3427 = vmatprep.subr.bf16.mxu0 0
      %3428 = vmatpush1.bf16.msra.mxu0 0
      %3429 = vmatprep.subr.bf16.mxu0 0
      %3430 = vmatpush1.bf16.msra.mxu0 0
      %3431 = vmatprep.subr.bf16.mxu0 0
      %3432 = vmatpush1.bf16.msra.mxu0 0
      %3433 = vmatprep.subr.bf16.mxu0 0
      %3434 = vmatpush1.bf16.msra.mxu0 0
      %3435 = vmatprep.subr.bf16.mxu0 0
      %3436 = vmatpush1.bf16.msra.mxu0 0
      %3437 = vmatprep.subr.bf16.mxu0 0
      %3438 = vmatpush1.bf16.msra.mxu0 0
      %3439 = vmatprep.subr.bf16.mxu0 0
      %3440 = vmatpush1.bf16.msra.mxu0 0
      %3441 = vmatprep.subr.bf16.mxu0 0
      %3442 = vmatpush1.bf16.msra.mxu0 0
      %3443 = vmatprep.subr.bf16.mxu0 0
      %3444 = vmatpush1.bf16.msra.mxu0 0
      %3445 = vmatprep.subr.bf16.mxu0 0
      %3446 = vmatpush1.bf16.msra.mxu0 0
      %3447 = vmatprep.subr.bf16.mxu0 0
      %3448 = vmatpush1.bf16.msra.mxu0 0
      %3449 = vmatprep.subr.bf16.mxu0 0
      %3450 = vmatpush1.bf16.msra.mxu0 0
      %3451 = vmatprep.subr.bf16.mxu0 0
      %3452 = vmatpush1.bf16.msra.mxu0 0
      %3453 = vmatprep.mubr.bf16.mxu0 0
      %3454 = vmatmul.mubr.bf16.gmra.mrb[0].mxu0 %v3410
      %v3455 = vpop.f32.mrb[0].mxu0
      %v3456 = vadd.f32 0.0, %v3455
      %v3457 = vpop.f32.mrb[0].mxu0
      %v3458 = vadd.f32 0.0, %v3457
      %v3459 = vpop.f32.mrb[0].mxu0
      %v3460 = vpop.f32.mrb[0].mxu0
      %3461 = vdwg.mxu0
      %3462 = vmatprep.subr.bf16.mxu0 0
      %3463 = vmatpush1.bf16.msra.mxu0 %v3419
      %3464 = vmatprep.subr.bf16.mxu0 0
      %3465 = vmatpush1.bf16.msra.mxu0 0
      %3466 = vmatprep.subr.bf16.mxu0 0
      %3467 = vmatpush1.bf16.msra.mxu0 0
      %3468 = vmatprep.subr.bf16.mxu0 0
      %3469 = vmatpush1.bf16.msra.mxu0 0
      %3470 = vmatprep.subr.bf16.mxu0 0
      %3471 = vmatpush1.bf16.msra.mxu0 0
      %3472 = vmatprep.subr.bf16.mxu0 0
      %3473 = vmatpush1.bf16.msra.mxu0 0
      %3474 = vmatprep.subr.bf16.mxu0 0
      %3475 = vmatpush1.bf16.msra.mxu0 0
      %3476 = vmatprep.subr.bf16.mxu0 0
      %3477 = vmatpush1.bf16.msra.mxu0 0
      %3478 = vmatprep.subr.bf16.mxu0 0
      %3479 = vmatpush1.bf16.msra.mxu0 0
      %3480 = vmatprep.subr.bf16.mxu0 0
      %3481 = vmatpush1.bf16.msra.mxu0 0
      %3482 = vmatprep.subr.bf16.mxu0 0
      %3483 = vmatpush1.bf16.msra.mxu0 0
      %3484 = vmatprep.subr.bf16.mxu0 0
      %3485 = vmatpush1.bf16.msra.mxu0 0
      %3486 = vmatprep.subr.bf16.mxu0 0
      %3487 = vmatpush1.bf16.msra.mxu0 0
      %3488 = vmatprep.subr.bf16.mxu0 0
      %3489 = vmatpush1.bf16.msra.mxu0 0
      %3490 = vmatprep.subr.bf16.mxu0 0
      %3491 = vmatpush1.bf16.msra.mxu0 0
      %3492 = vmatprep.subr.bf16.mxu0 0
      %3493 = vmatpush1.bf16.msra.mxu0 0
      %3494 = vmatprep.mubr.bf16.mxu0 0
      %3495 = vmatmul.mubr.bf16.gmra.mrb[0].mxu0 %v3410
      %v3496 = vpop.f32.mrb[0].mxu0
      %v3497 = vadd.f32 0.0, %v3496
      %v3498 = vpop.f32.mrb[0].mxu0
      %v3499 = vpop.f32.mrb[0].mxu0
      %v3500 = vpop.f32.mrb[0].mxu0
      %3501 = vdwg.mxu0
      %v3502 = vadd.f32 %v3374, %v3456
      %v3503 = vadd.f32 %v3375, %v3458
      %v3504 = vadd.f32 %v3376, %v3497
      %v3505 = vld [vmem:[#allocation3 + $0x2] sm:$0xff]
      %s3506 = scalar_lea.vmem %s6, 32
      %v3507 = vld [vmem:[%s3506] sm:$0xf]
      %v3509 = vcombine.high %v3505, %v3505
      %v3511 = vunpack.c.l.s4 1983009808
      %v3512 = vunpack.c.0.s8 %v3511
      %v3513 = vlaneseq
      %v3514 = vshrl.u32 %v3513, 7
      %v3515 = vsub.s32 %v3512, %v3514
      %v3516 = vrot.slane %v3505, %v3515
      %v3518 = vunpack.c.l.s4 1983009808
      %v3519 = vunpack.c.0.s8 %v3518
      %v3520 = vlaneseq
      %v3521 = vshrl.u32 %v3520, 7
      %v3522 = vsub.s32 %v3519, %v3521
      %v3523 = vrot.slane %v3509, %v3522
      %v3524 = vcombine.high %v3516, %v3516
      %v3525 = vcombine.high %v3523, %v3523
      %3526 = vrot.lane.b32.xlu0 %v3516, 108
      %v3527 = vpop.permute.xlu0 %3526
      %3528 = vrot.lane.b32.xlu0 %v3524, 108
      %v3529 = vpop.permute.xlu0 %3528
      %3530 = vrot.lane.b32.xlu0 %v3523, 108
      %v3531 = vpop.permute.xlu0 %3530
      %3532 = vrot.lane.b32.xlu0 %v3525, 108
      %v3533 = vpop.permute.xlu0 %3532
      %v3534 = vsel %vm1209, %v3527, %v3529
      %v3535 = vsel %vm1209, %v3529, %v3531
      %v3536 = vsel %vm1209, %v3531, %v3533
      %v3538 = vsel %vm1397, %v3507, 0
      %v3541 = vsel %vm1401, %v3534, 0
      %v3544 = vsel %vm1401, %v3535, 0
      %v3547 = vsel %vm1401, %v3536, 0
      %3549 = vmatprep.subr.bf16.mxu0 %v3544
      %3550 = vmatpush1.bf16.msra.mxu0 %v3541
      %3551 = vmatprep.subr.bf16.mxu0 0
      %3552 = vmatpush1.bf16.msra.mxu0 0
      %3553 = vmatprep.subr.bf16.mxu0 0
      %3554 = vmatpush1.bf16.msra.mxu0 0
      %3555 = vmatprep.subr.bf16.mxu0 0
      %3556 = vmatpush1.bf16.msra.mxu0 0
      %3557 = vmatprep.subr.bf16.mxu0 0
      %3558 = vmatpush1.bf16.msra.mxu0 0
      %3559 = vmatprep.subr.bf16.mxu0 0
      %3560 = vmatpush1.bf16.msra.mxu0 0
      %3561 = vmatprep.subr.bf16.mxu0 0
      %3562 = vmatpush1.bf16.msra.mxu0 0
      %3563 = vmatprep.subr.bf16.mxu0 0
      %3564 = vmatpush1.bf16.msra.mxu0 0
      %3565 = vmatprep.subr.bf16.mxu0 0
      %3566 = vmatpush1.bf16.msra.mxu0 0
      %3567 = vmatprep.subr.bf16.mxu0 0
      %3568 = vmatpush1.bf16.msra.mxu0 0
      %3569 = vmatprep.subr.bf16.mxu0 0
      %3570 = vmatpush1.bf16.msra.mxu0 0
      %3571 = vmatprep.subr.bf16.mxu0 0
      %3572 = vmatpush1.bf16.msra.mxu0 0
      %3573 = vmatprep.subr.bf16.mxu0 0
      %3574 = vmatpush1.bf16.msra.mxu0 0
      %3575 = vmatprep.subr.bf16.mxu0 0
      %3576 = vmatpush1.bf16.msra.mxu0 0
      %3577 = vmatprep.subr.bf16.mxu0 0
      %3578 = vmatpush1.bf16.msra.mxu0 0
      %3579 = vmatprep.subr.bf16.mxu0 0
      %3580 = vmatpush1.bf16.msra.mxu0 0
      %3581 = vmatprep.mubr.bf16.mxu0 0
      %3582 = vmatmul.mubr.bf16.gmra.mrb[0].mxu0 %v3538
      %v3583 = vpop.f32.mrb[0].mxu0
      %v3584 = vadd.f32 0.0, %v3583
      %v3585 = vpop.f32.mrb[0].mxu0
      %v3586 = vadd.f32 0.0, %v3585
      %v3587 = vpop.f32.mrb[0].mxu0
      %v3588 = vpop.f32.mrb[0].mxu0
      %3589 = vdwg.mxu0
      %3590 = vmatprep.subr.bf16.mxu0 0
      %3591 = vmatpush1.bf16.msra.mxu0 %v3547
      %3592 = vmatprep.subr.bf16.mxu0 0
      %3593 = vmatpush1.bf16.msra.mxu0 0
      %3594 = vmatprep.subr.bf16.mxu0 0
      %3595 = vmatpush1.bf16.msra.mxu0 0
      %3596 = vmatprep.subr.bf16.mxu0 0
      %3597 = vmatpush1.bf16.msra.mxu0 0
      %3598 = vmatprep.subr.bf16.mxu0 0
      %3599 = vmatpush1.bf16.msra.mxu0 0
      %3600 = vmatprep.subr.bf16.mxu0 0
      %3601 = vmatpush1.bf16.msra.mxu0 0
      %3602 = vmatprep.subr.bf16.mxu0 0
      %3603 = vmatpush1.bf16.msra.mxu0 0
      %3604 = vmatprep.subr.bf16.mxu0 0
      %3605 = vmatpush1.bf16.msra.mxu0 0
      %3606 = vmatprep.subr.bf16.mxu0 0
      %3607 = vmatpush1.bf16.msra.mxu0 0
      %3608 = vmatprep.subr.bf16.mxu0 0
      %3609 = vmatpush1.bf16.msra.mxu0 0
      %3610 = vmatprep.subr.bf16.mxu0 0
      %3611 = vmatpush1.bf16.msra.mxu0 0
      %3612 = vmatprep.subr.bf16.mxu0 0
      %3613 = vmatpush1.bf16.msra.mxu0 0
      %3614 = vmatprep.subr.bf16.mxu0 0
      %3615 = vmatpush1.bf16.msra.mxu0 0
      %3616 = vmatprep.subr.bf16.mxu0 0
      %3617 = vmatpush1.bf16.msra.mxu0 0
      %3618 = vmatprep.subr.bf16.mxu0 0
      %3619 = vmatpush1.bf16.msra.mxu0 0
      %3620 = vmatprep.subr.bf16.mxu0 0
      %3621 = vmatpush1.bf16.msra.mxu0 0
      %3622 = vmatprep.mubr.bf16.mxu0 0
      %3623 = vmatmul.mubr.bf16.gmra.mrb[0].mxu0 %v3538
      %v3624 = vpop.f32.mrb[0].mxu0
      %v3625 = vadd.f32 0.0, %v3624
      %v3626 = vpop.f32.mrb[0].mxu0
      %v3627 = vpop.f32.mrb[0].mxu0
      %v3628 = vpop.f32.mrb[0].mxu0
      %3629 = vdwg.mxu0
      %v3630 = vadd.f32 %v3502, %v3584
      %v3631 = vadd.f32 %v3503, %v3586
      %v3632 = vadd.f32 %v3504, %v3625
      %v3633 = vld [vmem:[%s7] sm:$0xff]
      %3635 = vset.pattern.permute.xlu0 0
      %3636 = vperm.xlu0 %3635, %v3633
      %v3637 = vpop.permute.xlu0 %3636
      %v3639 = vadd.f32 %v3630, %v3637
      %v3640 = vadd.f32 %v3631, %v3637
      %v3641 = vadd.f32 %v3632, %v3637
      %v3642 = vmax.f32 %v3639, 0.0
      %v3643 = vmax.f32 %v3640, 0.0
      %v3644 = vmax.f32 %v3641, 0.0
      %3645 = vst [vmem:[%s305] sm:$0xff] %v3642
      %3646 = vst [vmem:[%s305 + $0x8] sm:$0xff] %v3643
      %3647 = vst [vmem:[%s305 + $0x10] sm:$0xff] %v3644
      %p3648 = scmp.lt.s32.totalorder %s19, 1
      %s3649 = scalar_select %p3648, %s19, 1
      %s3650 = smul.addr %s3649, 3
      %s3651 = smul.addr %s3650, 8
      %s3652 = scalar_lea.vmem %s8, %s3651
      // Predicated region
      $region53: #{upsample3_forward.1} parent=51 // pred_check
        %p3653 = pneg %p210
      $region54: #{upsample3_forward.1} parent=51 // pred_check_branch
        %3655 = sbr.rel (%p3653) target = $region56
      $region55: #{upsample3_forward.1} parent=51 // pred_region
        _
      $region56: #{upsample3_forward.1} parent=51 // pred_fallthru
        _
    $region52: #{upsample3_forward.1} parent=5 // pred_fallthru
      _
    %p3656 = scmp.le.s32.totalorder 2, %s14
    // Predicated region
    $region57: #{upsample3_forward.1} parent=5 // pred_check
      %p3657 = pneg %p3656
    $region58: #{upsample3_forward.1} parent=5 // pred_check_branch
      %3659 = sbr.rel (%p3657) target = $region60
    $region59: #{upsample3_forward.1} parent=5 // pred_region
      %s3660 = ssub.s32 %s14, 2
      // Predicated region
      $region61: #{upsample3_forward.1} parent=59 // pred_check
        %p3661 = pneg %p216
      $region62: #{upsample3_forward.1} parent=59 // pred_check_branch
        %3663 = sbr.rel (%p3661) target = $region64
      $region63: #{upsample3_forward.1} parent=59 // pred_region
        %p3664 = scmp.lt.s32.totalorder %s20, 1
        %s3665 = scalar_select %p3664, %s20, 1
        %s3666 = smul.addr %s3665, 3
        %s3667 = smul.addr %s3666, 8
        %s3668 = scalar_lea.vmem %s8, %s3667
      $region64: #{upsample3_forward.1} parent=59 // pred_fallthru
        _
    $region60: #{upsample3_forward.1} parent=5 // pred_fallthru
      _
  $region6: #{upsample3_forward.1} parent=0 // loop_footer
    %s18 = sadd.s32 1, %s14
  $region7: #{upsample3_forward.1} parent=0 // loop_footer_branch
    %13 = sbr.rel target = $region3
  $region8: #{upsample3_forward.1} parent=0 // loop_exit
    _

</llo_original>
